<compile_context>
chip_gen: v5e
topology: v5e:2x2
jax: 0.10.0
libtpu: 0.0.40
codegen_flags: <defaults>
</compile_context>

<pallas_src>
import math
import numpy as np
import jax
import jax.numpy as jnp
from jax.experimental import pallas as pl
from jax.experimental.pallas import tpu as pltpu

N_HEADS = 8
N_LAYERS = 3
SQRT_2_OVER_PI = float(np.sqrt(2.0 / np.pi))
MASK_FILL = -10000000000.0  # same constant as masked_fill(mask, -1e10)


# ----------------------------------------------------------------------------
# Pallas kernel: full 3-layer encoder stack for one batch element
# ----------------------------------------------------------------------------
def transformer_kernel(x_ref, nonpad_ref, bias_ref,
                       wq_ref, bq_ref, wk_ref, bk_ref, wv_ref, bv_ref,
                       wo_ref, bo_ref, w1_ref, b1_ref, w2_ref, b2_ref,
                       normp_ref, o_ref):
    x1 = x_ref[0]             # (L, D)
    nonpad = nonpad_ref[0]    # (L, 1)  1.0 = keep, 0.0 = pad
    bias = bias_ref[0]        # (H*L, H*L) additive bias: 0 / -1e10 (blockdiag + keypad)

    L, D = x1.shape
    Dh = wq_ref.shape[2]
    dh = Dh // N_HEADS
    HL = N_HEADS * L

    # hoisted once; used 6x (JAX does not CSE broadcast_in_dim)
    nonpad_b = jnp.broadcast_to(nonpad, (L, D))

    def norm(y, gamma, beta):
        # matches torch: mean + unbiased var over feature dim, eps=1e-8
        mu = jnp.mean(y, axis=1, keepdims=True)
        var = jnp.sum((y - mu) ** 2, axis=1, keepdims=True) * (1.0 / (D - 1))
        return gamma * ((y - mu) * jax.lax.rsqrt(var + 1e-8)) + beta

    def stack_heads(t):
        # (L, H*dh) -> (H*L, dh): head h occupies rows h*L:(h+1)*L
        return jnp.concatenate(
            [t[:, h * dh:(h + 1) * dh] for h in range(N_HEADS)], axis=0)

    def unstack_heads(t):
        # (H*L, dh) -> (L, H*dh): head h goes to columns h*dh:(h+1)*dh
        return jnp.concatenate(
            [t[h * L:(h + 1) * L, :] for h in range(N_HEADS)], axis=1)

    def encoder_layer(x, l):
        wq = wq_ref[l]; bq = bq_ref[l]      # (D, Dh), (1, Dh) -- 1/sqrt(D) folded in
        wk = wk_ref[l]; bk = bk_ref[l]
        wv = wv_ref[l]; bv = bv_ref[l]
        wo = wo_ref[l]; bo = bo_ref[l]      # (Dh, D), (1, D)
        w1 = w1_ref[l]; b1 = b1_ref[l]      # (D, 4D), (1, 4D)
        w2 = w2_ref[l]; b2 = b2_ref[l]      # (4D, D), (1, D)

        # --- multi-head self-attention (head-stacked) -----------------------
        q = jnp.dot(x, wq, preferred_element_type=jnp.float32) + bq   # (L, Dh)
        k = jnp.dot(x, wk, preferred_element_type=jnp.float32) + bk
        v = jnp.dot(x, wv, preferred_element_type=jnp.float32) + bv

        qs = stack_heads(q)          # (HL, dh)
        ks = stack_heads(k)
        vs = stack_heads(v)

        # single (HL, HL) score matmul, contraction over dh (NT layout, no transpose)
        s = jax.lax.dot_general(qs, ks, (((1,), (1,)), ((), ())),
                                preferred_element_type=jnp.float32) + bias
        s = s - jnp.max(s, axis=-1, keepdims=True)
        p = jnp.exp(s)                                                # (HL, HL)
        ctx = jnp.dot(p, vs, preferred_element_type=jnp.float32)      # (HL, dh)
        # normalize after the PV matmul (smaller tensor, EUP reciprocal)
        ctx = ctx * pl.reciprocal(jnp.sum(p, axis=-1, keepdims=True), approx=False)

        a = unstack_heads(ctx)                                        # (L, Dh)
        attn = jnp.dot(a, wo, preferred_element_type=jnp.float32) + bo

        g1 = normp_ref[4 * l + 0]
        be1 = normp_ref[4 * l + 1]
        g2 = normp_ref[4 * l + 2]
        be2 = normp_ref[4 * l + 3]

        y = norm(attn + x, g1, be1) * nonpad_b      # masked_fill(non_pad==0, 0)

        # --- feed-forward ----------------------------------------------------
        h1 = jnp.dot(y, w1, preferred_element_type=jnp.float32) + b1
        cdf = 0.5 * (1.0 + jnp.tanh(SQRT_2_OVER_PI * (h1 + 0.044715 * (h1 * h1 * h1))))
        g = h1 * cdf                                 # gelu (tanh approx)
        h2 = jnp.dot(g, w2, preferred_element_type=jnp.float32) + b2

        z = norm(h2 + y, g2, be2) * nonpad_b
        return z

    # fused residual chain: x2 = enc1(x1); x3 = enc2(x2+x1); x4 = enc3(x3+x2+x1)
    x2 = encoder_layer(x1, 0)
    x3 = encoder_layer(x2 + x1, 1)
    x4 = encoder_layer(x3 + x2 + x1, 2)
    o_ref[0] = x4


def transformer_pallas(x, nonpad, bias, pp):
    B, L, D = x.shape
    NL, _, Dh = pp['wq'].shape
    Dff = pp['w1'].shape[2]
    HL = N_HEADS * L

    def wspec(shape):
        nd = len(shape)
        return pl.BlockSpec(shape, lambda b, _n=nd: (0,) * _n)

    in_specs = [
        pl.BlockSpec((1, L, D), lambda b: (b, 0, 0)),     # x1
        pl.BlockSpec((1, L, 1), lambda b: (b, 0, 0)),     # non-pad mask (row keep flags)
        pl.BlockSpec((1, HL, HL), lambda b: (b, 0, 0)),   # additive head-stacked bias
        wspec((NL, D, Dh)), wspec((NL, 1, Dh)),           # Wq, bq (head-permuted, pre-scaled)
        wspec((NL, D, Dh)), wspec((NL, 1, Dh)),           # Wk, bk
        wspec((NL, D, Dh)), wspec((NL, 1, Dh)),           # Wv, bv
        wspec((NL, Dh, D)), wspec((NL, 1, D)),            # Wo, bo
        wspec((NL, D, Dff)), wspec((NL, 1, Dff)),         # fc1
        wspec((NL, Dff, D)), wspec((NL, 1, D)),           # fc2
        pl.BlockSpec(memory_space=pltpu.MemorySpace.SMEM),  # norm gamma/beta (NL*4,)
    ]
    return pl.pallas_call(
        transformer_kernel,
        out_shape=jax.ShapeDtypeStruct((B, L, D), jnp.float32),
        grid=(B,),
        in_specs=in_specs,
        out_specs=pl.BlockSpec((1, L, D), lambda b: (b, 0, 0)),
        compiler_params=pltpu.CompilerParams(dimension_semantics=("parallel",)),
    )(x, nonpad, bias,
      pp['wq'], pp['bq'], pp['wk'], pp['bk'], pp['wv'], pp['bv'],
      pp['wo'], pp['bo'], pp['w1'], pp['b1'], pp['w2'], pp['b2'],
      pp['norm'])


# ----------------------------------------------------------------------------
# Deterministic parameter init (shapes from the module __init__; synthetic values)
# ----------------------------------------------------------------------------
def init_params(key, D):
    Dh = D  # hidden_dim_ == hidden_dim in Transformer_new
    keys = iter(jax.random.split(key, 40))

    def normal(shape, std):
        return (std * jax.random.normal(next(keys), shape)).astype(jnp.float32)

    def xavier(shape):  # (fan_out, fan_in)
        std = math.sqrt(2.0 / (shape[0] + shape[1]))
        return normal(shape, std)

    def unif(shape, a):
        return jax.random.uniform(next(keys), shape, jnp.float32, -a, a)

    params = {
        'segment_embed': unif((3, D), 0.01),
        'sequence_embed': xavier((512 + 6 + 50, D)),
        # know_embed (540, D) is never used in forward -> omitted
        'layers': [],
    }
    std_qkv = math.sqrt(2.0 / D)
    for _ in range(N_LAYERS):
        lp = {
            'wq': normal((Dh, D), std_qkv), 'bq': unif((Dh,), 1.0 / math.sqrt(D)),
            'wk': normal((Dh, D), std_qkv), 'bk': unif((Dh,), 1.0 / math.sqrt(D)),
            'wv': normal((Dh, D), std_qkv), 'bv': unif((Dh,), 1.0 / math.sqrt(D)),
            'wo': xavier((D, Dh)), 'bo': unif((D,), 1.0 / math.sqrt(Dh)),
            'w1': xavier((4 * D, D)), 'b1': unif((4 * D,), 1.0 / math.sqrt(D)),
            'w2': xavier((D, 4 * D)), 'b2': unif((D,), 1.0 / math.sqrt(4 * D)),
            'norm': jnp.array([[1.0, 0.0], [1.0, 0.0]], jnp.float32),  # gamma,beta init
        }
        params['layers'].append(lp)
    return params


def to_pallas_params(params, D):
    """Stack all layers; transpose weights to (in,out); permute QKV columns so
    heads are contiguous; fold the 1/sqrt(D) attention scale into Wq/bq."""
    layers = params['layers']
    Dh = layers[0]['wq'].shape[0]
    dh = Dh // N_HEADS
    scale = 1.0 / math.sqrt(D)   # PyTorch uses d_k = de.shape[-1] = hidden_dim
    # column c = h*dh + m of the permuted matrix <- original column m*8 + h
    perm = np.array([m * N_HEADS + h for h in range(N_HEADS) for m in range(dh)])

    def stack(fn):
        return jnp.stack([fn(lp) for lp in layers], axis=0)

    out = {
        'wq': stack(lambda lp: jnp.transpose(lp['wq'])[:, perm] * scale),
        'bq': stack(lambda lp: (lp['bq'][perm] * scale)[None, :]),
        'wk': stack(lambda lp: jnp.transpose(lp['wk'])[:, perm]),
        'bk': stack(lambda lp: lp['bk'][perm][None, :]),
        'wv': stack(lambda lp: jnp.transpose(lp['wv'])[:, perm]),
        'bv': stack(lambda lp: lp['bv'][perm][None, :]),
        'wo': stack(lambda lp: jnp.transpose(lp['wo'])),
        'bo': stack(lambda lp: lp['bo'][None, :]),
        'w1': stack(lambda lp: jnp.transpose(lp['w1'])),
        'b1': stack(lambda lp: lp['b1'][None, :]),
        'w2': stack(lambda lp: jnp.transpose(lp['w2'])),
        'b2': stack(lambda lp: lp['b2'][None, :]),
        # per-layer [gamma_mha, beta_mha, gamma_ffn, beta_ffn], flattened for SMEM
        'norm': jnp.concatenate([lp['norm'].reshape(-1) for lp in layers]),
    }
    return out


# ----------------------------------------------------------------------------
# Full Transformer_new forward (dropout=False path); glue in plain JAX
# ----------------------------------------------------------------------------
def transformer_forward(params, batch_text, attention_mask):
    B, L, D = batch_text.shape
    HL = N_HEADS * L
    # input_embedding: batch_text + segment_embed(2) + sequence_embed[:L]
    x1 = (batch_text
          + params['segment_embed'][2][None, None, :]
          + params['sequence_embed'][:L][None, :, :])
    am = attention_mask.astype(jnp.float32)                  # (B, L)  (margin is empty)
    nonpad = am[:, :, None]                                  # (B, L, 1)
    x1 = x1 * nonpad                                         # masked_fill(non_pad==0, 0)

    # Additive bias for the head-stacked (HL, HL) score matrix:
    #  - padded key columns -> -1e10 (tiled over the H key blocks)
    #  - off-diagonal head blocks -> -1e10 (so heads don't attend across blocks)
    keyrow = jnp.tile((am == 0).astype(jnp.float32) * MASK_FILL, (1, N_HEADS))  # (B, HL)
    blockdiag = jnp.kron(jnp.eye(N_HEADS, dtype=jnp.float32),
                         jnp.ones((L, L), jnp.float32))                          # (HL, HL)
    bias = keyrow[:, None, :] + (1.0 - blockdiag)[None, :, :] * MASK_FILL        # (B, HL, HL)
    bias = bias.astype(jnp.float32)

    pp = to_pallas_params(params, D)
    return transformer_pallas(x1, nonpad, bias, pp)


# ----------------------------------------------------------------------------
# Pure-JAX reference that mirrors the PyTorch code literally (for validation)
# ----------------------------------------------------------------------------
def _ref_norm(X):
    mu = jnp.mean(X, axis=2, keepdims=True)
    var = jnp.sum((X - mu) ** 2, axis=2, keepdims=True) / (X.shape[2] - 1)
    return (X - mu) / jnp.sqrt(var + 1e-8)  # gamma=1, beta=0


def _ref_gelu(x):
    return x * 0.5 * (1.0 + jnp.tanh(SQRT_2_OVER_PI * (x + 0.044715 * x ** 3)))


def _ref_mha(x, mask_e, lp):
    B, L, D = x.shape
    q = x @ lp['wq'].T + lp['bq']
    k = x @ lp['wk'].T + lp['bk']
    v = x @ lp['wv'].T + lp['bv']
    q = jnp.transpose(q.reshape(B, L, -1, 8), (3, 0, 1, 2))
    k = jnp.transpose(k.reshape(B, L, -1, 8), (3, 0, 2, 1))
    v = jnp.transpose(v.reshape(B, L, -1, 8), (3, 0, 1, 2))
    e = jnp.matmul(q, k) / math.sqrt(D)
    e = jnp.where(mask_e[None], MASK_FILL, e)
    alpha = jax.nn.softmax(e, axis=-1)
    h3 = jnp.matmul(alpha, v)
    a = jnp.concatenate([h3[i] for i in range(8)], axis=2)
    return _ref_norm(a @ lp['wo'].T + lp['bo'] + x)


def _ref_encoder(x, mask_e, nonpad, lp):
    o = _ref_mha(x, mask_e, lp)
    o = jnp.where(nonpad == 0.0, 0.0, o)
    h = _ref_gelu(o @ lp['w1'].T + lp['b1'])
    o2 = _ref_norm(h @ lp['w2'].T + lp['b2'] + o)
    return jnp.where(nonpad == 0.0, 0.0, o2)


def ref_forward(params, batch_text, attention_mask):
    B, L, D = batch_text.shape
    x1 = (batch_text + params['segment_embed'][2][None, None, :]
          + params['sequence_embed'][:L][None, :, :])
    am = attention_mask
    nonpad = jnp.broadcast_to(am[:, :, None].astype(jnp.float32), (B, L, D))
    mask_e = jnp.broadcast_to((am == 0)[:, None, :], (B, L, L))
    x1 = jnp.where(nonpad == 0.0, 0.0, x1)
    x2 = _ref_encoder(x1, mask_e, nonpad, params['layers'][0])
    x3 = _ref_encoder(x2 + x1, mask_e, nonpad, params['layers'][1])
    x4 = _ref_encoder(x3 + x2 + x1, mask_e, nonpad, params['layers'][2])
    return x4


if __name__ == "__main__":
    B, L, D = 2, 8, 64   # small shapes; D must be divisible by 8 heads
    key = jax.random.PRNGKey(0)
    kp, kx = jax.random.split(key)
    params = init_params(kp, D)

    batch_text = jax.random.normal(kx, (B, L, D), jnp.float32)
    attention_mask = jnp.array([[1] * L, [1] * (L - 3) + [0] * 3], dtype=jnp.int32)

    out = transformer_forward(params, batch_text, attention_mask)
    out = jax.block_until_ready(out)

    ref = ref_forward(params, batch_text, attention_mask)
    np.testing.assert_allclose(np.asarray(out), np.asarray(ref), rtol=2e-3, atol=2e-3)

    print("KERNEL_OK")
</pallas_src>

<mosaic_0001>
module attributes {stable_mosaic.version = 11 : i64} {
  func.func @transformer_kernel(%arg0: i32, %arg1: memref<1x8x64xf32, #tpu.memory_space<vmem>>, %arg2: memref<1x8x1xf32, #tpu.memory_space<vmem>>, %arg3: memref<1x64x64xf32, #tpu.memory_space<vmem>>, %arg4: memref<3x64x64xf32, #tpu.memory_space<vmem>>, %arg5: memref<3x1x64xf32, #tpu.memory_space<vmem>>, %arg6: memref<3x64x64xf32, #tpu.memory_space<vmem>>, %arg7: memref<3x1x64xf32, #tpu.memory_space<vmem>>, %arg8: memref<3x64x64xf32, #tpu.memory_space<vmem>>, %arg9: memref<3x1x64xf32, #tpu.memory_space<vmem>>, %arg10: memref<3x64x64xf32, #tpu.memory_space<vmem>>, %arg11: memref<3x1x64xf32, #tpu.memory_space<vmem>>, %arg12: memref<3x64x256xf32, #tpu.memory_space<vmem>>, %arg13: memref<3x1x256xf32, #tpu.memory_space<vmem>>, %arg14: memref<3x256x64xf32, #tpu.memory_space<vmem>>, %arg15: memref<3x1x64xf32, #tpu.memory_space<vmem>>, %arg16: memref<12xf32, #tpu.memory_space<smem>>, %arg17: memref<1x8x64xf32, #tpu.memory_space<vmem>>) attributes {dimension_semantics = [#tpu.dimension_semantics<parallel>], iteration_bounds = array<i64: 2>, scalar_prefetch = 0 : i64, scratch_operands = 0 : i64, tpu.core_type = #tpu.core_type<tc>, window_params = [{transform_indices = @transform_0, window_bounds = array<i64: 1, 8, 64>}, {transform_indices = @transform_1, window_bounds = array<i64: 1, 8, 1>}, {transform_indices = @transform_2, window_bounds = array<i64: 1, 64, 64>}, {pipeline_mode = #tpu.pipeline_mode<synchronous>, transform_indices = @transform_3, window_bounds = array<i64: 3, 64, 64>}, {pipeline_mode = #tpu.pipeline_mode<synchronous>, transform_indices = @transform_4, window_bounds = array<i64: 3, 1, 64>}, {pipeline_mode = #tpu.pipeline_mode<synchronous>, transform_indices = @transform_5, window_bounds = array<i64: 3, 64, 64>}, {pipeline_mode = #tpu.pipeline_mode<synchronous>, transform_indices = @transform_6, window_bounds = array<i64: 3, 1, 64>}, {pipeline_mode = #tpu.pipeline_mode<synchronous>, transform_indices = @transform_7, window_bounds = array<i64: 3, 64, 64>}, {pipeline_mode = #tpu.pipeline_mode<synchronous>, transform_indices = @transform_8, window_bounds = array<i64: 3, 1, 64>}, {pipeline_mode = #tpu.pipeline_mode<synchronous>, transform_indices = @transform_9, window_bounds = array<i64: 3, 64, 64>}, {pipeline_mode = #tpu.pipeline_mode<synchronous>, transform_indices = @transform_10, window_bounds = array<i64: 3, 1, 64>}, {pipeline_mode = #tpu.pipeline_mode<synchronous>, transform_indices = @transform_11, window_bounds = array<i64: 3, 64, 256>}, {pipeline_mode = #tpu.pipeline_mode<synchronous>, transform_indices = @transform_12, window_bounds = array<i64: 3, 1, 256>}, {pipeline_mode = #tpu.pipeline_mode<synchronous>, transform_indices = @transform_13, window_bounds = array<i64: 3, 256, 64>}, {pipeline_mode = #tpu.pipeline_mode<synchronous>, transform_indices = @transform_14, window_bounds = array<i64: 3, 1, 64>}, {transform_indices = @transform_15, window_bounds = array<i64: 12>}, {transform_indices = @transform_16, window_bounds = array<i64: 1, 8, 64>}]} {
    %c0 = arith.constant 0 : index
    %c0_0 = arith.constant 0 : index
    %c0_1 = arith.constant 0 : index
    %0 = vector.load %arg1[%c0, %c0_0, %c0_1] : memref<1x8x64xf32, #tpu.memory_space<vmem>>, vector<1x8x64xf32>
    %1 = vector.shape_cast %0 : vector<1x8x64xf32> to vector<8x64xf32>
    %c0_2 = arith.constant 0 : index
    %c0_3 = arith.constant 0 : index
    %c0_4 = arith.constant 0 : index
    %2 = vector.load %arg2[%c0_2, %c0_3, %c0_4] : memref<1x8x1xf32, #tpu.memory_space<vmem>>, vector<1x8x1xf32>
    %3 = vector.shape_cast %2 : vector<1x8x1xf32> to vector<8x1xf32>
    %c0_5 = arith.constant 0 : index
    %c0_6 = arith.constant 0 : index
    %c0_7 = arith.constant 0 : index
    %4 = vector.load %arg3[%c0_5, %c0_6, %c0_7] : memref<1x64x64xf32, #tpu.memory_space<vmem>>, vector<1x64x64xf32>
    %5 = vector.shape_cast %4 : vector<1x64x64xf32> to vector<64x64xf32>
    %6 = vector.shape_cast %3 : vector<8x1xf32> to vector<8x1xf32>
    %7 = vector.broadcast %6 : vector<8x1xf32> to vector<8x64xf32>
    %c0_8 = arith.constant 0 : index
    %c0_9 = arith.constant 0 : index
    %c0_10 = arith.constant 0 : index
    %8 = vector.load %arg4[%c0_8, %c0_9, %c0_10] : memref<3x64x64xf32, #tpu.memory_space<vmem>>, vector<1x64x64xf32>
    %9 = vector.shape_cast %8 : vector<1x64x64xf32> to vector<64x64xf32>
    %c0_11 = arith.constant 0 : index
    %c0_12 = arith.constant 0 : index
    %c0_13 = arith.constant 0 : index
    %10 = vector.load %arg5[%c0_11, %c0_12, %c0_13] : memref<3x1x64xf32, #tpu.memory_space<vmem>>, vector<1x1x64xf32>
    %11 = vector.shape_cast %10 : vector<1x1x64xf32> to vector<1x64xf32>
    %c0_14 = arith.constant 0 : index
    %c0_15 = arith.constant 0 : index
    %c0_16 = arith.constant 0 : index
    %12 = vector.load %arg6[%c0_14, %c0_15, %c0_16] : memref<3x64x64xf32, #tpu.memory_space<vmem>>, vector<1x64x64xf32>
    %13 = vector.shape_cast %12 : vector<1x64x64xf32> to vector<64x64xf32>
    %c0_17 = arith.constant 0 : index
    %c0_18 = arith.constant 0 : index
    %c0_19 = arith.constant 0 : index
    %14 = vector.load %arg7[%c0_17, %c0_18, %c0_19] : memref<3x1x64xf32, #tpu.memory_space<vmem>>, vector<1x1x64xf32>
    %15 = vector.shape_cast %14 : vector<1x1x64xf32> to vector<1x64xf32>
    %c0_20 = arith.constant 0 : index
    %c0_21 = arith.constant 0 : index
    %c0_22 = arith.constant 0 : index
    %16 = vector.load %arg8[%c0_20, %c0_21, %c0_22] : memref<3x64x64xf32, #tpu.memory_space<vmem>>, vector<1x64x64xf32>
    %17 = vector.shape_cast %16 : vector<1x64x64xf32> to vector<64x64xf32>
    %c0_23 = arith.constant 0 : index
    %c0_24 = arith.constant 0 : index
    %c0_25 = arith.constant 0 : index
    %18 = vector.load %arg9[%c0_23, %c0_24, %c0_25] : memref<3x1x64xf32, #tpu.memory_space<vmem>>, vector<1x1x64xf32>
    %19 = vector.shape_cast %18 : vector<1x1x64xf32> to vector<1x64xf32>
    %c0_26 = arith.constant 0 : index
    %c0_27 = arith.constant 0 : index
    %c0_28 = arith.constant 0 : index
    %20 = vector.load %arg10[%c0_26, %c0_27, %c0_28] : memref<3x64x64xf32, #tpu.memory_space<vmem>>, vector<1x64x64xf32>
    %21 = vector.shape_cast %20 : vector<1x64x64xf32> to vector<64x64xf32>
    %c0_29 = arith.constant 0 : index
    %c0_30 = arith.constant 0 : index
    %c0_31 = arith.constant 0 : index
    %22 = vector.load %arg11[%c0_29, %c0_30, %c0_31] : memref<3x1x64xf32, #tpu.memory_space<vmem>>, vector<1x1x64xf32>
    %23 = vector.shape_cast %22 : vector<1x1x64xf32> to vector<1x64xf32>
    %c0_32 = arith.constant 0 : index
    %c0_33 = arith.constant 0 : index
    %c0_34 = arith.constant 0 : index
    %24 = vector.load %arg12[%c0_32, %c0_33, %c0_34] : memref<3x64x256xf32, #tpu.memory_space<vmem>>, vector<1x64x256xf32>
    %25 = vector.shape_cast %24 : vector<1x64x256xf32> to vector<64x256xf32>
    %c0_35 = arith.constant 0 : index
    %c0_36 = arith.constant 0 : index
    %c0_37 = arith.constant 0 : index
    %26 = vector.load %arg13[%c0_35, %c0_36, %c0_37] : memref<3x1x256xf32, #tpu.memory_space<vmem>>, vector<1x1x256xf32>
    %27 = vector.shape_cast %26 : vector<1x1x256xf32> to vector<1x256xf32>
    %c0_38 = arith.constant 0 : index
    %c0_39 = arith.constant 0 : index
    %c0_40 = arith.constant 0 : index
    %28 = vector.load %arg14[%c0_38, %c0_39, %c0_40] : memref<3x256x64xf32, #tpu.memory_space<vmem>>, vector<1x256x64xf32>
    %29 = vector.shape_cast %28 : vector<1x256x64xf32> to vector<256x64xf32>
    %c0_41 = arith.constant 0 : index
    %c0_42 = arith.constant 0 : index
    %c0_43 = arith.constant 0 : index
    %30 = vector.load %arg15[%c0_41, %c0_42, %c0_43] : memref<3x1x64xf32, #tpu.memory_space<vmem>>, vector<1x1x64xf32>
    %31 = vector.shape_cast %30 : vector<1x1x64xf32> to vector<1x64xf32>
    %cst = arith.constant dense<0.000000e+00> : vector<8x64xf32>
    %32 = tpu.matmul %1, %9, %cst {dimension_numbers = #tpu.dot_dimension_numbers<[1], [0], [0], [1], [0, 0, 1, 1], [], []>} : vector<8x64xf32>, vector<64x64xf32>, vector<8x64xf32> -> vector<8x64xf32>
    %33 = vector.broadcast %11 : vector<1x64xf32> to vector<8x64xf32>
    %34 = arith.addf %32, %33 : vector<8x64xf32>
    %cst_44 = arith.constant dense<0.000000e+00> : vector<8x64xf32>
    %35 = tpu.matmul %1, %13, %cst_44 {dimension_numbers = #tpu.dot_dimension_numbers<[1], [0], [0], [1], [0, 0, 1, 1], [], []>} : vector<8x64xf32>, vector<64x64xf32>, vector<8x64xf32> -> vector<8x64xf32>
    %36 = vector.broadcast %15 : vector<1x64xf32> to vector<8x64xf32>
    %37 = arith.addf %35, %36 : vector<8x64xf32>
    %cst_45 = arith.constant dense<0.000000e+00> : vector<8x64xf32>
    %38 = tpu.matmul %1, %17, %cst_45 {dimension_numbers = #tpu.dot_dimension_numbers<[1], [0], [0], [1], [0, 0, 1, 1], [], []>} : vector<8x64xf32>, vector<64x64xf32>, vector<8x64xf32> -> vector<8x64xf32>
    %39 = vector.broadcast %19 : vector<1x64xf32> to vector<8x64xf32>
    %40 = arith.addf %38, %39 : vector<8x64xf32>
    %41 = vector.extract_strided_slice %34 {offsets = [0, 0], sizes = [8, 8], strides = [1, 1]} : vector<8x64xf32> to vector<8x8xf32>
    %42 = vector.extract_strided_slice %34 {offsets = [0, 8], sizes = [8, 8], strides = [1, 1]} : vector<8x64xf32> to vector<8x8xf32>
    %43 = vector.extract_strided_slice %34 {offsets = [0, 16], sizes = [8, 8], strides = [1, 1]} : vector<8x64xf32> to vector<8x8xf32>
    %44 = vector.extract_strided_slice %34 {offsets = [0, 24], sizes = [8, 8], strides = [1, 1]} : vector<8x64xf32> to vector<8x8xf32>
    %45 = vector.extract_strided_slice %34 {offsets = [0, 32], sizes = [8, 8], strides = [1, 1]} : vector<8x64xf32> to vector<8x8xf32>
    %46 = vector.extract_strided_slice %34 {offsets = [0, 40], sizes = [8, 8], strides = [1, 1]} : vector<8x64xf32> to vector<8x8xf32>
    %47 = vector.extract_strided_slice %34 {offsets = [0, 48], sizes = [8, 8], strides = [1, 1]} : vector<8x64xf32> to vector<8x8xf32>
    %48 = vector.extract_strided_slice %34 {offsets = [0, 56], sizes = [8, 8], strides = [1, 1]} : vector<8x64xf32> to vector<8x8xf32>
    %49 = tpu.concatenate %41, %42, %43, %44, %45, %46, %47, %48 in 0 : vector<8x8xf32>, vector<8x8xf32>, vector<8x8xf32>, vector<8x8xf32>, vector<8x8xf32>, vector<8x8xf32>, vector<8x8xf32>, vector<8x8xf32> -> vector<64x8xf32>
    %50 = vector.extract_strided_slice %37 {offsets = [0, 0], sizes = [8, 8], strides = [1, 1]} : vector<8x64xf32> to vector<8x8xf32>
    %51 = vector.extract_strided_slice %37 {offsets = [0, 8], sizes = [8, 8], strides = [1, 1]} : vector<8x64xf32> to vector<8x8xf32>
    %52 = vector.extract_strided_slice %37 {offsets = [0, 16], sizes = [8, 8], strides = [1, 1]} : vector<8x64xf32> to vector<8x8xf32>
    %53 = vector.extract_strided_slice %37 {offsets = [0, 24], sizes = [8, 8], strides = [1, 1]} : vector<8x64xf32> to vector<8x8xf32>
    %54 = vector.extract_strided_slice %37 {offsets = [0, 32], sizes = [8, 8], strides = [1, 1]} : vector<8x64xf32> to vector<8x8xf32>
    %55 = vector.extract_strided_slice %37 {offsets = [0, 40], sizes = [8, 8], strides = [1, 1]} : vector<8x64xf32> to vector<8x8xf32>
    %56 = vector.extract_strided_slice %37 {offsets = [0, 48], sizes = [8, 8], strides = [1, 1]} : vector<8x64xf32> to vector<8x8xf32>
    %57 = vector.extract_strided_slice %37 {offsets = [0, 56], sizes = [8, 8], strides = [1, 1]} : vector<8x64xf32> to vector<8x8xf32>
    %58 = tpu.concatenate %50, %51, %52, %53, %54, %55, %56, %57 in 0 : vector<8x8xf32>, vector<8x8xf32>, vector<8x8xf32>, vector<8x8xf32>, vector<8x8xf32>, vector<8x8xf32>, vector<8x8xf32>, vector<8x8xf32> -> vector<64x8xf32>
    %59 = vector.extract_strided_slice %40 {offsets = [0, 0], sizes = [8, 8], strides = [1, 1]} : vector<8x64xf32> to vector<8x8xf32>
    %60 = vector.extract_strided_slice %40 {offsets = [0, 8], sizes = [8, 8], strides = [1, 1]} : vector<8x64xf32> to vector<8x8xf32>
    %61 = vector.extract_strided_slice %40 {offsets = [0, 16], sizes = [8, 8], strides = [1, 1]} : vector<8x64xf32> to vector<8x8xf32>
    %62 = vector.extract_strided_slice %40 {offsets = [0, 24], sizes = [8, 8], strides = [1, 1]} : vector<8x64xf32> to vector<8x8xf32>
    %63 = vector.extract_strided_slice %40 {offsets = [0, 32], sizes = [8, 8], strides = [1, 1]} : vector<8x64xf32> to vector<8x8xf32>
    %64 = vector.extract_strided_slice %40 {offsets = [0, 40], sizes = [8, 8], strides = [1, 1]} : vector<8x64xf32> to vector<8x8xf32>
    %65 = vector.extract_strided_slice %40 {offsets = [0, 48], sizes = [8, 8], strides = [1, 1]} : vector<8x64xf32> to vector<8x8xf32>
    %66 = vector.extract_strided_slice %40 {offsets = [0, 56], sizes = [8, 8], strides = [1, 1]} : vector<8x64xf32> to vector<8x8xf32>
    %67 = tpu.concatenate %59, %60, %61, %62, %63, %64, %65, %66 in 0 : vector<8x8xf32>, vector<8x8xf32>, vector<8x8xf32>, vector<8x8xf32>, vector<8x8xf32>, vector<8x8xf32>, vector<8x8xf32>, vector<8x8xf32> -> vector<64x8xf32>
    %cst_46 = arith.constant dense<0.000000e+00> : vector<64x64xf32>
    %68 = tpu.matmul %49, %58, %cst_46 {dimension_numbers = #tpu.dot_dimension_numbers<[1], [1], [0], [0], [0, 0, 1, 0], [], []>} : vector<64x8xf32>, vector<64x8xf32>, vector<64x64xf32> -> vector<64x64xf32>
    %69 = arith.addf %68, %5 : vector<64x64xf32>
    %cst_47 = arith.constant dense<0xFF800000> : vector<64xf32>
    %70 = vector.multi_reduction <maximumf>, %69, %cst_47 [1] : vector<64x64xf32> to vector<64xf32>
    %71 = vector.shape_cast %70 : vector<64xf32> to vector<64x1xf32>
    %72 = vector.broadcast %71 : vector<64x1xf32> to vector<64x64xf32>
    %73 = arith.subf %69, %72 : vector<64x64xf32>
    %74 = math.exp %73 : vector<64x64xf32>
    %cst_48 = arith.constant dense<0.000000e+00> : vector<64x8xf32>
    %75 = tpu.matmul %74, %67, %cst_48 {dimension_numbers = #tpu.dot_dimension_numbers<[1], [0], [0], [1], [0, 0, 1, 1], [], []>} : vector<64x64xf32>, vector<64x8xf32>, vector<64x8xf32> -> vector<64x8xf32>
    %cst_49 = arith.constant dense<0.000000e+00> : vector<64xf32>
    %76 = vector.multi_reduction <add>, %74, %cst_49 [1] : vector<64x64xf32> to vector<64xf32>
    %77 = vector.shape_cast %76 : vector<64xf32> to vector<64x1xf32>
    %78 = tpu.reciprocal %77 : vector<64x1xf32> -> vector<64x1xf32>
    %79 = vector.broadcast %78 : vector<64x1xf32> to vector<64x8xf32>
    %80 = arith.mulf %75, %79 : vector<64x8xf32>
    %81 = vector.extract_strided_slice %80 {offsets = [0, 0], sizes = [8, 8], strides = [1, 1]} : vector<64x8xf32> to vector<8x8xf32>
    %82 = vector.extract_strided_slice %80 {offsets = [8, 0], sizes = [8, 8], strides = [1, 1]} : vector<64x8xf32> to vector<8x8xf32>
    %83 = vector.extract_strided_slice %80 {offsets = [16, 0], sizes = [8, 8], strides = [1, 1]} : vector<64x8xf32> to vector<8x8xf32>
    %84 = vector.extract_strided_slice %80 {offsets = [24, 0], sizes = [8, 8], strides = [1, 1]} : vector<64x8xf32> to vector<8x8xf32>
    %85 = vector.extract_strided_slice %80 {offsets = [32, 0], sizes = [8, 8], strides = [1, 1]} : vector<64x8xf32> to vector<8x8xf32>
    %86 = vector.extract_strided_slice %80 {offsets = [40, 0], sizes = [8, 8], strides = [1, 1]} : vector<64x8xf32> to vector<8x8xf32>
    %87 = vector.extract_strided_slice %80 {offsets = [48, 0], sizes = [8, 8], strides = [1, 1]} : vector<64x8xf32> to vector<8x8xf32>
    %88 = vector.extract_strided_slice %80 {offsets = [56, 0], sizes = [8, 8], strides = [1, 1]} : vector<64x8xf32> to vector<8x8xf32>
    %89 = tpu.concatenate %81, %82, %83, %84, %85, %86, %87, %88 in 1 : vector<8x8xf32>, vector<8x8xf32>, vector<8x8xf32>, vector<8x8xf32>, vector<8x8xf32>, vector<8x8xf32>, vector<8x8xf32>, vector<8x8xf32> -> vector<8x64xf32>
    %cst_50 = arith.constant dense<0.000000e+00> : vector<8x64xf32>
    %90 = tpu.matmul %89, %21, %cst_50 {dimension_numbers = #tpu.dot_dimension_numbers<[1], [0], [0], [1], [0, 0, 1, 1], [], []>} : vector<8x64xf32>, vector<64x64xf32>, vector<8x64xf32> -> vector<8x64xf32>
    %91 = vector.broadcast %23 : vector<1x64xf32> to vector<8x64xf32>
    %92 = arith.addf %90, %91 : vector<8x64xf32>
    %c0_51 = arith.constant 0 : index
    %93 = memref.load %arg16[%c0_51] : memref<12xf32, #tpu.memory_space<smem>>
    %c1 = arith.constant 1 : index
    %94 = memref.load %arg16[%c1] : memref<12xf32, #tpu.memory_space<smem>>
    %c2 = arith.constant 2 : index
    %95 = memref.load %arg16[%c2] : memref<12xf32, #tpu.memory_space<smem>>
    %c3 = arith.constant 3 : index
    %96 = memref.load %arg16[%c3] : memref<12xf32, #tpu.memory_space<smem>>
    %97 = arith.addf %92, %1 : vector<8x64xf32>
    %cst_52 = arith.constant dense<0.000000e+00> : vector<8xf32>
    %98 = vector.multi_reduction <add>, %97, %cst_52 [1] : vector<8x64xf32> to vector<8xf32>
    %99 = vector.shape_cast %98 : vector<8xf32> to vector<8x1xf32>
    %cst_53 = arith.constant 6.400000e+01 : f32
    %100 = vector.broadcast %cst_53 : f32 to vector<8x1xf32>
    %101 = arith.divf %99, %100 : vector<8x1xf32>
    %102 = vector.broadcast %101 : vector<8x1xf32> to vector<8x64xf32>
    %103 = arith.subf %97, %102 : vector<8x64xf32>
    %104 = arith.mulf %103, %103 : vector<8x64xf32>
    %cst_54 = arith.constant dense<0.000000e+00> : vector<8xf32>
    %105 = vector.multi_reduction <add>, %104, %cst_54 [1] : vector<8x64xf32> to vector<8xf32>
    %106 = vector.shape_cast %105 : vector<8xf32> to vector<8x1xf32>
    %cst_55 = arith.constant 0.0158730168 : f32
    %107 = vector.broadcast %cst_55 : f32 to vector<8x1xf32>
    %108 = arith.mulf %106, %107 : vector<8x1xf32>
    %109 = vector.broadcast %101 : vector<8x1xf32> to vector<8x64xf32>
    %110 = arith.subf %97, %109 : vector<8x64xf32>
    %cst_56 = arith.constant 9.99999993E-9 : f32
    %111 = vector.broadcast %cst_56 : f32 to vector<8x1xf32>
    %112 = arith.addf %108, %111 : vector<8x1xf32>
    %113 = math.rsqrt %112 : vector<8x1xf32>
    %114 = vector.broadcast %113 : vector<8x1xf32> to vector<8x64xf32>
    %115 = arith.mulf %110, %114 : vector<8x64xf32>
    %116 = vector.broadcast %93 : f32 to vector<8x64xf32>
    %117 = arith.mulf %116, %115 : vector<8x64xf32>
    %118 = vector.broadcast %94 : f32 to vector<8x64xf32>
    %119 = arith.addf %117, %118 : vector<8x64xf32>
    %120 = arith.mulf %119, %7 : vector<8x64xf32>
    %cst_57 = arith.constant dense<0.000000e+00> : vector<8x256xf32>
    %121 = tpu.matmul %120, %25, %cst_57 {dimension_numbers = #tpu.dot_dimension_numbers<[1], [0], [0], [1], [0, 0, 1, 1], [], []>} : vector<8x64xf32>, vector<64x256xf32>, vector<8x256xf32> -> vector<8x256xf32>
    %122 = vector.broadcast %27 : vector<1x256xf32> to vector<8x256xf32>
    %123 = arith.addf %121, %122 : vector<8x256xf32>
    %124 = arith.mulf %123, %123 : vector<8x256xf32>
    %125 = arith.mulf %124, %123 : vector<8x256xf32>
    %cst_58 = arith.constant 4.471500e-02 : f32
    %126 = vector.broadcast %cst_58 : f32 to vector<8x256xf32>
    %127 = arith.mulf %126, %125 : vector<8x256xf32>
    %128 = arith.addf %123, %127 : vector<8x256xf32>
    %cst_59 = arith.constant 0.797884583 : f32
    %129 = vector.broadcast %cst_59 : f32 to vector<8x256xf32>
    %130 = arith.mulf %129, %128 : vector<8x256xf32>
    %131 = math.tanh %130 : vector<8x256xf32>
    %cst_60 = arith.constant 1.000000e+00 : f32
    %132 = vector.broadcast %cst_60 : f32 to vector<8x256xf32>
    %133 = arith.addf %132, %131 : vector<8x256xf32>
    %cst_61 = arith.constant 5.000000e-01 : f32
    %134 = vector.broadcast %cst_61 : f32 to vector<8x256xf32>
    %135 = arith.mulf %134, %133 : vector<8x256xf32>
    %136 = arith.mulf %123, %135 : vector<8x256xf32>
    %cst_62 = arith.constant dense<0.000000e+00> : vector<8x64xf32>
    %137 = tpu.matmul %136, %29, %cst_62 {dimension_numbers = #tpu.dot_dimension_numbers<[1], [0], [0], [1], [0, 0, 1, 1], [], []>} : vector<8x256xf32>, vector<256x64xf32>, vector<8x64xf32> -> vector<8x64xf32>
    %138 = vector.broadcast %31 : vector<1x64xf32> to vector<8x64xf32>
    %139 = arith.addf %137, %138 : vector<8x64xf32>
    %140 = arith.addf %139, %120 : vector<8x64xf32>
    %cst_63 = arith.constant dense<0.000000e+00> : vector<8xf32>
    %141 = vector.multi_reduction <add>, %140, %cst_63 [1] : vector<8x64xf32> to vector<8xf32>
    %142 = vector.shape_cast %141 : vector<8xf32> to vector<8x1xf32>
    %cst_64 = arith.constant 6.400000e+01 : f32
    %143 = vector.broadcast %cst_64 : f32 to vector<8x1xf32>
    %144 = arith.divf %142, %143 : vector<8x1xf32>
    %145 = vector.broadcast %144 : vector<8x1xf32> to vector<8x64xf32>
    %146 = arith.subf %140, %145 : vector<8x64xf32>
    %147 = arith.mulf %146, %146 : vector<8x64xf32>
    %cst_65 = arith.constant dense<0.000000e+00> : vector<8xf32>
    %148 = vector.multi_reduction <add>, %147, %cst_65 [1] : vector<8x64xf32> to vector<8xf32>
    %149 = vector.shape_cast %148 : vector<8xf32> to vector<8x1xf32>
    %cst_66 = arith.constant 0.0158730168 : f32
    %150 = vector.broadcast %cst_66 : f32 to vector<8x1xf32>
    %151 = arith.mulf %149, %150 : vector<8x1xf32>
    %152 = vector.broadcast %144 : vector<8x1xf32> to vector<8x64xf32>
    %153 = arith.subf %140, %152 : vector<8x64xf32>
    %cst_67 = arith.constant 9.99999993E-9 : f32
    %154 = vector.broadcast %cst_67 : f32 to vector<8x1xf32>
    %155 = arith.addf %151, %154 : vector<8x1xf32>
    %156 = math.rsqrt %155 : vector<8x1xf32>
    %157 = vector.broadcast %156 : vector<8x1xf32> to vector<8x64xf32>
    %158 = arith.mulf %153, %157 : vector<8x64xf32>
    %159 = vector.broadcast %95 : f32 to vector<8x64xf32>
    %160 = arith.mulf %159, %158 : vector<8x64xf32>
    %161 = vector.broadcast %96 : f32 to vector<8x64xf32>
    %162 = arith.addf %160, %161 : vector<8x64xf32>
    %163 = arith.mulf %162, %7 : vector<8x64xf32>
    %164 = arith.addf %163, %1 : vector<8x64xf32>
    %c1_68 = arith.constant 1 : index
    %c0_69 = arith.constant 0 : index
    %c0_70 = arith.constant 0 : index
    %165 = vector.load %arg4[%c1_68, %c0_69, %c0_70] : memref<3x64x64xf32, #tpu.memory_space<vmem>>, vector<1x64x64xf32>
    %166 = vector.shape_cast %165 : vector<1x64x64xf32> to vector<64x64xf32>
    %c1_71 = arith.constant 1 : index
    %c0_72 = arith.constant 0 : index
    %c0_73 = arith.constant 0 : index
    %167 = vector.load %arg5[%c1_71, %c0_72, %c0_73] : memref<3x1x64xf32, #tpu.memory_space<vmem>>, vector<1x1x64xf32>
    %168 = vector.shape_cast %167 : vector<1x1x64xf32> to vector<1x64xf32>
    %c1_74 = arith.constant 1 : index
    %c0_75 = arith.constant 0 : index
    %c0_76 = arith.constant 0 : index
    %169 = vector.load %arg6[%c1_74, %c0_75, %c0_76] : memref<3x64x64xf32, #tpu.memory_space<vmem>>, vector<1x64x64xf32>
    %170 = vector.shape_cast %169 : vector<1x64x64xf32> to vector<64x64xf32>
    %c1_77 = arith.constant 1 : index
    %c0_78 = arith.constant 0 : index
    %c0_79 = arith.constant 0 : index
    %171 = vector.load %arg7[%c1_77, %c0_78, %c0_79] : memref<3x1x64xf32, #tpu.memory_space<vmem>>, vector<1x1x64xf32>
    %172 = vector.shape_cast %171 : vector<1x1x64xf32> to vector<1x64xf32>
    %c1_80 = arith.constant 1 : index
    %c0_81 = arith.constant 0 : index
    %c0_82 = arith.constant 0 : index
    %173 = vector.load %arg8[%c1_80, %c0_81, %c0_82] : memref<3x64x64xf32, #tpu.memory_space<vmem>>, vector<1x64x64xf32>
    %174 = vector.shape_cast %173 : vector<1x64x64xf32> to vector<64x64xf32>
    %c1_83 = arith.constant 1 : index
    %c0_84 = arith.constant 0 : index
    %c0_85 = arith.constant 0 : index
    %175 = vector.load %arg9[%c1_83, %c0_84, %c0_85] : memref<3x1x64xf32, #tpu.memory_space<vmem>>, vector<1x1x64xf32>
    %176 = vector.shape_cast %175 : vector<1x1x64xf32> to vector<1x64xf32>
    %c1_86 = arith.constant 1 : index
    %c0_87 = arith.constant 0 : index
    %c0_88 = arith.constant 0 : index
    %177 = vector.load %arg10[%c1_86, %c0_87, %c0_88] : memref<3x64x64xf32, #tpu.memory_space<vmem>>, vector<1x64x64xf32>
    %178 = vector.shape_cast %177 : vector<1x64x64xf32> to vector<64x64xf32>
    %c1_89 = arith.constant 1 : index
    %c0_90 = arith.constant 0 : index
    %c0_91 = arith.constant 0 : index
    %179 = vector.load %arg11[%c1_89, %c0_90, %c0_91] : memref<3x1x64xf32, #tpu.memory_space<vmem>>, vector<1x1x64xf32>
    %180 = vector.shape_cast %179 : vector<1x1x64xf32> to vector<1x64xf32>
    %c1_92 = arith.constant 1 : index
    %c0_93 = arith.constant 0 : index
    %c0_94 = arith.constant 0 : index
    %181 = vector.load %arg12[%c1_92, %c0_93, %c0_94] : memref<3x64x256xf32, #tpu.memory_space<vmem>>, vector<1x64x256xf32>
    %182 = vector.shape_cast %181 : vector<1x64x256xf32> to vector<64x256xf32>
    %c1_95 = arith.constant 1 : index
    %c0_96 = arith.constant 0 : index
    %c0_97 = arith.constant 0 : index
    %183 = vector.load %arg13[%c1_95, %c0_96, %c0_97] : memref<3x1x256xf32, #tpu.memory_space<vmem>>, vector<1x1x256xf32>
    %184 = vector.shape_cast %183 : vector<1x1x256xf32> to vector<1x256xf32>
    %c1_98 = arith.constant 1 : index
    %c0_99 = arith.constant 0 : index
    %c0_100 = arith.constant 0 : index
    %185 = vector.load %arg14[%c1_98, %c0_99, %c0_100] : memref<3x256x64xf32, #tpu.memory_space<vmem>>, vector<1x256x64xf32>
    %186 = vector.shape_cast %185 : vector<1x256x64xf32> to vector<256x64xf32>
    %c1_101 = arith.constant 1 : index
    %c0_102 = arith.constant 0 : index
    %c0_103 = arith.constant 0 : index
    %187 = vector.load %arg15[%c1_101, %c0_102, %c0_103] : memref<3x1x64xf32, #tpu.memory_space<vmem>>, vector<1x1x64xf32>
    %188 = vector.shape_cast %187 : vector<1x1x64xf32> to vector<1x64xf32>
    %cst_104 = arith.constant dense<0.000000e+00> : vector<8x64xf32>
    %189 = tpu.matmul %164, %166, %cst_104 {dimension_numbers = #tpu.dot_dimension_numbers<[1], [0], [0], [1], [0, 0, 1, 1], [], []>} : vector<8x64xf32>, vector<64x64xf32>, vector<8x64xf32> -> vector<8x64xf32>
    %190 = vector.broadcast %168 : vector<1x64xf32> to vector<8x64xf32>
    %191 = arith.addf %189, %190 : vector<8x64xf32>
    %cst_105 = arith.constant dense<0.000000e+00> : vector<8x64xf32>
    %192 = tpu.matmul %164, %170, %cst_105 {dimension_numbers = #tpu.dot_dimension_numbers<[1], [0], [0], [1], [0, 0, 1, 1], [], []>} : vector<8x64xf32>, vector<64x64xf32>, vector<8x64xf32> -> vector<8x64xf32>
    %193 = vector.broadcast %172 : vector<1x64xf32> to vector<8x64xf32>
    %194 = arith.addf %192, %193 : vector<8x64xf32>
    %cst_106 = arith.constant dense<0.000000e+00> : vector<8x64xf32>
    %195 = tpu.matmul %164, %174, %cst_106 {dimension_numbers = #tpu.dot_dimension_numbers<[1], [0], [0], [1], [0, 0, 1, 1], [], []>} : vector<8x64xf32>, vector<64x64xf32>, vector<8x64xf32> -> vector<8x64xf32>
    %196 = vector.broadcast %176 : vector<1x64xf32> to vector<8x64xf32>
    %197 = arith.addf %195, %196 : vector<8x64xf32>
    %198 = vector.extract_strided_slice %191 {offsets = [0, 0], sizes = [8, 8], strides = [1, 1]} : vector<8x64xf32> to vector<8x8xf32>
    %199 = vector.extract_strided_slice %191 {offsets = [0, 8], sizes = [8, 8], strides = [1, 1]} : vector<8x64xf32> to vector<8x8xf32>
    %200 = vector.extract_strided_slice %191 {offsets = [0, 16], sizes = [8, 8], strides = [1, 1]} : vector<8x64xf32> to vector<8x8xf32>
    %201 = vector.extract_strided_slice %191 {offsets = [0, 24], sizes = [8, 8], strides = [1, 1]} : vector<8x64xf32> to vector<8x8xf32>
    %202 = vector.extract_strided_slice %191 {offsets = [0, 32], sizes = [8, 8], strides = [1, 1]} : vector<8x64xf32> to vector<8x8xf32>
    %203 = vector.extract_strided_slice %191 {offsets = [0, 40], sizes = [8, 8], strides = [1, 1]} : vector<8x64xf32> to vector<8x8xf32>
    %204 = vector.extract_strided_slice %191 {offsets = [0, 48], sizes = [8, 8], strides = [1, 1]} : vector<8x64xf32> to vector<8x8xf32>
    %205 = vector.extract_strided_slice %191 {offsets = [0, 56], sizes = [8, 8], strides = [1, 1]} : vector<8x64xf32> to vector<8x8xf32>
    %206 = tpu.concatenate %198, %199, %200, %201, %202, %203, %204, %205 in 0 : vector<8x8xf32>, vector<8x8xf32>, vector<8x8xf32>, vector<8x8xf32>, vector<8x8xf32>, vector<8x8xf32>, vector<8x8xf32>, vector<8x8xf32> -> vector<64x8xf32>
    %207 = vector.extract_strided_slice %194 {offsets = [0, 0], sizes = [8, 8], strides = [1, 1]} : vector<8x64xf32> to vector<8x8xf32>
    %208 = vector.extract_strided_slice %194 {offsets = [0, 8], sizes = [8, 8], strides = [1, 1]} : vector<8x64xf32> to vector<8x8xf32>
    %209 = vector.extract_strided_slice %194 {offsets = [0, 16], sizes = [8, 8], strides = [1, 1]} : vector<8x64xf32> to vector<8x8xf32>
    %210 = vector.extract_strided_slice %194 {offsets = [0, 24], sizes = [8, 8], strides = [1, 1]} : vector<8x64xf32> to vector<8x8xf32>
    %211 = vector.extract_strided_slice %194 {offsets = [0, 32], sizes = [8, 8], strides = [1, 1]} : vector<8x64xf32> to vector<8x8xf32>
    %212 = vector.extract_strided_slice %194 {offsets = [0, 40], sizes = [8, 8], strides = [1, 1]} : vector<8x64xf32> to vector<8x8xf32>
    %213 = vector.extract_strided_slice %194 {offsets = [0, 48], sizes = [8, 8], strides = [1, 1]} : vector<8x64xf32> to vector<8x8xf32>
    %214 = vector.extract_strided_slice %194 {offsets = [0, 56], sizes = [8, 8], strides = [1, 1]} : vector<8x64xf32> to vector<8x8xf32>
    %215 = tpu.concatenate %207, %208, %209, %210, %211, %212, %213, %214 in 0 : vector<8x8xf32>, vector<8x8xf32>, vector<8x8xf32>, vector<8x8xf32>, vector<8x8xf32>, vector<8x8xf32>, vector<8x8xf32>, vector<8x8xf32> -> vector<64x8xf32>
    %216 = vector.extract_strided_slice %197 {offsets = [0, 0], sizes = [8, 8], strides = [1, 1]} : vector<8x64xf32> to vector<8x8xf32>
    %217 = vector.extract_strided_slice %197 {offsets = [0, 8], sizes = [8, 8], strides = [1, 1]} : vector<8x64xf32> to vector<8x8xf32>
    %218 = vector.extract_strided_slice %197 {offsets = [0, 16], sizes = [8, 8], strides = [1, 1]} : vector<8x64xf32> to vector<8x8xf32>
    %219 = vector.extract_strided_slice %197 {offsets = [0, 24], sizes = [8, 8], strides = [1, 1]} : vector<8x64xf32> to vector<8x8xf32>
    %220 = vector.extract_strided_slice %197 {offsets = [0, 32], sizes = [8, 8], strides = [1, 1]} : vector<8x64xf32> to vector<8x8xf32>
    %221 = vector.extract_strided_slice %197 {offsets = [0, 40], sizes = [8, 8], strides = [1, 1]} : vector<8x64xf32> to vector<8x8xf32>
    %222 = vector.extract_strided_slice %197 {offsets = [0, 48], sizes = [8, 8], strides = [1, 1]} : vector<8x64xf32> to vector<8x8xf32>
    %223 = vector.extract_strided_slice %197 {offsets = [0, 56], sizes = [8, 8], strides = [1, 1]} : vector<8x64xf32> to vector<8x8xf32>
    %224 = tpu.concatenate %216, %217, %218, %219, %220, %221, %222, %223 in 0 : vector<8x8xf32>, vector<8x8xf32>, vector<8x8xf32>, vector<8x8xf32>, vector<8x8xf32>, vector<8x8xf32>, vector<8x8xf32>, vector<8x8xf32> -> vector<64x8xf32>
    %cst_107 = arith.constant dense<0.000000e+00> : vector<64x64xf32>
    %225 = tpu.matmul %206, %215, %cst_107 {dimension_numbers = #tpu.dot_dimension_numbers<[1], [1], [0], [0], [0, 0, 1, 0], [], []>} : vector<64x8xf32>, vector<64x8xf32>, vector<64x64xf32> -> vector<64x64xf32>
    %226 = arith.addf %225, %5 : vector<64x64xf32>
    %cst_108 = arith.constant dense<0xFF800000> : vector<64xf32>
    %227 = vector.multi_reduction <maximumf>, %226, %cst_108 [1] : vector<64x64xf32> to vector<64xf32>
    %228 = vector.shape_cast %227 : vector<64xf32> to vector<64x1xf32>
    %229 = vector.broadcast %228 : vector<64x1xf32> to vector<64x64xf32>
    %230 = arith.subf %226, %229 : vector<64x64xf32>
    %231 = math.exp %230 : vector<64x64xf32>
    %cst_109 = arith.constant dense<0.000000e+00> : vector<64x8xf32>
    %232 = tpu.matmul %231, %224, %cst_109 {dimension_numbers = #tpu.dot_dimension_numbers<[1], [0], [0], [1], [0, 0, 1, 1], [], []>} : vector<64x64xf32>, vector<64x8xf32>, vector<64x8xf32> -> vector<64x8xf32>
    %cst_110 = arith.constant dense<0.000000e+00> : vector<64xf32>
    %233 = vector.multi_reduction <add>, %231, %cst_110 [1] : vector<64x64xf32> to vector<64xf32>
    %234 = vector.shape_cast %233 : vector<64xf32> to vector<64x1xf32>
    %235 = tpu.reciprocal %234 : vector<64x1xf32> -> vector<64x1xf32>
    %236 = vector.broadcast %235 : vector<64x1xf32> to vector<64x8xf32>
    %237 = arith.mulf %232, %236 : vector<64x8xf32>
    %238 = vector.extract_strided_slice %237 {offsets = [0, 0], sizes = [8, 8], strides = [1, 1]} : vector<64x8xf32> to vector<8x8xf32>
    %239 = vector.extract_strided_slice %237 {offsets = [8, 0], sizes = [8, 8], strides = [1, 1]} : vector<64x8xf32> to vector<8x8xf32>
    %240 = vector.extract_strided_slice %237 {offsets = [16, 0], sizes = [8, 8], strides = [1, 1]} : vector<64x8xf32> to vector<8x8xf32>
    %241 = vector.extract_strided_slice %237 {offsets = [24, 0], sizes = [8, 8], strides = [1, 1]} : vector<64x8xf32> to vector<8x8xf32>
    %242 = vector.extract_strided_slice %237 {offsets = [32, 0], sizes = [8, 8], strides = [1, 1]} : vector<64x8xf32> to vector<8x8xf32>
    %243 = vector.extract_strided_slice %237 {offsets = [40, 0], sizes = [8, 8], strides = [1, 1]} : vector<64x8xf32> to vector<8x8xf32>
    %244 = vector.extract_strided_slice %237 {offsets = [48, 0], sizes = [8, 8], strides = [1, 1]} : vector<64x8xf32> to vector<8x8xf32>
    %245 = vector.extract_strided_slice %237 {offsets = [56, 0], sizes = [8, 8], strides = [1, 1]} : vector<64x8xf32> to vector<8x8xf32>
    %246 = tpu.concatenate %238, %239, %240, %241, %242, %243, %244, %245 in 1 : vector<8x8xf32>, vector<8x8xf32>, vector<8x8xf32>, vector<8x8xf32>, vector<8x8xf32>, vector<8x8xf32>, vector<8x8xf32>, vector<8x8xf32> -> vector<8x64xf32>
    %cst_111 = arith.constant dense<0.000000e+00> : vector<8x64xf32>
    %247 = tpu.matmul %246, %178, %cst_111 {dimension_numbers = #tpu.dot_dimension_numbers<[1], [0], [0], [1], [0, 0, 1, 1], [], []>} : vector<8x64xf32>, vector<64x64xf32>, vector<8x64xf32> -> vector<8x64xf32>
    %248 = vector.broadcast %180 : vector<1x64xf32> to vector<8x64xf32>
    %249 = arith.addf %247, %248 : vector<8x64xf32>
    %c4 = arith.constant 4 : index
    %250 = memref.load %arg16[%c4] : memref<12xf32, #tpu.memory_space<smem>>
    %c5 = arith.constant 5 : index
    %251 = memref.load %arg16[%c5] : memref<12xf32, #tpu.memory_space<smem>>
    %c6 = arith.constant 6 : index
    %252 = memref.load %arg16[%c6] : memref<12xf32, #tpu.memory_space<smem>>
    %c7 = arith.constant 7 : index
    %253 = memref.load %arg16[%c7] : memref<12xf32, #tpu.memory_space<smem>>
    %254 = arith.addf %249, %164 : vector<8x64xf32>
    %cst_112 = arith.constant dense<0.000000e+00> : vector<8xf32>
    %255 = vector.multi_reduction <add>, %254, %cst_112 [1] : vector<8x64xf32> to vector<8xf32>
    %256 = vector.shape_cast %255 : vector<8xf32> to vector<8x1xf32>
    %cst_113 = arith.constant 6.400000e+01 : f32
    %257 = vector.broadcast %cst_113 : f32 to vector<8x1xf32>
    %258 = arith.divf %256, %257 : vector<8x1xf32>
    %259 = vector.broadcast %258 : vector<8x1xf32> to vector<8x64xf32>
    %260 = arith.subf %254, %259 : vector<8x64xf32>
    %261 = arith.mulf %260, %260 : vector<8x64xf32>
    %cst_114 = arith.constant dense<0.000000e+00> : vector<8xf32>
    %262 = vector.multi_reduction <add>, %261, %cst_114 [1] : vector<8x64xf32> to vector<8xf32>
    %263 = vector.shape_cast %262 : vector<8xf32> to vector<8x1xf32>
    %cst_115 = arith.constant 0.0158730168 : f32
    %264 = vector.broadcast %cst_115 : f32 to vector<8x1xf32>
    %265 = arith.mulf %263, %264 : vector<8x1xf32>
    %266 = vector.broadcast %258 : vector<8x1xf32> to vector<8x64xf32>
    %267 = arith.subf %254, %266 : vector<8x64xf32>
    %cst_116 = arith.constant 9.99999993E-9 : f32
    %268 = vector.broadcast %cst_116 : f32 to vector<8x1xf32>
    %269 = arith.addf %265, %268 : vector<8x1xf32>
    %270 = math.rsqrt %269 : vector<8x1xf32>
    %271 = vector.broadcast %270 : vector<8x1xf32> to vector<8x64xf32>
    %272 = arith.mulf %267, %271 : vector<8x64xf32>
    %273 = vector.broadcast %250 : f32 to vector<8x64xf32>
    %274 = arith.mulf %273, %272 : vector<8x64xf32>
    %275 = vector.broadcast %251 : f32 to vector<8x64xf32>
    %276 = arith.addf %274, %275 : vector<8x64xf32>
    %277 = arith.mulf %276, %7 : vector<8x64xf32>
    %cst_117 = arith.constant dense<0.000000e+00> : vector<8x256xf32>
    %278 = tpu.matmul %277, %182, %cst_117 {dimension_numbers = #tpu.dot_dimension_numbers<[1], [0], [0], [1], [0, 0, 1, 1], [], []>} : vector<8x64xf32>, vector<64x256xf32>, vector<8x256xf32> -> vector<8x256xf32>
    %279 = vector.broadcast %184 : vector<1x256xf32> to vector<8x256xf32>
    %280 = arith.addf %278, %279 : vector<8x256xf32>
    %281 = arith.mulf %280, %280 : vector<8x256xf32>
    %282 = arith.mulf %281, %280 : vector<8x256xf32>
    %cst_118 = arith.constant 4.471500e-02 : f32
    %283 = vector.broadcast %cst_118 : f32 to vector<8x256xf32>
    %284 = arith.mulf %283, %282 : vector<8x256xf32>
    %285 = arith.addf %280, %284 : vector<8x256xf32>
    %cst_119 = arith.constant 0.797884583 : f32
    %286 = vector.broadcast %cst_119 : f32 to vector<8x256xf32>
    %287 = arith.mulf %286, %285 : vector<8x256xf32>
    %288 = math.tanh %287 : vector<8x256xf32>
    %cst_120 = arith.constant 1.000000e+00 : f32
    %289 = vector.broadcast %cst_120 : f32 to vector<8x256xf32>
    %290 = arith.addf %289, %288 : vector<8x256xf32>
    %cst_121 = arith.constant 5.000000e-01 : f32
    %291 = vector.broadcast %cst_121 : f32 to vector<8x256xf32>
    %292 = arith.mulf %291, %290 : vector<8x256xf32>
    %293 = arith.mulf %280, %292 : vector<8x256xf32>
    %cst_122 = arith.constant dense<0.000000e+00> : vector<8x64xf32>
    %294 = tpu.matmul %293, %186, %cst_122 {dimension_numbers = #tpu.dot_dimension_numbers<[1], [0], [0], [1], [0, 0, 1, 1], [], []>} : vector<8x256xf32>, vector<256x64xf32>, vector<8x64xf32> -> vector<8x64xf32>
    %295 = vector.broadcast %188 : vector<1x64xf32> to vector<8x64xf32>
    %296 = arith.addf %294, %295 : vector<8x64xf32>
    %297 = arith.addf %296, %277 : vector<8x64xf32>
    %cst_123 = arith.constant dense<0.000000e+00> : vector<8xf32>
    %298 = vector.multi_reduction <add>, %297, %cst_123 [1] : vector<8x64xf32> to vector<8xf32>
    %299 = vector.shape_cast %298 : vector<8xf32> to vector<8x1xf32>
    %cst_124 = arith.constant 6.400000e+01 : f32
    %300 = vector.broadcast %cst_124 : f32 to vector<8x1xf32>
    %301 = arith.divf %299, %300 : vector<8x1xf32>
    %302 = vector.broadcast %301 : vector<8x1xf32> to vector<8x64xf32>
    %303 = arith.subf %297, %302 : vector<8x64xf32>
    %304 = arith.mulf %303, %303 : vector<8x64xf32>
    %cst_125 = arith.constant dense<0.000000e+00> : vector<8xf32>
    %305 = vector.multi_reduction <add>, %304, %cst_125 [1] : vector<8x64xf32> to vector<8xf32>
    %306 = vector.shape_cast %305 : vector<8xf32> to vector<8x1xf32>
    %cst_126 = arith.constant 0.0158730168 : f32
    %307 = vector.broadcast %cst_126 : f32 to vector<8x1xf32>
    %308 = arith.mulf %306, %307 : vector<8x1xf32>
    %309 = vector.broadcast %301 : vector<8x1xf32> to vector<8x64xf32>
    %310 = arith.subf %297, %309 : vector<8x64xf32>
    %cst_127 = arith.constant 9.99999993E-9 : f32
    %311 = vector.broadcast %cst_127 : f32 to vector<8x1xf32>
    %312 = arith.addf %308, %311 : vector<8x1xf32>
    %313 = math.rsqrt %312 : vector<8x1xf32>
    %314 = vector.broadcast %313 : vector<8x1xf32> to vector<8x64xf32>
    %315 = arith.mulf %310, %314 : vector<8x64xf32>
    %316 = vector.broadcast %252 : f32 to vector<8x64xf32>
    %317 = arith.mulf %316, %315 : vector<8x64xf32>
    %318 = vector.broadcast %253 : f32 to vector<8x64xf32>
    %319 = arith.addf %317, %318 : vector<8x64xf32>
    %320 = arith.mulf %319, %7 : vector<8x64xf32>
    %321 = arith.addf %320, %163 : vector<8x64xf32>
    %322 = arith.addf %321, %1 : vector<8x64xf32>
    %c2_128 = arith.constant 2 : index
    %c0_129 = arith.constant 0 : index
    %c0_130 = arith.constant 0 : index
    %323 = vector.load %arg4[%c2_128, %c0_129, %c0_130] : memref<3x64x64xf32, #tpu.memory_space<vmem>>, vector<1x64x64xf32>
    %324 = vector.shape_cast %323 : vector<1x64x64xf32> to vector<64x64xf32>
    %c2_131 = arith.constant 2 : index
    %c0_132 = arith.constant 0 : index
    %c0_133 = arith.constant 0 : index
    %325 = vector.load %arg5[%c2_131, %c0_132, %c0_133] : memref<3x1x64xf32, #tpu.memory_space<vmem>>, vector<1x1x64xf32>
    %326 = vector.shape_cast %325 : vector<1x1x64xf32> to vector<1x64xf32>
    %c2_134 = arith.constant 2 : index
    %c0_135 = arith.constant 0 : index
    %c0_136 = arith.constant 0 : index
    %327 = vector.load %arg6[%c2_134, %c0_135, %c0_136] : memref<3x64x64xf32, #tpu.memory_space<vmem>>, vector<1x64x64xf32>
    %328 = vector.shape_cast %327 : vector<1x64x64xf32> to vector<64x64xf32>
    %c2_137 = arith.constant 2 : index
    %c0_138 = arith.constant 0 : index
    %c0_139 = arith.constant 0 : index
    %329 = vector.load %arg7[%c2_137, %c0_138, %c0_139] : memref<3x1x64xf32, #tpu.memory_space<vmem>>, vector<1x1x64xf32>
    %330 = vector.shape_cast %329 : vector<1x1x64xf32> to vector<1x64xf32>
    %c2_140 = arith.constant 2 : index
    %c0_141 = arith.constant 0 : index
    %c0_142 = arith.constant 0 : index
    %331 = vector.load %arg8[%c2_140, %c0_141, %c0_142] : memref<3x64x64xf32, #tpu.memory_space<vmem>>, vector<1x64x64xf32>
    %332 = vector.shape_cast %331 : vector<1x64x64xf32> to vector<64x64xf32>
    %c2_143 = arith.constant 2 : index
    %c0_144 = arith.constant 0 : index
    %c0_145 = arith.constant 0 : index
    %333 = vector.load %arg9[%c2_143, %c0_144, %c0_145] : memref<3x1x64xf32, #tpu.memory_space<vmem>>, vector<1x1x64xf32>
    %334 = vector.shape_cast %333 : vector<1x1x64xf32> to vector<1x64xf32>
    %c2_146 = arith.constant 2 : index
    %c0_147 = arith.constant 0 : index
    %c0_148 = arith.constant 0 : index
    %335 = vector.load %arg10[%c2_146, %c0_147, %c0_148] : memref<3x64x64xf32, #tpu.memory_space<vmem>>, vector<1x64x64xf32>
    %336 = vector.shape_cast %335 : vector<1x64x64xf32> to vector<64x64xf32>
    %c2_149 = arith.constant 2 : index
    %c0_150 = arith.constant 0 : index
    %c0_151 = arith.constant 0 : index
    %337 = vector.load %arg11[%c2_149, %c0_150, %c0_151] : memref<3x1x64xf32, #tpu.memory_space<vmem>>, vector<1x1x64xf32>
    %338 = vector.shape_cast %337 : vector<1x1x64xf32> to vector<1x64xf32>
    %c2_152 = arith.constant 2 : index
    %c0_153 = arith.constant 0 : index
    %c0_154 = arith.constant 0 : index
    %339 = vector.load %arg12[%c2_152, %c0_153, %c0_154] : memref<3x64x256xf32, #tpu.memory_space<vmem>>, vector<1x64x256xf32>
    %340 = vector.shape_cast %339 : vector<1x64x256xf32> to vector<64x256xf32>
    %c2_155 = arith.constant 2 : index
    %c0_156 = arith.constant 0 : index
    %c0_157 = arith.constant 0 : index
    %341 = vector.load %arg13[%c2_155, %c0_156, %c0_157] : memref<3x1x256xf32, #tpu.memory_space<vmem>>, vector<1x1x256xf32>
    %342 = vector.shape_cast %341 : vector<1x1x256xf32> to vector<1x256xf32>
    %c2_158 = arith.constant 2 : index
    %c0_159 = arith.constant 0 : index
    %c0_160 = arith.constant 0 : index
    %343 = vector.load %arg14[%c2_158, %c0_159, %c0_160] : memref<3x256x64xf32, #tpu.memory_space<vmem>>, vector<1x256x64xf32>
    %344 = vector.shape_cast %343 : vector<1x256x64xf32> to vector<256x64xf32>
    %c2_161 = arith.constant 2 : index
    %c0_162 = arith.constant 0 : index
    %c0_163 = arith.constant 0 : index
    %345 = vector.load %arg15[%c2_161, %c0_162, %c0_163] : memref<3x1x64xf32, #tpu.memory_space<vmem>>, vector<1x1x64xf32>
    %346 = vector.shape_cast %345 : vector<1x1x64xf32> to vector<1x64xf32>
    %cst_164 = arith.constant dense<0.000000e+00> : vector<8x64xf32>
    %347 = tpu.matmul %322, %324, %cst_164 {dimension_numbers = #tpu.dot_dimension_numbers<[1], [0], [0], [1], [0, 0, 1, 1], [], []>} : vector<8x64xf32>, vector<64x64xf32>, vector<8x64xf32> -> vector<8x64xf32>
    %348 = vector.broadcast %326 : vector<1x64xf32> to vector<8x64xf32>
    %349 = arith.addf %347, %348 : vector<8x64xf32>
    %cst_165 = arith.constant dense<0.000000e+00> : vector<8x64xf32>
    %350 = tpu.matmul %322, %328, %cst_165 {dimension_numbers = #tpu.dot_dimension_numbers<[1], [0], [0], [1], [0, 0, 1, 1], [], []>} : vector<8x64xf32>, vector<64x64xf32>, vector<8x64xf32> -> vector<8x64xf32>
    %351 = vector.broadcast %330 : vector<1x64xf32> to vector<8x64xf32>
    %352 = arith.addf %350, %351 : vector<8x64xf32>
    %cst_166 = arith.constant dense<0.000000e+00> : vector<8x64xf32>
    %353 = tpu.matmul %322, %332, %cst_166 {dimension_numbers = #tpu.dot_dimension_numbers<[1], [0], [0], [1], [0, 0, 1, 1], [], []>} : vector<8x64xf32>, vector<64x64xf32>, vector<8x64xf32> -> vector<8x64xf32>
    %354 = vector.broadcast %334 : vector<1x64xf32> to vector<8x64xf32>
    %355 = arith.addf %353, %354 : vector<8x64xf32>
    %356 = vector.extract_strided_slice %349 {offsets = [0, 0], sizes = [8, 8], strides = [1, 1]} : vector<8x64xf32> to vector<8x8xf32>
    %357 = vector.extract_strided_slice %349 {offsets = [0, 8], sizes = [8, 8], strides = [1, 1]} : vector<8x64xf32> to vector<8x8xf32>
    %358 = vector.extract_strided_slice %349 {offsets = [0, 16], sizes = [8, 8], strides = [1, 1]} : vector<8x64xf32> to vector<8x8xf32>
    %359 = vector.extract_strided_slice %349 {offsets = [0, 24], sizes = [8, 8], strides = [1, 1]} : vector<8x64xf32> to vector<8x8xf32>
    %360 = vector.extract_strided_slice %349 {offsets = [0, 32], sizes = [8, 8], strides = [1, 1]} : vector<8x64xf32> to vector<8x8xf32>
    %361 = vector.extract_strided_slice %349 {offsets = [0, 40], sizes = [8, 8], strides = [1, 1]} : vector<8x64xf32> to vector<8x8xf32>
    %362 = vector.extract_strided_slice %349 {offsets = [0, 48], sizes = [8, 8], strides = [1, 1]} : vector<8x64xf32> to vector<8x8xf32>
    %363 = vector.extract_strided_slice %349 {offsets = [0, 56], sizes = [8, 8], strides = [1, 1]} : vector<8x64xf32> to vector<8x8xf32>
    %364 = tpu.concatenate %356, %357, %358, %359, %360, %361, %362, %363 in 0 : vector<8x8xf32>, vector<8x8xf32>, vector<8x8xf32>, vector<8x8xf32>, vector<8x8xf32>, vector<8x8xf32>, vector<8x8xf32>, vector<8x8xf32> -> vector<64x8xf32>
    %365 = vector.extract_strided_slice %352 {offsets = [0, 0], sizes = [8, 8], strides = [1, 1]} : vector<8x64xf32> to vector<8x8xf32>
    %366 = vector.extract_strided_slice %352 {offsets = [0, 8], sizes = [8, 8], strides = [1, 1]} : vector<8x64xf32> to vector<8x8xf32>
    %367 = vector.extract_strided_slice %352 {offsets = [0, 16], sizes = [8, 8], strides = [1, 1]} : vector<8x64xf32> to vector<8x8xf32>
    %368 = vector.extract_strided_slice %352 {offsets = [0, 24], sizes = [8, 8], strides = [1, 1]} : vector<8x64xf32> to vector<8x8xf32>
    %369 = vector.extract_strided_slice %352 {offsets = [0, 32], sizes = [8, 8], strides = [1, 1]} : vector<8x64xf32> to vector<8x8xf32>
    %370 = vector.extract_strided_slice %352 {offsets = [0, 40], sizes = [8, 8], strides = [1, 1]} : vector<8x64xf32> to vector<8x8xf32>
    %371 = vector.extract_strided_slice %352 {offsets = [0, 48], sizes = [8, 8], strides = [1, 1]} : vector<8x64xf32> to vector<8x8xf32>
    %372 = vector.extract_strided_slice %352 {offsets = [0, 56], sizes = [8, 8], strides = [1, 1]} : vector<8x64xf32> to vector<8x8xf32>
    %373 = tpu.concatenate %365, %366, %367, %368, %369, %370, %371, %372 in 0 : vector<8x8xf32>, vector<8x8xf32>, vector<8x8xf32>, vector<8x8xf32>, vector<8x8xf32>, vector<8x8xf32>, vector<8x8xf32>, vector<8x8xf32> -> vector<64x8xf32>
    %374 = vector.extract_strided_slice %355 {offsets = [0, 0], sizes = [8, 8], strides = [1, 1]} : vector<8x64xf32> to vector<8x8xf32>
    %375 = vector.extract_strided_slice %355 {offsets = [0, 8], sizes = [8, 8], strides = [1, 1]} : vector<8x64xf32> to vector<8x8xf32>
    %376 = vector.extract_strided_slice %355 {offsets = [0, 16], sizes = [8, 8], strides = [1, 1]} : vector<8x64xf32> to vector<8x8xf32>
    %377 = vector.extract_strided_slice %355 {offsets = [0, 24], sizes = [8, 8], strides = [1, 1]} : vector<8x64xf32> to vector<8x8xf32>
    %378 = vector.extract_strided_slice %355 {offsets = [0, 32], sizes = [8, 8], strides = [1, 1]} : vector<8x64xf32> to vector<8x8xf32>
    %379 = vector.extract_strided_slice %355 {offsets = [0, 40], sizes = [8, 8], strides = [1, 1]} : vector<8x64xf32> to vector<8x8xf32>
    %380 = vector.extract_strided_slice %355 {offsets = [0, 48], sizes = [8, 8], strides = [1, 1]} : vector<8x64xf32> to vector<8x8xf32>
    %381 = vector.extract_strided_slice %355 {offsets = [0, 56], sizes = [8, 8], strides = [1, 1]} : vector<8x64xf32> to vector<8x8xf32>
    %382 = tpu.concatenate %374, %375, %376, %377, %378, %379, %380, %381 in 0 : vector<8x8xf32>, vector<8x8xf32>, vector<8x8xf32>, vector<8x8xf32>, vector<8x8xf32>, vector<8x8xf32>, vector<8x8xf32>, vector<8x8xf32> -> vector<64x8xf32>
    %cst_167 = arith.constant dense<0.000000e+00> : vector<64x64xf32>
    %383 = tpu.matmul %364, %373, %cst_167 {dimension_numbers = #tpu.dot_dimension_numbers<[1], [1], [0], [0], [0, 0, 1, 0], [], []>} : vector<64x8xf32>, vector<64x8xf32>, vector<64x64xf32> -> vector<64x64xf32>
    %384 = arith.addf %383, %5 : vector<64x64xf32>
    %cst_168 = arith.constant dense<0xFF800000> : vector<64xf32>
    %385 = vector.multi_reduction <maximumf>, %384, %cst_168 [1] : vector<64x64xf32> to vector<64xf32>
    %386 = vector.shape_cast %385 : vector<64xf32> to vector<64x1xf32>
    %387 = vector.broadcast %386 : vector<64x1xf32> to vector<64x64xf32>
    %388 = arith.subf %384, %387 : vector<64x64xf32>
    %389 = math.exp %388 : vector<64x64xf32>
    %cst_169 = arith.constant dense<0.000000e+00> : vector<64x8xf32>
    %390 = tpu.matmul %389, %382, %cst_169 {dimension_numbers = #tpu.dot_dimension_numbers<[1], [0], [0], [1], [0, 0, 1, 1], [], []>} : vector<64x64xf32>, vector<64x8xf32>, vector<64x8xf32> -> vector<64x8xf32>
    %cst_170 = arith.constant dense<0.000000e+00> : vector<64xf32>
    %391 = vector.multi_reduction <add>, %389, %cst_170 [1] : vector<64x64xf32> to vector<64xf32>
    %392 = vector.shape_cast %391 : vector<64xf32> to vector<64x1xf32>
    %393 = tpu.reciprocal %392 : vector<64x1xf32> -> vector<64x1xf32>
    %394 = vector.broadcast %393 : vector<64x1xf32> to vector<64x8xf32>
    %395 = arith.mulf %390, %394 : vector<64x8xf32>
    %396 = vector.extract_strided_slice %395 {offsets = [0, 0], sizes = [8, 8], strides = [1, 1]} : vector<64x8xf32> to vector<8x8xf32>
    %397 = vector.extract_strided_slice %395 {offsets = [8, 0], sizes = [8, 8], strides = [1, 1]} : vector<64x8xf32> to vector<8x8xf32>
    %398 = vector.extract_strided_slice %395 {offsets = [16, 0], sizes = [8, 8], strides = [1, 1]} : vector<64x8xf32> to vector<8x8xf32>
    %399 = vector.extract_strided_slice %395 {offsets = [24, 0], sizes = [8, 8], strides = [1, 1]} : vector<64x8xf32> to vector<8x8xf32>
    %400 = vector.extract_strided_slice %395 {offsets = [32, 0], sizes = [8, 8], strides = [1, 1]} : vector<64x8xf32> to vector<8x8xf32>
    %401 = vector.extract_strided_slice %395 {offsets = [40, 0], sizes = [8, 8], strides = [1, 1]} : vector<64x8xf32> to vector<8x8xf32>
    %402 = vector.extract_strided_slice %395 {offsets = [48, 0], sizes = [8, 8], strides = [1, 1]} : vector<64x8xf32> to vector<8x8xf32>
    %403 = vector.extract_strided_slice %395 {offsets = [56, 0], sizes = [8, 8], strides = [1, 1]} : vector<64x8xf32> to vector<8x8xf32>
    %404 = tpu.concatenate %396, %397, %398, %399, %400, %401, %402, %403 in 1 : vector<8x8xf32>, vector<8x8xf32>, vector<8x8xf32>, vector<8x8xf32>, vector<8x8xf32>, vector<8x8xf32>, vector<8x8xf32>, vector<8x8xf32> -> vector<8x64xf32>
    %cst_171 = arith.constant dense<0.000000e+00> : vector<8x64xf32>
    %405 = tpu.matmul %404, %336, %cst_171 {dimension_numbers = #tpu.dot_dimension_numbers<[1], [0], [0], [1], [0, 0, 1, 1], [], []>} : vector<8x64xf32>, vector<64x64xf32>, vector<8x64xf32> -> vector<8x64xf32>
    %406 = vector.broadcast %338 : vector<1x64xf32> to vector<8x64xf32>
    %407 = arith.addf %405, %406 : vector<8x64xf32>
    %c8 = arith.constant 8 : index
    %408 = memref.load %arg16[%c8] : memref<12xf32, #tpu.memory_space<smem>>
    %c9 = arith.constant 9 : index
    %409 = memref.load %arg16[%c9] : memref<12xf32, #tpu.memory_space<smem>>
    %c10 = arith.constant 10 : index
    %410 = memref.load %arg16[%c10] : memref<12xf32, #tpu.memory_space<smem>>
    %c11 = arith.constant 11 : index
    %411 = memref.load %arg16[%c11] : memref<12xf32, #tpu.memory_space<smem>>
    %412 = arith.addf %407, %322 : vector<8x64xf32>
    %cst_172 = arith.constant dense<0.000000e+00> : vector<8xf32>
    %413 = vector.multi_reduction <add>, %412, %cst_172 [1] : vector<8x64xf32> to vector<8xf32>
    %414 = vector.shape_cast %413 : vector<8xf32> to vector<8x1xf32>
    %cst_173 = arith.constant 6.400000e+01 : f32
    %415 = vector.broadcast %cst_173 : f32 to vector<8x1xf32>
    %416 = arith.divf %414, %415 : vector<8x1xf32>
    %417 = vector.broadcast %416 : vector<8x1xf32> to vector<8x64xf32>
    %418 = arith.subf %412, %417 : vector<8x64xf32>
    %419 = arith.mulf %418, %418 : vector<8x64xf32>
    %cst_174 = arith.constant dense<0.000000e+00> : vector<8xf32>
    %420 = vector.multi_reduction <add>, %419, %cst_174 [1] : vector<8x64xf32> to vector<8xf32>
    %421 = vector.shape_cast %420 : vector<8xf32> to vector<8x1xf32>
    %cst_175 = arith.constant 0.0158730168 : f32
    %422 = vector.broadcast %cst_175 : f32 to vector<8x1xf32>
    %423 = arith.mulf %421, %422 : vector<8x1xf32>
    %424 = vector.broadcast %416 : vector<8x1xf32> to vector<8x64xf32>
    %425 = arith.subf %412, %424 : vector<8x64xf32>
    %cst_176 = arith.constant 9.99999993E-9 : f32
    %426 = vector.broadcast %cst_176 : f32 to vector<8x1xf32>
    %427 = arith.addf %423, %426 : vector<8x1xf32>
    %428 = math.rsqrt %427 : vector<8x1xf32>
    %429 = vector.broadcast %428 : vector<8x1xf32> to vector<8x64xf32>
    %430 = arith.mulf %425, %429 : vector<8x64xf32>
    %431 = vector.broadcast %408 : f32 to vector<8x64xf32>
    %432 = arith.mulf %431, %430 : vector<8x64xf32>
    %433 = vector.broadcast %409 : f32 to vector<8x64xf32>
    %434 = arith.addf %432, %433 : vector<8x64xf32>
    %435 = arith.mulf %434, %7 : vector<8x64xf32>
    %cst_177 = arith.constant dense<0.000000e+00> : vector<8x256xf32>
    %436 = tpu.matmul %435, %340, %cst_177 {dimension_numbers = #tpu.dot_dimension_numbers<[1], [0], [0], [1], [0, 0, 1, 1], [], []>} : vector<8x64xf32>, vector<64x256xf32>, vector<8x256xf32> -> vector<8x256xf32>
    %437 = vector.broadcast %342 : vector<1x256xf32> to vector<8x256xf32>
    %438 = arith.addf %436, %437 : vector<8x256xf32>
    %439 = arith.mulf %438, %438 : vector<8x256xf32>
    %440 = arith.mulf %439, %438 : vector<8x256xf32>
    %cst_178 = arith.constant 4.471500e-02 : f32
    %441 = vector.broadcast %cst_178 : f32 to vector<8x256xf32>
    %442 = arith.mulf %441, %440 : vector<8x256xf32>
    %443 = arith.addf %438, %442 : vector<8x256xf32>
    %cst_179 = arith.constant 0.797884583 : f32
    %444 = vector.broadcast %cst_179 : f32 to vector<8x256xf32>
    %445 = arith.mulf %444, %443 : vector<8x256xf32>
    %446 = math.tanh %445 : vector<8x256xf32>
    %cst_180 = arith.constant 1.000000e+00 : f32
    %447 = vector.broadcast %cst_180 : f32 to vector<8x256xf32>
    %448 = arith.addf %447, %446 : vector<8x256xf32>
    %cst_181 = arith.constant 5.000000e-01 : f32
    %449 = vector.broadcast %cst_181 : f32 to vector<8x256xf32>
    %450 = arith.mulf %449, %448 : vector<8x256xf32>
    %451 = arith.mulf %438, %450 : vector<8x256xf32>
    %cst_182 = arith.constant dense<0.000000e+00> : vector<8x64xf32>
    %452 = tpu.matmul %451, %344, %cst_182 {dimension_numbers = #tpu.dot_dimension_numbers<[1], [0], [0], [1], [0, 0, 1, 1], [], []>} : vector<8x256xf32>, vector<256x64xf32>, vector<8x64xf32> -> vector<8x64xf32>
    %453 = vector.broadcast %346 : vector<1x64xf32> to vector<8x64xf32>
    %454 = arith.addf %452, %453 : vector<8x64xf32>
    %455 = arith.addf %454, %435 : vector<8x64xf32>
    %cst_183 = arith.constant dense<0.000000e+00> : vector<8xf32>
    %456 = vector.multi_reduction <add>, %455, %cst_183 [1] : vector<8x64xf32> to vector<8xf32>
    %457 = vector.shape_cast %456 : vector<8xf32> to vector<8x1xf32>
    %cst_184 = arith.constant 6.400000e+01 : f32
    %458 = vector.broadcast %cst_184 : f32 to vector<8x1xf32>
    %459 = arith.divf %457, %458 : vector<8x1xf32>
    %460 = vector.broadcast %459 : vector<8x1xf32> to vector<8x64xf32>
    %461 = arith.subf %455, %460 : vector<8x64xf32>
    %462 = arith.mulf %461, %461 : vector<8x64xf32>
    %cst_185 = arith.constant dense<0.000000e+00> : vector<8xf32>
    %463 = vector.multi_reduction <add>, %462, %cst_185 [1] : vector<8x64xf32> to vector<8xf32>
    %464 = vector.shape_cast %463 : vector<8xf32> to vector<8x1xf32>
    %cst_186 = arith.constant 0.0158730168 : f32
    %465 = vector.broadcast %cst_186 : f32 to vector<8x1xf32>
    %466 = arith.mulf %464, %465 : vector<8x1xf32>
    %467 = vector.broadcast %459 : vector<8x1xf32> to vector<8x64xf32>
    %468 = arith.subf %455, %467 : vector<8x64xf32>
    %cst_187 = arith.constant 9.99999993E-9 : f32
    %469 = vector.broadcast %cst_187 : f32 to vector<8x1xf32>
    %470 = arith.addf %466, %469 : vector<8x1xf32>
    %471 = math.rsqrt %470 : vector<8x1xf32>
    %472 = vector.broadcast %471 : vector<8x1xf32> to vector<8x64xf32>
    %473 = arith.mulf %468, %472 : vector<8x64xf32>
    %474 = vector.broadcast %410 : f32 to vector<8x64xf32>
    %475 = arith.mulf %474, %473 : vector<8x64xf32>
    %476 = vector.broadcast %411 : f32 to vector<8x64xf32>
    %477 = arith.addf %475, %476 : vector<8x64xf32>
    %478 = arith.mulf %477, %7 : vector<8x64xf32>
    %c0_188 = arith.constant 0 : index
    %c0_189 = arith.constant 0 : index
    %c0_190 = arith.constant 0 : index
    %479 = vector.load %arg17[%c0_188, %c0_189, %c0_190] : memref<1x8x64xf32, #tpu.memory_space<vmem>>, vector<1x8x64xf32>
    %480 = vector.shape_cast %479 : vector<1x8x64xf32> to vector<8x64xf32>
    %481 = vector.shape_cast %478 : vector<8x64xf32> to vector<1x8x64xf32>
    tpu.vector_store %arg17[%c0_188, %c0_189, %c0_190], %481 {strides = array<i32>} : memref<1x8x64xf32, #tpu.memory_space<vmem>>, vector<1x8x64xf32>,
    return
  }
  func.func @transform_0(%arg0: i32) -> (i32, i32, i32) {
    %c0_i32 = arith.constant 0 : i32
    %c0_i32_0 = arith.constant 0 : i32
    %c0_i32_1 = arith.constant 0 : i32
    return %arg0, %c0_i32, %c0_i32_0 : i32, i32, i32
  }
  func.func @transform_1(%arg0: i32) -> (i32, i32, i32) {
    %c0_i32 = arith.constant 0 : i32
    %c0_i32_0 = arith.constant 0 : i32
    %c0_i32_1 = arith.constant 0 : i32
    return %arg0, %c0_i32, %c0_i32_0 : i32, i32, i32
  }
  func.func @transform_2(%arg0: i32) -> (i32, i32, i32) {
    %c0_i32 = arith.constant 0 : i32
    %c0_i32_0 = arith.constant 0 : i32
    %c0_i32_1 = arith.constant 0 : i32
    return %arg0, %c0_i32, %c0_i32_0 : i32, i32, i32
  }
  func.func @transform_3(%arg0: i32) -> (i32, i32, i32) {
    %c0_i32 = arith.constant 0 : i32
    %c0_i32_0 = arith.constant 0 : i32
    %c0_i32_1 = arith.constant 0 : i32
    %c0_i32_2 = arith.constant 0 : i32
    return %c0_i32, %c0_i32_0, %c0_i32_1 : i32, i32, i32
  }
  func.func @transform_4(%arg0: i32) -> (i32, i32, i32) {
    %c0_i32 = arith.constant 0 : i32
    %c0_i32_0 = arith.constant 0 : i32
    %c0_i32_1 = arith.constant 0 : i32
    %c0_i32_2 = arith.constant 0 : i32
    return %c0_i32, %c0_i32_0, %c0_i32_1 : i32, i32, i32
  }
  func.func @transform_5(%arg0: i32) -> (i32, i32, i32) {
    %c0_i32 = arith.constant 0 : i32
    %c0_i32_0 = arith.constant 0 : i32
    %c0_i32_1 = arith.constant 0 : i32
    %c0_i32_2 = arith.constant 0 : i32
    return %c0_i32, %c0_i32_0, %c0_i32_1 : i32, i32, i32
  }
  func.func @transform_6(%arg0: i32) -> (i32, i32, i32) {
    %c0_i32 = arith.constant 0 : i32
    %c0_i32_0 = arith.constant 0 : i32
    %c0_i32_1 = arith.constant 0 : i32
    %c0_i32_2 = arith.constant 0 : i32
    return %c0_i32, %c0_i32_0, %c0_i32_1 : i32, i32, i32
  }
  func.func @transform_7(%arg0: i32) -> (i32, i32, i32) {
    %c0_i32 = arith.constant 0 : i32
    %c0_i32_0 = arith.constant 0 : i32
    %c0_i32_1 = arith.constant 0 : i32
    %c0_i32_2 = arith.constant 0 : i32
    return %c0_i32, %c0_i32_0, %c0_i32_1 : i32, i32, i32
  }
  func.func @transform_8(%arg0: i32) -> (i32, i32, i32) {
    %c0_i32 = arith.constant 0 : i32
    %c0_i32_0 = arith.constant 0 : i32
    %c0_i32_1 = arith.constant 0 : i32
    %c0_i32_2 = arith.constant 0 : i32
    return %c0_i32, %c0_i32_0, %c0_i32_1 : i32, i32, i32
  }
  func.func @transform_9(%arg0: i32) -> (i32, i32, i32) {
    %c0_i32 = arith.constant 0 : i32
    %c0_i32_0 = arith.constant 0 : i32
    %c0_i32_1 = arith.constant 0 : i32
    %c0_i32_2 = arith.constant 0 : i32
    return %c0_i32, %c0_i32_0, %c0_i32_1 : i32, i32, i32
  }
  func.func @transform_10(%arg0: i32) -> (i32, i32, i32) {
    %c0_i32 = arith.constant 0 : i32
    %c0_i32_0 = arith.constant 0 : i32
    %c0_i32_1 = arith.constant 0 : i32
    %c0_i32_2 = arith.constant 0 : i32
    return %c0_i32, %c0_i32_0, %c0_i32_1 : i32, i32, i32
  }
  func.func @transform_11(%arg0: i32) -> (i32, i32, i32) {
    %c0_i32 = arith.constant 0 : i32
    %c0_i32_0 = arith.constant 0 : i32
    %c0_i32_1 = arith.constant 0 : i32
    %c0_i32_2 = arith.constant 0 : i32
    return %c0_i32, %c0_i32_0, %c0_i32_1 : i32, i32, i32
  }
  func.func @transform_12(%arg0: i32) -> (i32, i32, i32) {
    %c0_i32 = arith.constant 0 : i32
    %c0_i32_0 = arith.constant 0 : i32
    %c0_i32_1 = arith.constant 0 : i32
    %c0_i32_2 = arith.constant 0 : i32
    return %c0_i32, %c0_i32_0, %c0_i32_1 : i32, i32, i32
  }
  func.func @transform_13(%arg0: i32) -> (i32, i32, i32) {
    %c0_i32 = arith.constant 0 : i32
    %c0_i32_0 = arith.constant 0 : i32
    %c0_i32_1 = arith.constant 0 : i32
    %c0_i32_2 = arith.constant 0 : i32
    return %c0_i32, %c0_i32_0, %c0_i32_1 : i32, i32, i32
  }
  func.func @transform_14(%arg0: i32) -> (i32, i32, i32) {
    %c0_i32 = arith.constant 0 : i32
    %c0_i32_0 = arith.constant 0 : i32
    %c0_i32_1 = arith.constant 0 : i32
    %c0_i32_2 = arith.constant 0 : i32
    return %c0_i32, %c0_i32_0, %c0_i32_1 : i32, i32, i32
  }
  func.func @transform_15(%arg0: i32) -> i32 {
    %c0_i32 = arith.constant 0 : i32
    %c0_i32_0 = arith.constant 0 : i32
    return %c0_i32 : i32
  }
  func.func @transform_16(%arg0: i32) -> (i32, i32, i32) {
    %c0_i32 = arith.constant 0 : i32
    %c0_i32_0 = arith.constant 0 : i32
    %c0_i32_1 = arith.constant 0 : i32
    return %arg0, %c0_i32, %c0_i32_0 : i32, i32, i32
  }
}

</mosaic_0001>

<llo_original>
// kernel: tpu_custom_call.1
$region0: #{tpu_custom_call.1}
  #allocation0 [shape = 'u32[]', space=smem, size = 0x4, offset = 0x4, fixed_abs, tag = 'smem constant byte address 0x4 - core index']
  #allocation1 [shape = 'u32[72,128]{1,0:T(1,128)}', space=vmem, size = 0x9000, scoped, tag = 'internal scratch']
  %s0 = inlined_call_operand.vmem [shape: f32[2,8,64], index: 0, kind: input, shape index: {}]
  %s1 = inlined_call_operand.vmem [shape: f32[2,8,1], index: 1, kind: input, shape index: {}]
  %s2 = inlined_call_operand.hbm [shape: f32[2,64,64], index: 2, kind: input, shape index: {}]
  %s3 = inlined_call_operand.vmem [shape: f32[3,64,64], index: 3, kind: input, shape index: {}]
  %s4 = inlined_call_operand.hbm [shape: f32[3,1,64], index: 4, kind: input, shape index: {}]
  %s5 = inlined_call_operand.vmem [shape: f32[3,64,64], index: 5, kind: input, shape index: {}]
  %s6 = inlined_call_operand.hbm [shape: f32[3,1,64], index: 6, kind: input, shape index: {}]
  %s7 = inlined_call_operand.vmem [shape: f32[3,64,64], index: 7, kind: input, shape index: {}]
  %s8 = inlined_call_operand.hbm [shape: f32[3,1,64], index: 8, kind: input, shape index: {}]
  %s9 = inlined_call_operand.vmem [shape: f32[3,64,64], index: 9, kind: input, shape index: {}]
  %s10 = inlined_call_operand.hbm [shape: f32[3,1,64], index: 10, kind: input, shape index: {}]
  %s11 = inlined_call_operand.vmem [shape: f32[3,64,256], index: 11, kind: input, shape index: {}]
  %s12 = inlined_call_operand.hbm [shape: f32[3,1,256], index: 12, kind: input, shape index: {}]
  %s13 = inlined_call_operand.vmem [shape: f32[3,256,64], index: 13, kind: input, shape index: {}]
  %s14 = inlined_call_operand.vmem [shape: f32[3,1,64], index: 14, kind: input, shape index: {}]
  %s15 = inlined_call_operand.vmem [shape: f32[12], index: 15, kind: input, shape index: {}]
  %s16 = inlined_call_operand.hbm [shape: f32[2,8,64], index: 16, kind: output, shape index: {}]
  %s17 = sld [smem:[#allocation0]]
  $region125: #{tpu_custom_call.1} parent=0
    _
  %s19 = ssub.s32 1, %s17
  %s20 = scalar_select 0, %s19, %s17
  $region1: #{tpu_custom_call.1} parent=0
    #allocation2 [shape = 'u8[65536]{0}', space=vmem, size = 0x10000, scoped, tag = 'input window, operand 2']
    #allocation3 [shape = 's32[2]{0}', space=sflag, size = 0x8, scoped, tag = 'scoped memory for tpu_custom_call.1']
    #allocation4 [shape = 's32[2]{0}', space=sflag, size = 0x8, scoped, tag = 'scoped memory for tpu_custom_call.1']
    #allocation5 [shape = 's32[2]{0}', space=sflag, size = 0x8, scoped, tag = 'scoped memory for tpu_custom_call.1']
    #allocation6 [shape = 'u8[1536]{0}', space=vmem, size = 0x800, scoped, tag = 'input window, operand 4, single buffered']
    #allocation7 [shape = 's32[1]{0}', space=sflag, size = 0x4, scoped, tag = 'scoped memory for tpu_custom_call.1']
    #allocation8 [shape = 'u8[1536]{0}', space=vmem, size = 0x800, scoped, tag = 'input window, operand 6, single buffered']
    #allocation9 [shape = 'u8[1536]{0}', space=vmem, size = 0x800, scoped, tag = 'input window, operand 8, single buffered']
    #allocation10 [shape = 's32[1]{0}', space=sflag, size = 0x4, scoped, tag = 'scoped memory for tpu_custom_call.1']
    #allocation11 [shape = 'u8[1536]{0}', space=vmem, size = 0x800, scoped, tag = 'input window, operand 10, single buffered']
    #allocation12 [shape = 'u8[3072]{0}', space=vmem, size = 0xc00, scoped, tag = 'input window, operand 12, single buffered']
    #allocation13 [shape = 's32[1]{0}', space=sflag, size = 0x4, scoped, tag = 'scoped memory for tpu_custom_call.1']
    #allocation14 [shape = 'u8[512]{0}', space=smem, size = 0x200, scoped, tag = 'input window, operand 15, single buffered']
    #allocation15 [shape = 'u8[8192]{0}', space=vmem, size = 0x2000, scoped, tag = 'output window, operand 0']
    %21 = vsyncpa [#allocation3], 0
    %s22 = scalar_lea.sflag [#allocation3], 1
    %23 = vsyncpa %s22, 0
    %24 = vsyncpa [#allocation7], 0
    %25 = vsyncpa [#allocation10], 0
    %26 = vsyncpa [#allocation13], 0
    %27 = vsyncpa [#allocation5], 0
    %28 = vsyncpa [#allocation4], 0
    %s29 = scalar_lea.sflag [#allocation4], 1
    %30 = vsyncpa %s29, 0
    loop: start=0, step=1, limit=4
    $region2: #{tpu_custom_call.1} parent=1 // loop_pre_header
      _
    $region3: #{tpu_custom_call.1} parent=1 // loop_header
      %s32 = sphi 0, %s36
      %p33 = scmp.ge.s32.totalorder %s32, 4
      %s42 = sphi 0, %s44
      %s45 = sphi 0, %s42
      %s46 = sphi 0, %s45
      %s62 = sphi 0, %s46
      %s68 = sphi 0, %s70
      %s71 = sphi 0, %s68
      %s72 = sphi 0, %s71
      %s88 = sphi 0, %s72
      %s94 = sphi 0, %s96
      %s97 = sphi 0, %s94
      %s98 = sphi 0, %s97
      %s114 = sphi 0, %s98
      %s118 = sphi 0, %s118
      %s120 = sphi 0, %s118
      %s121 = sphi 0, %s120
      %s135 = sphi 0, %s121
      %s139 = sphi 0, %s139
      %s141 = sphi 0, %s139
      %s142 = sphi 0, %s141
      %s156 = sphi 0, %s142
      %s160 = sphi 0, %s160
      %s162 = sphi 0, %s160
      %s163 = sphi 0, %s162
      %s177 = sphi 0, %s163
      %s181 = sphi 0, %s181
      %s183 = sphi 0, %s181
      %s184 = sphi 0, %s183
      %s198 = sphi 0, %s184
      %s202 = sphi 0, %s202
      %s204 = sphi 0, %s202
      %s205 = sphi 0, %s204
      %s219 = sphi 0, %s205
      %s223 = sphi 0, %s223
      %s225 = sphi 0, %s223
      %s226 = sphi 0, %s225
      %s240 = sphi 0, %s226
      %s244 = sphi 0, %s244
      %s246 = sphi 0, %s244
      %s247 = sphi 0, %s246
      %s261 = sphi 0, %s247
      %s265 = sphi 0, %s265
      %s267 = sphi 0, %s265
      %s268 = sphi 0, %s267
      %s282 = sphi 0, %s268
      %s286 = sphi 0, %s286
      %s288 = sphi 0, %s286
      %s289 = sphi 0, %s288
      %s303 = sphi 0, %s289
      %s307 = sphi 0, %s307
      %s309 = sphi 0, %s307
      %s310 = sphi 0, %s309
      %s324 = sphi 0, %s310
      %s328 = sphi 0, %s328
      %s330 = sphi 0, %s328
      %s331 = sphi 0, %s330
      %s345 = sphi 0, %s331
      %s349 = sphi 0, %s349
      %s351 = sphi 0, %s349
      %s352 = sphi 0, %s351
      %s366 = sphi 0, %s352
      %s370 = sphi 0, %s370
      %s372 = sphi 0, %s370
      %s373 = sphi 0, %s372
      %s387 = sphi 0, %s373
      %s393 = sphi 0, %s395
      %s396 = sphi 0, %s393
      %s397 = sphi 0, %s396
      %s413 = sphi 0, %s397
    $region4: #{tpu_custom_call.1} parent=1 // loop_header_branch
      %35 = sbr.rel (%p33) target = $region8
    $region5: #{tpu_custom_call.1} parent=1 // loop_body
      %s37 = ssub.s32 %s32, 1
      %s38 = ssub.s32 %s32, 2
      %s39 = sadd.s32 %s32, 1
      %s40 = ssub.s32 %s32, %s39
      %p41 = scmp.eq.s32.totalorder %s40, 0
      %s43 = sadd.s32 %s42, 1
      %s44 = scalar_select %p41, %s42, %s43
      %p47 = pneg %p41
      %p48 = scmp.eq.s32.totalorder %s32, 1
      %p49 = por %p47, %p48
      %p50 = scmp.ne.s32.totalorder %s42, %s45
      %p51 = scmp.eq.s32.totalorder %s32, 0
      %p52 = por %p50, %p51
      %p53 = scmp.ne.s32.totalorder %s42, %s45
      %p54 = scmp.eq.s32.totalorder %s37, 1
      %p55 = por %p53, %p54
      %p56 = scmp.ne.s32.totalorder %s45, %s46
      %p57 = scmp.eq.s32.totalorder %s37, 0
      %p58 = por %p56, %p57
      %p59 = scmp.ne.s32.totalorder %s45, %s46
      %p60 = scmp.eq.s32.totalorder %s38, 1
      %p61 = por %p59, %p60
      %p63 = scmp.ne.s32.totalorder %s46, %s62
      %p64 = scmp.eq.s32.totalorder %s38, 0
      %p65 = por %p63, %p64
      %s66 = ssub.s32 %s32, %s39
      %p67 = scmp.eq.s32.totalorder %s66, 0
      %s69 = sadd.s32 %s68, 1
      %s70 = scalar_select %p67, %s68, %s69
      %p73 = pneg %p67
      %p74 = scmp.eq.s32.totalorder %s32, 1
      %p75 = por %p73, %p74
      %p76 = scmp.ne.s32.totalorder %s68, %s71
      %p77 = scmp.eq.s32.totalorder %s32, 0
      %p78 = por %p76, %p77
      %p79 = scmp.ne.s32.totalorder %s68, %s71
      %p80 = scmp.eq.s32.totalorder %s37, 1
      %p81 = por %p79, %p80
      %p82 = scmp.ne.s32.totalorder %s71, %s72
      %p83 = scmp.eq.s32.totalorder %s37, 0
      %p84 = por %p82, %p83
      %p85 = scmp.ne.s32.totalorder %s71, %s72
      %p86 = scmp.eq.s32.totalorder %s38, 1
      %p87 = por %p85, %p86
      %p89 = scmp.ne.s32.totalorder %s72, %s88
      %p90 = scmp.eq.s32.totalorder %s38, 0
      %p91 = por %p89, %p90
      %s92 = ssub.s32 %s32, %s39
      %p93 = scmp.eq.s32.totalorder %s92, 0
      %s95 = sadd.s32 %s94, 1
      %s96 = scalar_select %p93, %s94, %s95
      %p99 = pneg %p93
      %p100 = scmp.eq.s32.totalorder %s32, 1
      %p101 = por %p99, %p100
      %p102 = scmp.ne.s32.totalorder %s94, %s97
      %p103 = scmp.eq.s32.totalorder %s32, 0
      %p104 = por %p102, %p103
      %p105 = scmp.ne.s32.totalorder %s94, %s97
      %p106 = scmp.eq.s32.totalorder %s37, 1
      %p107 = por %p105, %p106
      %p108 = scmp.ne.s32.totalorder %s97, %s98
      %p109 = scmp.eq.s32.totalorder %s37, 0
      %p110 = por %p108, %p109
      %p111 = scmp.ne.s32.totalorder %s97, %s98
      %p112 = scmp.eq.s32.totalorder %s38, 1
      %p113 = por %p111, %p112
      %p115 = scmp.ne.s32.totalorder %s98, %s114
      %p116 = scmp.eq.s32.totalorder %s38, 0
      %p117 = por %p115, %p116
      %s119 = sadd.s32 %s118, 1
      %p122 = scmp.eq.s32.totalorder %s32, 1
      %p123 = scmp.ne.s32.totalorder %s118, %s120
      %p124 = scmp.eq.s32.totalorder %s32, 0
      %p125 = por %p123, %p124
      %p126 = scmp.ne.s32.totalorder %s118, %s120
      %p127 = scmp.eq.s32.totalorder %s37, 1
      %p128 = por %p126, %p127
      %p129 = scmp.ne.s32.totalorder %s120, %s121
      %p130 = scmp.eq.s32.totalorder %s37, 0
      %p131 = por %p129, %p130
      %p132 = scmp.ne.s32.totalorder %s120, %s121
      %p133 = scmp.eq.s32.totalorder %s38, 1
      %p134 = por %p132, %p133
      %p136 = scmp.ne.s32.totalorder %s121, %s135
      %p137 = scmp.eq.s32.totalorder %s38, 0
      %p138 = por %p136, %p137
      %s140 = sadd.s32 %s139, 1
      %p143 = scmp.eq.s32.totalorder %s32, 1
      %p144 = scmp.ne.s32.totalorder %s139, %s141
      %p145 = scmp.eq.s32.totalorder %s32, 0
      %p146 = por %p144, %p145
      %p147 = scmp.ne.s32.totalorder %s139, %s141
      %p148 = scmp.eq.s32.totalorder %s37, 1
      %p149 = por %p147, %p148
      %p150 = scmp.ne.s32.totalorder %s141, %s142
      %p151 = scmp.eq.s32.totalorder %s37, 0
      %p152 = por %p150, %p151
      %p153 = scmp.ne.s32.totalorder %s141, %s142
      %p154 = scmp.eq.s32.totalorder %s38, 1
      %p155 = por %p153, %p154
      %p157 = scmp.ne.s32.totalorder %s142, %s156
      %p158 = scmp.eq.s32.totalorder %s38, 0
      %p159 = por %p157, %p158
      %s161 = sadd.s32 %s160, 1
      %p164 = scmp.eq.s32.totalorder %s32, 1
      %p165 = scmp.ne.s32.totalorder %s160, %s162
      %p166 = scmp.eq.s32.totalorder %s32, 0
      %p167 = por %p165, %p166
      %p168 = scmp.ne.s32.totalorder %s160, %s162
      %p169 = scmp.eq.s32.totalorder %s37, 1
      %p170 = por %p168, %p169
      %p171 = scmp.ne.s32.totalorder %s162, %s163
      %p172 = scmp.eq.s32.totalorder %s37, 0
      %p173 = por %p171, %p172
      %p174 = scmp.ne.s32.totalorder %s162, %s163
      %p175 = scmp.eq.s32.totalorder %s38, 1
      %p176 = por %p174, %p175
      %p178 = scmp.ne.s32.totalorder %s163, %s177
      %p179 = scmp.eq.s32.totalorder %s38, 0
      %p180 = por %p178, %p179
      %s182 = sadd.s32 %s181, 1
      %p185 = scmp.eq.s32.totalorder %s32, 1
      %p186 = scmp.ne.s32.totalorder %s181, %s183
      %p187 = scmp.eq.s32.totalorder %s32, 0
      %p188 = por %p186, %p187
      %p189 = scmp.ne.s32.totalorder %s181, %s183
      %p190 = scmp.eq.s32.totalorder %s37, 1
      %p191 = por %p189, %p190
      %p192 = scmp.ne.s32.totalorder %s183, %s184
      %p193 = scmp.eq.s32.totalorder %s37, 0
      %p194 = por %p192, %p193
      %p195 = scmp.ne.s32.totalorder %s183, %s184
      %p196 = scmp.eq.s32.totalorder %s38, 1
      %p197 = por %p195, %p196
      %p199 = scmp.ne.s32.totalorder %s184, %s198
      %p200 = scmp.eq.s32.totalorder %s38, 0
      %p201 = por %p199, %p200
      %s203 = sadd.s32 %s202, 1
      %p206 = scmp.eq.s32.totalorder %s32, 1
      %p207 = scmp.ne.s32.totalorder %s202, %s204
      %p208 = scmp.eq.s32.totalorder %s32, 0
      %p209 = por %p207, %p208
      %p210 = scmp.ne.s32.totalorder %s202, %s204
      %p211 = scmp.eq.s32.totalorder %s37, 1
      %p212 = por %p210, %p211
      %p213 = scmp.ne.s32.totalorder %s204, %s205
      %p214 = scmp.eq.s32.totalorder %s37, 0
      %p215 = por %p213, %p214
      %p216 = scmp.ne.s32.totalorder %s204, %s205
      %p217 = scmp.eq.s32.totalorder %s38, 1
      %p218 = por %p216, %p217
      %p220 = scmp.ne.s32.totalorder %s205, %s219
      %p221 = scmp.eq.s32.totalorder %s38, 0
      %p222 = por %p220, %p221
      %s224 = sadd.s32 %s223, 1
      %p227 = scmp.eq.s32.totalorder %s32, 1
      %p228 = scmp.ne.s32.totalorder %s223, %s225
      %p229 = scmp.eq.s32.totalorder %s32, 0
      %p230 = por %p228, %p229
      %p231 = scmp.ne.s32.totalorder %s223, %s225
      %p232 = scmp.eq.s32.totalorder %s37, 1
      %p233 = por %p231, %p232
      %p234 = scmp.ne.s32.totalorder %s225, %s226
      %p235 = scmp.eq.s32.totalorder %s37, 0
      %p236 = por %p234, %p235
      %p237 = scmp.ne.s32.totalorder %s225, %s226
      %p238 = scmp.eq.s32.totalorder %s38, 1
      %p239 = por %p237, %p238
      %p241 = scmp.ne.s32.totalorder %s226, %s240
      %p242 = scmp.eq.s32.totalorder %s38, 0
      %p243 = por %p241, %p242
      %s245 = sadd.s32 %s244, 1
      %p248 = scmp.eq.s32.totalorder %s32, 1
      %p249 = scmp.ne.s32.totalorder %s244, %s246
      %p250 = scmp.eq.s32.totalorder %s32, 0
      %p251 = por %p249, %p250
      %p252 = scmp.ne.s32.totalorder %s244, %s246
      %p253 = scmp.eq.s32.totalorder %s37, 1
      %p254 = por %p252, %p253
      %p255 = scmp.ne.s32.totalorder %s246, %s247
      %p256 = scmp.eq.s32.totalorder %s37, 0
      %p257 = por %p255, %p256
      %p258 = scmp.ne.s32.totalorder %s246, %s247
      %p259 = scmp.eq.s32.totalorder %s38, 1
      %p260 = por %p258, %p259
      %p262 = scmp.ne.s32.totalorder %s247, %s261
      %p263 = scmp.eq.s32.totalorder %s38, 0
      %p264 = por %p262, %p263
      %s266 = sadd.s32 %s265, 1
      %p269 = scmp.eq.s32.totalorder %s32, 1
      %p270 = scmp.ne.s32.totalorder %s265, %s267
      %p271 = scmp.eq.s32.totalorder %s32, 0
      %p272 = por %p270, %p271
      %p273 = scmp.ne.s32.totalorder %s265, %s267
      %p274 = scmp.eq.s32.totalorder %s37, 1
      %p275 = por %p273, %p274
      %p276 = scmp.ne.s32.totalorder %s267, %s268
      %p277 = scmp.eq.s32.totalorder %s37, 0
      %p278 = por %p276, %p277
      %p279 = scmp.ne.s32.totalorder %s267, %s268
      %p280 = scmp.eq.s32.totalorder %s38, 1
      %p281 = por %p279, %p280
      %p283 = scmp.ne.s32.totalorder %s268, %s282
      %p284 = scmp.eq.s32.totalorder %s38, 0
      %p285 = por %p283, %p284
      %s287 = sadd.s32 %s286, 1
      %p290 = scmp.eq.s32.totalorder %s32, 1
      %p291 = scmp.ne.s32.totalorder %s286, %s288
      %p292 = scmp.eq.s32.totalorder %s32, 0
      %p293 = por %p291, %p292
      %p294 = scmp.ne.s32.totalorder %s286, %s288
      %p295 = scmp.eq.s32.totalorder %s37, 1
      %p296 = por %p294, %p295
      %p297 = scmp.ne.s32.totalorder %s288, %s289
      %p298 = scmp.eq.s32.totalorder %s37, 0
      %p299 = por %p297, %p298
      %p300 = scmp.ne.s32.totalorder %s288, %s289
      %p301 = scmp.eq.s32.totalorder %s38, 1
      %p302 = por %p300, %p301
      %p304 = scmp.ne.s32.totalorder %s289, %s303
      %p305 = scmp.eq.s32.totalorder %s38, 0
      %p306 = por %p304, %p305
      %s308 = sadd.s32 %s307, 1
      %p311 = scmp.eq.s32.totalorder %s32, 1
      %p312 = scmp.ne.s32.totalorder %s307, %s309
      %p313 = scmp.eq.s32.totalorder %s32, 0
      %p314 = por %p312, %p313
      %p315 = scmp.ne.s32.totalorder %s307, %s309
      %p316 = scmp.eq.s32.totalorder %s37, 1
      %p317 = por %p315, %p316
      %p318 = scmp.ne.s32.totalorder %s309, %s310
      %p319 = scmp.eq.s32.totalorder %s37, 0
      %p320 = por %p318, %p319
      %p321 = scmp.ne.s32.totalorder %s309, %s310
      %p322 = scmp.eq.s32.totalorder %s38, 1
      %p323 = por %p321, %p322
      %p325 = scmp.ne.s32.totalorder %s310, %s324
      %p326 = scmp.eq.s32.totalorder %s38, 0
      %p327 = por %p325, %p326
      %s329 = sadd.s32 %s328, 1
      %p332 = scmp.eq.s32.totalorder %s32, 1
      %p333 = scmp.ne.s32.totalorder %s328, %s330
      %p334 = scmp.eq.s32.totalorder %s32, 0
      %p335 = por %p333, %p334
      %p336 = scmp.ne.s32.totalorder %s328, %s330
      %p337 = scmp.eq.s32.totalorder %s37, 1
      %p338 = por %p336, %p337
      %p339 = scmp.ne.s32.totalorder %s330, %s331
      %p340 = scmp.eq.s32.totalorder %s37, 0
      %p341 = por %p339, %p340
      %p342 = scmp.ne.s32.totalorder %s330, %s331
      %p343 = scmp.eq.s32.totalorder %s38, 1
      %p344 = por %p342, %p343
      %p346 = scmp.ne.s32.totalorder %s331, %s345
      %p347 = scmp.eq.s32.totalorder %s38, 0
      %p348 = por %p346, %p347
      %s350 = sadd.s32 %s349, 1
      %p353 = scmp.eq.s32.totalorder %s32, 1
      %p354 = scmp.ne.s32.totalorder %s349, %s351
      %p355 = scmp.eq.s32.totalorder %s32, 0
      %p356 = por %p354, %p355
      %p357 = scmp.ne.s32.totalorder %s349, %s351
      %p358 = scmp.eq.s32.totalorder %s37, 1
      %p359 = por %p357, %p358
      %p360 = scmp.ne.s32.totalorder %s351, %s352
      %p361 = scmp.eq.s32.totalorder %s37, 0
      %p362 = por %p360, %p361
      %p363 = scmp.ne.s32.totalorder %s351, %s352
      %p364 = scmp.eq.s32.totalorder %s38, 1
      %p365 = por %p363, %p364
      %p367 = scmp.ne.s32.totalorder %s352, %s366
      %p368 = scmp.eq.s32.totalorder %s38, 0
      %p369 = por %p367, %p368
      %s371 = sadd.s32 %s370, 1
      %p374 = scmp.eq.s32.totalorder %s32, 1
      %p375 = scmp.ne.s32.totalorder %s370, %s372
      %p376 = scmp.eq.s32.totalorder %s32, 0
      %p377 = por %p375, %p376
      %p378 = scmp.ne.s32.totalorder %s370, %s372
      %p379 = scmp.eq.s32.totalorder %s37, 1
      %p380 = por %p378, %p379
      %p381 = scmp.ne.s32.totalorder %s372, %s373
      %p382 = scmp.eq.s32.totalorder %s37, 0
      %p383 = por %p381, %p382
      %p384 = scmp.ne.s32.totalorder %s372, %s373
      %p385 = scmp.eq.s32.totalorder %s38, 1
      %p386 = por %p384, %p385
      %p388 = scmp.ne.s32.totalorder %s373, %s387
      %p389 = scmp.eq.s32.totalorder %s38, 0
      %p390 = por %p388, %p389
      %s391 = ssub.s32 %s32, %s39
      %p392 = scmp.eq.s32.totalorder %s391, 0
      %s394 = sadd.s32 %s393, 1
      %s395 = scalar_select %p392, %s393, %s394
      %p398 = pneg %p392
      %p399 = scmp.eq.s32.totalorder %s32, 1
      %p400 = por %p398, %p399
      %p401 = scmp.ne.s32.totalorder %s393, %s396
      %p402 = scmp.eq.s32.totalorder %s32, 0
      %p403 = por %p401, %p402
      %p404 = scmp.ne.s32.totalorder %s393, %s396
      %p405 = scmp.eq.s32.totalorder %s37, 1
      %p406 = por %p404, %p405
      %p407 = scmp.ne.s32.totalorder %s396, %s397
      %p408 = scmp.eq.s32.totalorder %s37, 0
      %p409 = por %p407, %p408
      %p410 = scmp.ne.s32.totalorder %s396, %s397
      %p411 = scmp.eq.s32.totalorder %s38, 1
      %p412 = por %p410, %p411
      %p414 = scmp.ne.s32.totalorder %s397, %s413
      %p415 = scmp.eq.s32.totalorder %s38, 0
      %p416 = por %p414, %p415
      %p417 = scmp.le.s32.totalorder 1, %s32
      %p418 = scmp.lt.s32.totalorder %s32, 3
      %p419 = pnand %p417, %p418
      %p420 = pneg %p419
      // Predicated region
      $region9: #{tpu_custom_call.1} parent=5 // pred_check
        _
      $region10: #{tpu_custom_call.1} parent=5 // pred_check_branch
        %422 = sbr.rel (%p419) target = $region12
      $region11: #{tpu_custom_call.1} parent=5 // pred_region
        %s423 = ssub.s32 %s32, 1
        // Predicated region
        $region13: #{tpu_custom_call.1} parent=11 // pred_check
          %p424 = pneg %p131
        $region14: #{tpu_custom_call.1} parent=11 // pred_check_branch
          %426 = sbr.rel (%p424) target = $region16
        $region15: #{tpu_custom_call.1} parent=11 // pred_region
          _
        $region16: #{tpu_custom_call.1} parent=11 // pred_fallthru
          _
        // Predicated region
        $region17: #{tpu_custom_call.1} parent=11 // pred_check
          %p427 = pneg %p152
        $region18: #{tpu_custom_call.1} parent=11 // pred_check_branch
          %429 = sbr.rel (%p427) target = $region20
        $region19: #{tpu_custom_call.1} parent=11 // pred_region
          %431 = vsyncadd [#allocation7], 0
          %s432 = sshll.u32 %s4, 4
          %s433 = int_to_ptr.hbm [resolvable:$true] %s432
          %s434 = sshll.u32 [#allocation6], 4
          %s435 = int_to_ptr.vmem [resolvable:$true] %s434
          %440 = dma.hbm_to_vmem [thread:$0]  %s433, 48, %s435, [#allocation7], 16, 16, 1
        $region20: #{tpu_custom_call.1} parent=11 // pred_fallthru
          _
        // Predicated region
        $region21: #{tpu_custom_call.1} parent=11 // pred_check
          %p441 = pneg %p173
        $region22: #{tpu_custom_call.1} parent=11 // pred_check_branch
          %443 = sbr.rel (%p441) target = $region24
        $region23: #{tpu_custom_call.1} parent=11 // pred_region
          _
        $region24: #{tpu_custom_call.1} parent=11 // pred_fallthru
          _
        // Predicated region
        $region25: #{tpu_custom_call.1} parent=11 // pred_check
          %p444 = pneg %p194
        $region26: #{tpu_custom_call.1} parent=11 // pred_check_branch
          %446 = sbr.rel (%p444) target = $region28
        $region27: #{tpu_custom_call.1} parent=11 // pred_region
          %448 = vsyncadd [#allocation7], 0
          %s449 = sshll.u32 %s6, 4
          %s450 = int_to_ptr.hbm [resolvable:$true] %s449
          %s451 = sshll.u32 [#allocation8], 4
          %s452 = int_to_ptr.vmem [resolvable:$true] %s451
          %457 = dma.hbm_to_vmem [thread:$0]  %s450, 48, %s452, [#allocation7], 16, 16, 1
        $region28: #{tpu_custom_call.1} parent=11 // pred_fallthru
          _
        // Predicated region
        $region29: #{tpu_custom_call.1} parent=11 // pred_check
          %p458 = pneg %p215
        $region30: #{tpu_custom_call.1} parent=11 // pred_check_branch
          %460 = sbr.rel (%p458) target = $region32
        $region31: #{tpu_custom_call.1} parent=11 // pred_region
          _
        $region32: #{tpu_custom_call.1} parent=11 // pred_fallthru
          _
        // Predicated region
        $region33: #{tpu_custom_call.1} parent=11 // pred_check
          %p461 = pneg %p236
        $region34: #{tpu_custom_call.1} parent=11 // pred_check_branch
          %463 = sbr.rel (%p461) target = $region36
        $region35: #{tpu_custom_call.1} parent=11 // pred_region
          %465 = vsyncadd [#allocation10], 0
          %s466 = sshll.u32 %s8, 4
          %s467 = int_to_ptr.hbm [resolvable:$true] %s466
          %s468 = sshll.u32 [#allocation9], 4
          %s469 = int_to_ptr.vmem [resolvable:$true] %s468
          %474 = dma.hbm_to_vmem [thread:$0]  %s467, 48, %s469, [#allocation10], 16, 16, 1
        $region36: #{tpu_custom_call.1} parent=11 // pred_fallthru
          _
        // Predicated region
        $region37: #{tpu_custom_call.1} parent=11 // pred_check
          %p475 = pneg %p257
        $region38: #{tpu_custom_call.1} parent=11 // pred_check_branch
          %477 = sbr.rel (%p475) target = $region40
        $region39: #{tpu_custom_call.1} parent=11 // pred_region
          _
        $region40: #{tpu_custom_call.1} parent=11 // pred_fallthru
          _
        // Predicated region
        $region41: #{tpu_custom_call.1} parent=11 // pred_check
          %p478 = pneg %p278
        $region42: #{tpu_custom_call.1} parent=11 // pred_check_branch
          %480 = sbr.rel (%p478) target = $region44
        $region43: #{tpu_custom_call.1} parent=11 // pred_region
          %482 = vsyncadd [#allocation10], 0
          %s483 = sshll.u32 %s10, 4
          %s484 = int_to_ptr.hbm [resolvable:$true] %s483
          %s485 = sshll.u32 [#allocation11], 4
          %s486 = int_to_ptr.vmem [resolvable:$true] %s485
          %491 = dma.hbm_to_vmem [thread:$0]  %s484, 48, %s486, [#allocation10], 16, 16, 1
        $region44: #{tpu_custom_call.1} parent=11 // pred_fallthru
          _
        // Predicated region
        $region45: #{tpu_custom_call.1} parent=11 // pred_check
          %p492 = pneg %p299
        $region46: #{tpu_custom_call.1} parent=11 // pred_check_branch
          %494 = sbr.rel (%p492) target = $region48
        $region47: #{tpu_custom_call.1} parent=11 // pred_region
          _
        $region48: #{tpu_custom_call.1} parent=11 // pred_fallthru
          _
        // Predicated region
        $region49: #{tpu_custom_call.1} parent=11 // pred_check
          %p495 = pneg %p320
        $region50: #{tpu_custom_call.1} parent=11 // pred_check_branch
          %497 = sbr.rel (%p495) target = $region52
        $region51: #{tpu_custom_call.1} parent=11 // pred_region
          %499 = vsyncadd [#allocation13], 0
          %s500 = sshll.u32 %s12, 4
          %s501 = int_to_ptr.hbm [resolvable:$true] %s500
          %s502 = sshll.u32 [#allocation12], 4
          %s503 = int_to_ptr.vmem [resolvable:$true] %s502
          %508 = dma.hbm_to_vmem [thread:$0]  %s501, 96, %s503, [#allocation13], 32, 32, 2
        $region52: #{tpu_custom_call.1} parent=11 // pred_fallthru
          _
        // Predicated region
        $region53: #{tpu_custom_call.1} parent=11 // pred_check
          %p509 = pneg %p341
        $region54: #{tpu_custom_call.1} parent=11 // pred_check_branch
          %511 = sbr.rel (%p509) target = $region56
        $region55: #{tpu_custom_call.1} parent=11 // pred_region
          _
        $region56: #{tpu_custom_call.1} parent=11 // pred_fallthru
          _
        // Predicated region
        $region57: #{tpu_custom_call.1} parent=11 // pred_check
          %p512 = pneg %p362
        $region58: #{tpu_custom_call.1} parent=11 // pred_check_branch
          %514 = sbr.rel (%p512) target = $region60
        $region59: #{tpu_custom_call.1} parent=11 // pred_region
          _
        $region60: #{tpu_custom_call.1} parent=11 // pred_fallthru
          _
        // Predicated region
        $region61: #{tpu_custom_call.1} parent=11 // pred_check
          %p515 = pneg %p383
        $region62: #{tpu_custom_call.1} parent=11 // pred_check_branch
          %517 = sbr.rel (%p515) target = $region64
        $region63: #{tpu_custom_call.1} parent=11 // pred_region
          %519 = vsyncadd [#allocation5], 0
          %s521 = sshll.u32 %s15, 4
          %s522 = int_to_ptr.vmem [resolvable:$true] %s521
          %524 = dma.vmem_to_smem %s522, 16, [#allocation14], [#allocation5]
        $region64: #{tpu_custom_call.1} parent=11 // pred_fallthru
          _
      $region12: #{tpu_custom_call.1} parent=5 // pred_fallthru
        _
      %p525 = scmp.lt.s32.totalorder %s32, 2
      // Predicated region
      $region65: #{tpu_custom_call.1} parent=5 // pred_check
        %p526 = pneg %p525
      $region66: #{tpu_custom_call.1} parent=5 // pred_check_branch
        %528 = sbr.rel (%p526) target = $region68
      $region67: #{tpu_custom_call.1} parent=5 // pred_region
        // Predicated region
        $region69: #{tpu_custom_call.1} parent=67 // pred_check
          %p529 = pneg %p52
        $region70: #{tpu_custom_call.1} parent=67 // pred_check_branch
          %531 = sbr.rel (%p529) target = $region72
        $region71: #{tpu_custom_call.1} parent=67 // pred_region
          %p532 = scmp.lt.s32.totalorder %s32, 1
          %s533 = scalar_select %p532, %s32, 1
          %s534 = smul.addr %s533, 8
          %s535 = scalar_lea.vmem %s0, %s534
        $region72: #{tpu_custom_call.1} parent=67 // pred_fallthru
          _
        // Predicated region
        $region73: #{tpu_custom_call.1} parent=67 // pred_check
          %p536 = pneg %p78
        $region74: #{tpu_custom_call.1} parent=67 // pred_check_branch
          %538 = sbr.rel (%p536) target = $region76
        $region75: #{tpu_custom_call.1} parent=67 // pred_region
          %p539 = scmp.lt.s32.totalorder %s32, 1
          %s540 = scalar_select %p539, %s32, 1
          %s541 = smul.addr %s540, 8
          %s542 = scalar_lea.vmem %s1, %s541
        $region76: #{tpu_custom_call.1} parent=67 // pred_fallthru
          _
        // Predicated region
        $region77: #{tpu_custom_call.1} parent=67 // pred_check
          %p543 = pneg %p104
        $region78: #{tpu_custom_call.1} parent=67 // pred_check_branch
          %545 = sbr.rel (%p543) target = $region80
        $region79: #{tpu_custom_call.1} parent=67 // pred_region
          %s546 = sand.u32 %s94, 1
          %s547 = scalar_lea.sflag [#allocation3], %s546
          %s548 = sand.u32 %s94, 1
          %s549 = smul.addr %s548, 64
          %s550 = scalar_lea.vmem [#allocation2], %s549
          %552 = vsyncadd %s547, 0
          %s553 = smul.addr %s32, 8
          %s554 = smul.addr %s553, 8
          %s555 = scalar_lea.hbm %s2, %s554
          %s556 = sshll.u32 %s555, 4
          %s557 = int_to_ptr.hbm [resolvable:$true] %s556
          %s558 = sshll.u32 %s550, 4
          %s559 = int_to_ptr.vmem [resolvable:$true] %s558
          %564 = dma.hbm_to_vmem [thread:$0]  %s557, 1024, %s559, %s547, 128, 128, 8
        $region80: #{tpu_custom_call.1} parent=67 // pred_fallthru
          _
      $region68: #{tpu_custom_call.1} parent=5 // pred_fallthru
        _
      %p565 = scmp.le.s32.totalorder 1, %s32
      %p566 = scmp.lt.s32.totalorder %s32, 3
      %p567 = pnand %p565, %p566
      %p568 = pneg %p567
      // Predicated region
      $region81: #{tpu_custom_call.1} parent=5 // pred_check
        _
      $region82: #{tpu_custom_call.1} parent=5 // pred_check_branch
        %570 = sbr.rel (%p567) target = $region84
      $region83: #{tpu_custom_call.1} parent=5 // pred_region
        %s571 = ssub.s32 %s32, 1
        %s572 = sand.u32 %s97, 1
        %s573 = scalar_lea.sflag [#allocation3], %s572
        %s574 = sand.u32 %s97, 1
        %s575 = smul.addr %s574, 64
        %s576 = scalar_lea.vmem [#allocation2], %s575
        // Predicated region
        $region85: #{tpu_custom_call.1} parent=83 // pred_check
          %p577 = pneg %p110
        $region86: #{tpu_custom_call.1} parent=83 // pred_check_branch
          %579 = sbr.rel (%p577) target = $region88
        $region87: #{tpu_custom_call.1} parent=83 // pred_region
          %581 = dma.done %s573, 1024
        $region88: #{tpu_custom_call.1} parent=83 // pred_fallthru
          _
        // Predicated region
        $region89: #{tpu_custom_call.1} parent=83 // pred_check
          %p582 = pneg %p152
        $region90: #{tpu_custom_call.1} parent=83 // pred_check_branch
          %584 = sbr.rel (%p582) target = $region92
        $region91: #{tpu_custom_call.1} parent=83 // pred_region
          %586 = dma.done [#allocation7], 48
        $region92: #{tpu_custom_call.1} parent=83 // pred_fallthru
          _
        // Predicated region
        $region93: #{tpu_custom_call.1} parent=83 // pred_check
          %p587 = pneg %p194
        $region94: #{tpu_custom_call.1} parent=83 // pred_check_branch
          %589 = sbr.rel (%p587) target = $region96
        $region95: #{tpu_custom_call.1} parent=83 // pred_region
          %591 = dma.done [#allocation7], 48
        $region96: #{tpu_custom_call.1} parent=83 // pred_fallthru
          _
        // Predicated region
        $region97: #{tpu_custom_call.1} parent=83 // pred_check
          %p592 = pneg %p236
        $region98: #{tpu_custom_call.1} parent=83 // pred_check_branch
          %594 = sbr.rel (%p592) target = $region100
        $region99: #{tpu_custom_call.1} parent=83 // pred_region
          %596 = dma.done [#allocation10], 48
        $region100: #{tpu_custom_call.1} parent=83 // pred_fallthru
          _
        // Predicated region
        $region101: #{tpu_custom_call.1} parent=83 // pred_check
          %p597 = pneg %p278
        $region102: #{tpu_custom_call.1} parent=83 // pred_check_branch
          %599 = sbr.rel (%p597) target = $region104
        $region103: #{tpu_custom_call.1} parent=83 // pred_region
          %601 = dma.done [#allocation10], 48
        $region104: #{tpu_custom_call.1} parent=83 // pred_fallthru
          _
        // Predicated region
        $region105: #{tpu_custom_call.1} parent=83 // pred_check
          %p602 = pneg %p320
        $region106: #{tpu_custom_call.1} parent=83 // pred_check_branch
          %604 = sbr.rel (%p602) target = $region108
        $region107: #{tpu_custom_call.1} parent=83 // pred_region
          %606 = dma.done [#allocation13], 96
        $region108: #{tpu_custom_call.1} parent=83 // pred_fallthru
          _
        // Predicated region
        $region109: #{tpu_custom_call.1} parent=83 // pred_check
          %p607 = pneg %p383
        $region110: #{tpu_custom_call.1} parent=83 // pred_check_branch
          %609 = sbr.rel (%p607) target = $region112
        $region111: #{tpu_custom_call.1} parent=83 // pred_region
          %611 = dma.done [#allocation5], 16
        $region112: #{tpu_custom_call.1} parent=83 // pred_fallthru
          _
        %612 = sfence
        %p613 = scmp.lt.s32.totalorder %s37, 1
        %s614 = scalar_select %p613, %s37, 1
        %s615 = smul.addr %s614, 8
        %s616 = scalar_lea.vmem %s0, %s615
        %p617 = pneg %p58
        %p618 = pneg %p55
        %p619 = scmp.lt.s32.totalorder %s37, 1
        %s620 = scalar_select %p619, %s37, 1
        %s621 = smul.addr %s620, 8
        %s622 = scalar_lea.vmem %s1, %s621
        %p623 = pneg %p84
        %p624 = pneg %p81
        %s625 = sand.u32 %s97, 1
        %s626 = scalar_lea.sflag [#allocation3], %s625
        %s627 = sand.u32 %s97, 1
        %s628 = smul.addr %s627, 64
        %s629 = scalar_lea.vmem [#allocation2], %s628
        %p630 = pneg %p110
        %p631 = pneg %p107
        %p632 = pneg %p131
        %p633 = pneg %p128
        %p634 = pneg %p152
        %p635 = pneg %p149
        %p636 = pneg %p173
        %p637 = pneg %p170
        %p638 = pneg %p194
        %p639 = pneg %p191
        %p640 = pneg %p215
        %p641 = pneg %p212
        %p642 = pneg %p236
        %p643 = pneg %p233
        %p644 = pneg %p257
        %p645 = pneg %p254
        %p646 = pneg %p278
        %p647 = pneg %p275
        %p648 = pneg %p299
        %p649 = pneg %p296
        %p650 = pneg %p320
        %p651 = pneg %p317
        %p652 = pneg %p341
        %p653 = pneg %p338
        %p654 = pneg %p362
        %p655 = pneg %p359
        %p656 = pneg %p383
        %p657 = pneg %p380
        %p658 = pneg %p409
        %p659 = pneg %p406
        %s660 = sand.u32 %s396, 1
        %s661 = scalar_lea.sflag [#allocation4], %s660
        %s662 = sand.u32 %s396, 1
        %s663 = smul.addr %s662, 8
        %s664 = scalar_lea.vmem [#allocation15], %s663
        %p665 = scmp.lt.s32.totalorder %s37, 1
        %s666 = scalar_select %p665, %s37, 1
        %s667 = smul.addr %s666, 8
        %s668 = scalar_lea.vmem %s0, %s667
        %p669 = scmp.lt.s32.totalorder %s37, 1
        %s670 = scalar_select %p669, %s37, 1
        %s671 = smul.addr %s670, 8
        %s672 = scalar_lea.vmem %s1, %s671
        %v673 = vld [vmem:[%s668] sm:$0xff]
        %v674 = vld [vmem:[%s672] sm:$0xff]
        %v675 = vld [vmem:[%s576] sm:$0xff]
        %v676 = vld [vmem:[%s576 + $0x8] sm:$0xff]
        %v677 = vld [vmem:[%s576 + $0x10] sm:$0xff]
        %v678 = vld [vmem:[%s576 + $0x18] sm:$0xff]
        %v679 = vld [vmem:[%s576 + $0x20] sm:$0xff]
        %v680 = vld [vmem:[%s576 + $0x28] sm:$0xff]
        %v681 = vld [vmem:[%s576 + $0x30] sm:$0xff]
        %v682 = vld [vmem:[%s576 + $0x38] sm:$0xff]
        %684 = vset.pattern.permute.xlu0 0
        %685 = vperm.xlu0 %684, %v674
        %v686 = vpop.permute.xlu0 %685
        %v688 = vld [vmem:[%s3] sm:$0xff]
        %v689 = vld [vmem:[%s3 + $0x8] sm:$0xff]
        %v690 = vld [vmem:[%s3 + $0x10] sm:$0xff]
        %v691 = vld [vmem:[%s3 + $0x18] sm:$0xff]
        %v692 = vld [vmem:[%s3 + $0x20] sm:$0xff]
        %v693 = vld [vmem:[%s3 + $0x28] sm:$0xff]
        %v694 = vld [vmem:[%s3 + $0x30] sm:$0xff]
        %v695 = vld [vmem:[%s3 + $0x38] sm:$0xff]
        %v696 = vld [vmem:[#allocation6] sm:$0x1]
        %v697 = vld [vmem:[%s5] sm:$0xff]
        %v698 = vld [vmem:[%s5 + $0x8] sm:$0xff]
        %v699 = vld [vmem:[%s5 + $0x10] sm:$0xff]
        %v700 = vld [vmem:[%s5 + $0x18] sm:$0xff]
        %v701 = vld [vmem:[%s5 + $0x20] sm:$0xff]
        %v702 = vld [vmem:[%s5 + $0x28] sm:$0xff]
        %v703 = vld [vmem:[%s5 + $0x30] sm:$0xff]
        %v704 = vld [vmem:[%s5 + $0x38] sm:$0xff]
        %v705 = vld [vmem:[#allocation8] sm:$0x1]
        %v706 = vld [vmem:[%s7] sm:$0xff]
        %v707 = vld [vmem:[%s7 + $0x8] sm:$0xff]
        %v708 = vld [vmem:[%s7 + $0x10] sm:$0xff]
        %v709 = vld [vmem:[%s7 + $0x18] sm:$0xff]
        %v710 = vld [vmem:[%s7 + $0x20] sm:$0xff]
        %v711 = vld [vmem:[%s7 + $0x28] sm:$0xff]
        %v712 = vld [vmem:[%s7 + $0x30] sm:$0xff]
        %v713 = vld [vmem:[%s7 + $0x38] sm:$0xff]
        %v714 = vld [vmem:[#allocation9] sm:$0x1]
        %v715 = vld [vmem:[%s9] sm:$0xff]
        %v716 = vld [vmem:[%s9 + $0x8] sm:$0xff]
        %v717 = vld [vmem:[%s9 + $0x10] sm:$0xff]
        %v718 = vld [vmem:[%s9 + $0x18] sm:$0xff]
        %v719 = vld [vmem:[%s9 + $0x20] sm:$0xff]
        %v720 = vld [vmem:[%s9 + $0x28] sm:$0xff]
        %v721 = vld [vmem:[%s9 + $0x30] sm:$0xff]
        %v722 = vld [vmem:[%s9 + $0x38] sm:$0xff]
        %v723 = vld [vmem:[#allocation11] sm:$0x1]
        %v724 = vld [vmem:[%s11] sm:$0xff]
        %v725 = vld [vmem:[%s11 + $0x8] sm:$0xff]
        %v726 = vld [vmem:[%s11 + $0x10] sm:$0xff]
        %v727 = vld [vmem:[%s11 + $0x18] sm:$0xff]
        %v728 = vld [vmem:[%s11 + $0x20] sm:$0xff]
        %v729 = vld [vmem:[%s11 + $0x28] sm:$0xff]
        %v730 = vld [vmem:[%s11 + $0x30] sm:$0xff]
        %v731 = vld [vmem:[%s11 + $0x38] sm:$0xff]
        %v732 = vld [vmem:[%s11 + $0x40] sm:$0xff]
        %v733 = vld [vmem:[%s11 + $0x48] sm:$0xff]
        %v734 = vld [vmem:[%s11 + $0x50] sm:$0xff]
        %v735 = vld [vmem:[%s11 + $0x58] sm:$0xff]
        %v736 = vld [vmem:[%s11 + $0x60] sm:$0xff]
        %v737 = vld [vmem:[%s11 + $0x68] sm:$0xff]
        %v738 = vld [vmem:[%s11 + $0x70] sm:$0xff]
        %v739 = vld [vmem:[%s11 + $0x78] sm:$0xff]
        %v740 = vld [vmem:[#allocation12] sm:$0x3]
        %v741 = vld [vmem:[%s13] sm:$0xff]
        %v742 = vld [vmem:[%s13 + $0x8] sm:$0xff]
        %v743 = vld [vmem:[%s13 + $0x10] sm:$0xff]
        %v744 = vld [vmem:[%s13 + $0x18] sm:$0xff]
        %v745 = vld [vmem:[%s13 + $0x20] sm:$0xff]
        %v746 = vld [vmem:[%s13 + $0x28] sm:$0xff]
        %v747 = vld [vmem:[%s13 + $0x30] sm:$0xff]
        %v748 = vld [vmem:[%s13 + $0x38] sm:$0xff]
        %v749 = vld [vmem:[%s13 + $0x40] sm:$0xff]
        %v750 = vld [vmem:[%s13 + $0x48] sm:$0xff]
        %v751 = vld [vmem:[%s13 + $0x50] sm:$0xff]
        %v752 = vld [vmem:[%s13 + $0x58] sm:$0xff]
        %v753 = vld [vmem:[%s13 + $0x60] sm:$0xff]
        %v754 = vld [vmem:[%s13 + $0x68] sm:$0xff]
        %v755 = vld [vmem:[%s13 + $0x70] sm:$0xff]
        %v756 = vld [vmem:[%s13 + $0x78] sm:$0xff]
        %v757 = vld [vmem:[%s13 + $0x80] sm:$0xff]
        %v758 = vld [vmem:[%s13 + $0x88] sm:$0xff]
        %v759 = vld [vmem:[%s13 + $0x90] sm:$0xff]
        %v760 = vld [vmem:[%s13 + $0x98] sm:$0xff]
        %v761 = vld [vmem:[%s13 + $0xa0] sm:$0xff]
        %v762 = vld [vmem:[%s13 + $0xa8] sm:$0xff]
        %v763 = vld [vmem:[%s13 + $0xb0] sm:$0xff]
        %v764 = vld [vmem:[%s13 + $0xb8] sm:$0xff]
        %v765 = vld [vmem:[%s13 + $0xc0] sm:$0xff]
        %v766 = vld [vmem:[%s13 + $0xc8] sm:$0xff]
        %v767 = vld [vmem:[%s13 + $0xd0] sm:$0xff]
        %v768 = vld [vmem:[%s13 + $0xd8] sm:$0xff]
        %v769 = vld [vmem:[%s13 + $0xe0] sm:$0xff]
        %v770 = vld [vmem:[%s13 + $0xe8] sm:$0xff]
        %v771 = vld [vmem:[%s13 + $0xf0] sm:$0xff]
        %v772 = vld [vmem:[%s13 + $0xf8] sm:$0xff]
        %v773 = vld [vmem:[%s14] sm:$0x1]
        %v775 = vperm.slane %v696, 0
        %vm777 = vcmask 523264
        %v779 = vsel %vm777, %v673, 0
        %781 = vmatpush.msra.mxu0 0.0
        %782 = vmatpush.msra.mxu0 0.0
        %783 = vmatpush.msra.mxu0 0.0
        %784 = vmatpush.msra.mxu0 0.0
        %785 = vmatpush.msra.mxu0 0.0
        %786 = vmatpush.msra.mxu0 0.0
        %787 = vmatpush.msra.mxu0 0.0
        %788 = vmatpush.msra.mxu0 0.0
        %789 = vmatpush.msra.mxu0 %v695
        %790 = vmatpush.msra.mxu0 %v694
        %791 = vmatpush.msra.mxu0 %v693
        %792 = vmatpush.msra.mxu0 %v692
        %793 = vmatpush.msra.mxu0 %v691
        %794 = vmatpush.msra.mxu0 %v690
        %795 = vmatpush.msra.mxu0 %v689
        %796 = vmatpush.msra.mxu0 %v688
        %797 = vmatmul.f32.gmra.mxu0 %v779
        %v798 = vpop.f32.mrf.mxu0
        %v799 = vadd.f32 %v775, %v798
        %800 = vdwg.mxu0
        %v802 = vperm.slane %v705, 0
        %804 = vmatpush.msra.mxu0 0.0
        %805 = vmatpush.msra.mxu0 0.0
        %806 = vmatpush.msra.mxu0 0.0
        %807 = vmatpush.msra.mxu0 0.0
        %808 = vmatpush.msra.mxu0 0.0
        %809 = vmatpush.msra.mxu0 0.0
        %810 = vmatpush.msra.mxu0 0.0
        %811 = vmatpush.msra.mxu0 0.0
        %812 = vmatpush.msra.mxu0 %v704
        %813 = vmatpush.msra.mxu0 %v703
        %814 = vmatpush.msra.mxu0 %v702
        %815 = vmatpush.msra.mxu0 %v701
        %816 = vmatpush.msra.mxu0 %v700
        %817 = vmatpush.msra.mxu0 %v699
        %818 = vmatpush.msra.mxu0 %v698
        %819 = vmatpush.msra.mxu0 %v697
        %820 = vmatmul.f32.gmra.mxu0 %v779
        %v821 = vpop.f32.mrf.mxu0
        %v822 = vadd.f32 %v802, %v821
        %823 = vdwg.mxu0
        %v825 = vperm.slane %v714, 0
        %827 = vmatpush.msra.mxu0 0.0
        %828 = vmatpush.msra.mxu0 0.0
        %829 = vmatpush.msra.mxu0 0.0
        %830 = vmatpush.msra.mxu0 0.0
        %831 = vmatpush.msra.mxu0 0.0
        %832 = vmatpush.msra.mxu0 0.0
        %833 = vmatpush.msra.mxu0 0.0
        %834 = vmatpush.msra.mxu0 0.0
        %835 = vmatpush.msra.mxu0 %v713
        %836 = vmatpush.msra.mxu0 %v712
        %837 = vmatpush.msra.mxu0 %v711
        %838 = vmatpush.msra.mxu0 %v710
        %839 = vmatpush.msra.mxu0 %v709
        %840 = vmatpush.msra.mxu0 %v708
        %841 = vmatpush.msra.mxu0 %v707
        %842 = vmatpush.msra.mxu0 %v706
        %843 = vmatmul.f32.gmra.mxu0 %v779
        %v844 = vpop.f32.mrf.mxu0
        %v845 = vadd.f32 %v825, %v844
        %846 = vdwg.mxu0
        %848 = vrot.lane.b32.xlu0 %v799, 120
        %v849 = vpop.permute.xlu0 %848
        %850 = vrot.lane.b32.xlu0 %v799, 112
        %v851 = vpop.permute.xlu0 %850
        %852 = vrot.lane.b32.xlu0 %v799, 104
        %v853 = vpop.permute.xlu0 %852
        %854 = vrot.lane.b32.xlu0 %v799, 96
        %v855 = vpop.permute.xlu0 %854
        %856 = vrot.lane.b32.xlu0 %v799, 88
        %v857 = vpop.permute.xlu0 %856
        %858 = vrot.lane.b32.xlu0 %v799, 80
        %v859 = vpop.permute.xlu0 %858
        %860 = vrot.lane.b32.xlu0 %v799, 72
        %v861 = vpop.permute.xlu0 %860
        %863 = vrot.lane.b32.xlu0 %v822, 120
        %v864 = vpop.permute.xlu0 %863
        %865 = vrot.lane.b32.xlu0 %v822, 112
        %v866 = vpop.permute.xlu0 %865
        %867 = vrot.lane.b32.xlu0 %v822, 104
        %v868 = vpop.permute.xlu0 %867
        %869 = vrot.lane.b32.xlu0 %v822, 96
        %v870 = vpop.permute.xlu0 %869
        %871 = vrot.lane.b32.xlu0 %v822, 88
        %v872 = vpop.permute.xlu0 %871
        %873 = vrot.lane.b32.xlu0 %v822, 80
        %v874 = vpop.permute.xlu0 %873
        %875 = vrot.lane.b32.xlu0 %v822, 72
        %v876 = vpop.permute.xlu0 %875
        %878 = vrot.lane.b32.xlu0 %v845, 120
        %v879 = vpop.permute.xlu0 %878
        %881 = vrot.lane.b32.xlu0 %v845, 112
        %v882 = vpop.permute.xlu0 %881
        %884 = vrot.lane.b32.xlu0 %v845, 104
        %v885 = vpop.permute.xlu0 %884
        %887 = vrot.lane.b32.xlu0 %v845, 96
        %v888 = vpop.permute.xlu0 %887
        %890 = vrot.lane.b32.xlu0 %v845, 88
        %v891 = vpop.permute.xlu0 %890
        %893 = vrot.lane.b32.xlu0 %v845, 80
        %v894 = vpop.permute.xlu0 %893
        %896 = vrot.lane.b32.xlu0 %v845, 72
        %v897 = vpop.permute.xlu0 %896
        %vm899 = vcmask 64512
        %v900 = vsel %vm899, %v799, 0
        %v902 = vsel %vm899, %v849, 0
        %v904 = vsel %vm899, %v851, 0
        %v906 = vsel %vm899, %v853, 0
        %v908 = vsel %vm899, %v855, 0
        %v910 = vsel %vm899, %v857, 0
        %v912 = vsel %vm899, %v859, 0
        %v914 = vsel %vm899, %v861, 0
        %v916 = vsel %vm899, %v822, 0
        %v918 = vsel %vm899, %v864, 0
        %v920 = vsel %vm899, %v866, 0
        %v922 = vsel %vm899, %v868, 0
        %v924 = vsel %vm899, %v870, 0
        %v926 = vsel %vm899, %v872, 0
        %v928 = vsel %vm899, %v874, 0
        %v930 = vsel %vm899, %v876, 0
        %932 = vmatpush.xpose.msra.mxu0 0.0
        %933 = vmatpush.xpose.msra.mxu0 0.0
        %934 = vmatpush.xpose.msra.mxu0 0.0
        %935 = vmatpush.xpose.msra.mxu0 0.0
        %936 = vmatpush.xpose.msra.mxu0 0.0
        %937 = vmatpush.xpose.msra.mxu0 0.0
        %938 = vmatpush.xpose.msra.mxu0 0.0
        %939 = vmatpush.xpose.msra.mxu0 0.0
        %940 = vmatpush.xpose.msra.mxu0 %v930
        %941 = vmatpush.xpose.msra.mxu0 %v928
        %942 = vmatpush.xpose.msra.mxu0 %v926
        %943 = vmatpush.xpose.msra.mxu0 %v924
        %944 = vmatpush.xpose.msra.mxu0 %v922
        %945 = vmatpush.xpose.msra.mxu0 %v920
        %946 = vmatpush.xpose.msra.mxu0 %v918
        %947 = vmatpush.xpose.msra.mxu0 %v916
        %948 = vmatmul.f32.gmra.mxu0 %v900
        %v949 = vpop.f32.mrf.mxu0
        %v950 = vadd.f32 %v675, %v949
        %951 = vmatmul.f32.gmra.mxu0 %v902
        %v952 = vpop.f32.mrf.mxu0
        %v953 = vadd.f32 %v676, %v952
        %954 = vmatmul.f32.gmra.mxu0 %v904
        %v955 = vpop.f32.mrf.mxu0
        %v956 = vadd.f32 %v677, %v955
        %957 = vmatmul.f32.gmra.mxu0 %v906
        %v958 = vpop.f32.mrf.mxu0
        %v959 = vadd.f32 %v678, %v958
        %960 = vmatmul.f32.gmra.mxu0 %v908
        %v961 = vpop.f32.mrf.mxu0
        %v962 = vadd.f32 %v679, %v961
        %963 = vmatmul.f32.gmra.mxu0 %v910
        %v964 = vpop.f32.mrf.mxu0
        %v965 = vadd.f32 %v680, %v964
        %966 = vmatmul.f32.gmra.mxu0 %v912
        %v967 = vpop.f32.mrf.mxu0
        %v968 = vadd.f32 %v681, %v967
        %969 = vmatmul.f32.gmra.mxu0 %v914
        %v970 = vpop.f32.mrf.mxu0
        %v971 = vadd.f32 %v682, %v970
        %972 = vdwg.mxu0
        %v973 = vsel %vm777, %v950, -inf
        %974 = vmax.xlane.f32.xlu0 %v973
        %v975 = vpop.xlane.xlu0 %974
        %v976 = vsel %vm777, %v953, -inf
        %977 = vmax.xlane.f32.xlu0 %v976
        %v978 = vpop.xlane.xlu0 %977
        %v979 = vsel %vm777, %v956, -inf
        %980 = vmax.xlane.f32.xlu0 %v979
        %v981 = vpop.xlane.xlu0 %980
        %v982 = vsel %vm777, %v959, -inf
        %983 = vmax.xlane.f32.xlu0 %v982
        %v984 = vpop.xlane.xlu0 %983
        %v985 = vsel %vm777, %v962, -inf
        %986 = vmax.xlane.f32.xlu0 %v985
        %v987 = vpop.xlane.xlu0 %986
        %v988 = vsel %vm777, %v965, -inf
        %989 = vmax.xlane.f32.xlu0 %v988
        %v990 = vpop.xlane.xlu0 %989
        %v991 = vsel %vm777, %v968, -inf
        %992 = vmax.xlane.f32.xlu0 %v991
        %v993 = vpop.xlane.xlu0 %992
        %v994 = vsel %vm777, %v971, -inf
        %995 = vmax.xlane.f32.xlu0 %v994
        %v996 = vpop.xlane.xlu0 %995
        %v997 = vsub.f32 %v950, %v975
        %v998 = vsub.f32 %v953, %v978
        %v999 = vsub.f32 %v956, %v981
        %v1000 = vsub.f32 %v959, %v984
        %v1001 = vsub.f32 %v962, %v987
        %v1002 = vsub.f32 %v965, %v990
        %v1003 = vsub.f32 %v968, %v993
        %v1004 = vsub.f32 %v971, %v996
        %v1005 = vmul.f32 %v997, 1.442695
        %v1006 = vpow.pop %v1005
        %v1007 = vmul.f32 %v998, 1.442695
        %v1008 = vpow.pop %v1007
        %v1009 = vmul.f32 %v999, 1.442695
        %v1010 = vpow.pop %v1009
        %v1011 = vmul.f32 %v1000, 1.442695
        %v1012 = vpow.pop %v1011
        %v1013 = vmul.f32 %v1001, 1.442695
        %v1014 = vpow.pop %v1013
        %v1015 = vmul.f32 %v1002, 1.442695
        %v1016 = vpow.pop %v1015
        %v1017 = vmul.f32 %v1003, 1.442695
        %v1018 = vpow.pop %v1017
        %v1019 = vmul.f32 %v1004, 1.442695
        %v1020 = vpow.pop %v1019
        %v1022 = vsel %vm777, %v1006, 0
        %v1025 = vsel %vm777, %v1008, 0
        %v1028 = vsel %vm777, %v1010, 0
        %v1031 = vsel %vm777, %v1012, 0
        %v1034 = vsel %vm777, %v1014, 0
        %v1037 = vsel %vm777, %v1016, 0
        %v1040 = vsel %vm777, %v1018, 0
        %v1043 = vsel %vm777, %v1020, 0
        %1045 = vmatpush.msra.mxu0 0.0
        %1046 = vmatpush.msra.mxu0 0.0
        %1047 = vmatpush.msra.mxu0 0.0
        %1048 = vmatpush.msra.mxu0 0.0
        %1049 = vmatpush.msra.mxu0 0.0
        %1050 = vmatpush.msra.mxu0 0.0
        %1051 = vmatpush.msra.mxu0 0.0
        %1052 = vmatpush.msra.mxu0 0.0
        %1053 = vmatpush.msra.mxu0 %v897
        %1054 = vmatpush.msra.mxu0 %v894
        %1055 = vmatpush.msra.mxu0 %v891
        %1056 = vmatpush.msra.mxu0 %v888
        %1057 = vmatpush.msra.mxu0 %v885
        %1058 = vmatpush.msra.mxu0 %v882
        %1059 = vmatpush.msra.mxu0 %v879
        %1060 = vmatpush.msra.mxu0 %v845
        %1061 = vmatmul.f32.gmra.mxu0 %v1022
        %v1062 = vpop.f32.mrf.mxu0
        %v1063 = vadd.f32 0.0, %v1062
        %1064 = vmatmul.f32.gmra.mxu0 %v1025
        %v1065 = vpop.f32.mrf.mxu0
        %v1066 = vadd.f32 0.0, %v1065
        %1067 = vmatmul.f32.gmra.mxu0 %v1028
        %v1068 = vpop.f32.mrf.mxu0
        %v1069 = vadd.f32 0.0, %v1068
        %1070 = vmatmul.f32.gmra.mxu0 %v1031
        %v1071 = vpop.f32.mrf.mxu0
        %v1072 = vadd.f32 0.0, %v1071
        %1073 = vmatmul.f32.gmra.mxu0 %v1034
        %v1074 = vpop.f32.mrf.mxu0
        %v1075 = vadd.f32 0.0, %v1074
        %1076 = vmatmul.f32.gmra.mxu0 %v1037
        %v1077 = vpop.f32.mrf.mxu0
        %v1078 = vadd.f32 0.0, %v1077
        %1079 = vmatmul.f32.gmra.mxu0 %v1040
        %v1080 = vpop.f32.mrf.mxu0
        %v1081 = vadd.f32 0.0, %v1080
        %1082 = vmatmul.f32.gmra.mxu0 %v1043
        %v1083 = vpop.f32.mrf.mxu0
        %v1084 = vadd.f32 0.0, %v1083
        %1085 = vdwg.mxu0
        %v1086 = vsel %vm777, %v1006, 0.0
        %1087 = vadd.xlane.f32.xlu0 %v1086
        %v1088 = vpop.xlane.xlu0 %1087
        %v1089 = vsel %vm777, %v1008, 0.0
        %1090 = vadd.xlane.f32.xlu0 %v1089
        %v1091 = vpop.xlane.xlu0 %1090
        %v1092 = vsel %vm777, %v1010, 0.0
        %1093 = vadd.xlane.f32.xlu0 %v1092
        %v1094 = vpop.xlane.xlu0 %1093
        %v1095 = vsel %vm777, %v1012, 0.0
        %1096 = vadd.xlane.f32.xlu0 %v1095
        %v1097 = vpop.xlane.xlu0 %1096
        %v1098 = vsel %vm777, %v1014, 0.0
        %1099 = vadd.xlane.f32.xlu0 %v1098
        %v1100 = vpop.xlane.xlu0 %1099
        %v1101 = vsel %vm777, %v1016, 0.0
        %1102 = vadd.xlane.f32.xlu0 %v1101
        %v1103 = vpop.xlane.xlu0 %1102
        %v1104 = vsel %vm777, %v1018, 0.0
        %1105 = vadd.xlane.f32.xlu0 %v1104
        %v1106 = vpop.xlane.xlu0 %1105
        %v1107 = vsel %vm777, %v1020, 0.0
        %1108 = vadd.xlane.f32.xlu0 %v1107
        %v1109 = vpop.xlane.xlu0 %1108
        %v1110 = vrcp.pop %v1088
        %v1111 = vmul.f32 %v1088, %v1110
        %v1112 = vsub.f32 1.0, %v1111
        %v1113 = vmul.f32 %v1110, %v1112
        %v1114 = vadd.f32 %v1110, %v1113
        %vm1115 = vweird.f32 %v1088
        %vm1116 = vweird.f32 %v1110
        %vm1117 = vmor %vm1115, %vm1116
        %v1118 = vsel %vm1117, %v1110, %v1114
        %v1119 = vand.u32 2147483647, %v1088
        %vm1120 = vcmp.eq.f32.partialorder %v1119, 8.507059e+37
        %v1121 = vand.u32 %v1088, 2147483648
        %v1122 = vor.u32 1.1754944e-38, %v1121
        %v1123 = vsel %vm1120, %v1122, %v1118
        %v1124 = vrcp.pop %v1091
        %v1125 = vmul.f32 %v1091, %v1124
        %v1126 = vsub.f32 1.0, %v1125
        %v1127 = vmul.f32 %v1124, %v1126
        %v1128 = vadd.f32 %v1124, %v1127
        %vm1129 = vweird.f32 %v1091
        %vm1130 = vweird.f32 %v1124
        %vm1131 = vmor %vm1129, %vm1130
        %v1132 = vsel %vm1131, %v1124, %v1128
        %v1133 = vand.u32 2147483647, %v1091
        %vm1134 = vcmp.eq.f32.partialorder %v1133, 8.507059e+37
        %v1135 = vand.u32 %v1091, 2147483648
        %v1136 = vor.u32 1.1754944e-38, %v1135
        %v1137 = vsel %vm1134, %v1136, %v1132
        %v1138 = vrcp.pop %v1094
        %v1139 = vmul.f32 %v1094, %v1138
        %v1140 = vsub.f32 1.0, %v1139
        %v1141 = vmul.f32 %v1138, %v1140
        %v1142 = vadd.f32 %v1138, %v1141
        %vm1143 = vweird.f32 %v1094
        %vm1144 = vweird.f32 %v1138
        %vm1145 = vmor %vm1143, %vm1144
        %v1146 = vsel %vm1145, %v1138, %v1142
        %v1147 = vand.u32 2147483647, %v1094
        %vm1148 = vcmp.eq.f32.partialorder %v1147, 8.507059e+37
        %v1149 = vand.u32 %v1094, 2147483648
        %v1150 = vor.u32 1.1754944e-38, %v1149
        %v1151 = vsel %vm1148, %v1150, %v1146
        %v1152 = vrcp.pop %v1097
        %v1153 = vmul.f32 %v1097, %v1152
        %v1154 = vsub.f32 1.0, %v1153
        %v1155 = vmul.f32 %v1152, %v1154
        %v1156 = vadd.f32 %v1152, %v1155
        %vm1157 = vweird.f32 %v1097
        %vm1158 = vweird.f32 %v1152
        %vm1159 = vmor %vm1157, %vm1158
        %v1160 = vsel %vm1159, %v1152, %v1156
        %v1161 = vand.u32 2147483647, %v1097
        %vm1162 = vcmp.eq.f32.partialorder %v1161, 8.507059e+37
        %v1163 = vand.u32 %v1097, 2147483648
        %v1164 = vor.u32 1.1754944e-38, %v1163
        %v1165 = vsel %vm1162, %v1164, %v1160
        %v1166 = vrcp.pop %v1100
        %v1167 = vmul.f32 %v1100, %v1166
        %v1168 = vsub.f32 1.0, %v1167
        %v1169 = vmul.f32 %v1166, %v1168
        %v1170 = vadd.f32 %v1166, %v1169
        %vm1171 = vweird.f32 %v1100
        %vm1172 = vweird.f32 %v1166
        %vm1173 = vmor %vm1171, %vm1172
        %v1174 = vsel %vm1173, %v1166, %v1170
        %v1175 = vand.u32 2147483647, %v1100
        %vm1176 = vcmp.eq.f32.partialorder %v1175, 8.507059e+37
        %v1177 = vand.u32 %v1100, 2147483648
        %v1178 = vor.u32 1.1754944e-38, %v1177
        %v1179 = vsel %vm1176, %v1178, %v1174
        %v1180 = vrcp.pop %v1103
        %v1181 = vmul.f32 %v1103, %v1180
        %v1182 = vsub.f32 1.0, %v1181
        %v1183 = vmul.f32 %v1180, %v1182
        %v1184 = vadd.f32 %v1180, %v1183
        %vm1185 = vweird.f32 %v1103
        %vm1186 = vweird.f32 %v1180
        %vm1187 = vmor %vm1185, %vm1186
        %v1188 = vsel %vm1187, %v1180, %v1184
        %v1189 = vand.u32 2147483647, %v1103
        %vm1190 = vcmp.eq.f32.partialorder %v1189, 8.507059e+37
        %v1191 = vand.u32 %v1103, 2147483648
        %v1192 = vor.u32 1.1754944e-38, %v1191
        %v1193 = vsel %vm1190, %v1192, %v1188
        %v1194 = vrcp.pop %v1106
        %v1195 = vmul.f32 %v1106, %v1194
        %v1196 = vsub.f32 1.0, %v1195
        %v1197 = vmul.f32 %v1194, %v1196
        %v1198 = vadd.f32 %v1194, %v1197
        %vm1199 = vweird.f32 %v1106
        %vm1200 = vweird.f32 %v1194
        %vm1201 = vmor %vm1199, %vm1200
        %v1202 = vsel %vm1201, %v1194, %v1198
        %v1203 = vand.u32 2147483647, %v1106
        %vm1204 = vcmp.eq.f32.partialorder %v1203, 8.507059e+37
        %v1205 = vand.u32 %v1106, 2147483648
        %v1206 = vor.u32 1.1754944e-38, %v1205
        %v1207 = vsel %vm1204, %v1206, %v1202
        %v1208 = vrcp.pop %v1109
        %v1209 = vmul.f32 %v1109, %v1208
        %v1210 = vsub.f32 1.0, %v1209
        %v1211 = vmul.f32 %v1208, %v1210
        %v1212 = vadd.f32 %v1208, %v1211
        %vm1213 = vweird.f32 %v1109
        %vm1214 = vweird.f32 %v1208
        %vm1215 = vmor %vm1213, %vm1214
        %v1216 = vsel %vm1215, %v1208, %v1212
        %v1217 = vand.u32 2147483647, %v1109
        %vm1218 = vcmp.eq.f32.partialorder %v1217, 8.507059e+37
        %v1219 = vand.u32 %v1109, 2147483648
        %v1220 = vor.u32 1.1754944e-38, %v1219
        %v1221 = vsel %vm1218, %v1220, %v1216
        %v1222 = vmul.f32 %v1063, %v1123
        %v1223 = vmul.f32 %v1066, %v1137
        %v1224 = vmul.f32 %v1069, %v1151
        %v1225 = vmul.f32 %v1072, %v1165
        %v1226 = vmul.f32 %v1075, %v1179
        %v1227 = vmul.f32 %v1078, %v1193
        %v1228 = vmul.f32 %v1081, %v1207
        %v1229 = vmul.f32 %v1084, %v1221
        %1231 = vrot.lane.b32.xlu0 %v1223, 8
        %v1232 = vpop.permute.xlu0 %1231
        %1235 = vrot.lane.b32.xlu0 %v1224, 16
        %v1236 = vpop.permute.xlu0 %1235
        %1239 = vrot.lane.b32.xlu0 %v1225, 24
        %v1240 = vpop.permute.xlu0 %1239
        %1243 = vrot.lane.b32.xlu0 %v1226, 32
        %v1244 = vpop.permute.xlu0 %1243
        %1247 = vrot.lane.b32.xlu0 %v1227, 40
        %v1248 = vpop.permute.xlu0 %1247
        %1251 = vrot.lane.b32.xlu0 %v1228, 48
        %v1252 = vpop.permute.xlu0 %1251
        %1255 = vrot.lane.b32.xlu0 %v1229, 56
        %v1256 = vpop.permute.xlu0 %1255
        %v1258 = vsel %vm899, %v1222, %v1232
        %vm1259 = vcmask 130048
        %v1260 = vsel %vm1259, %v1258, %v1236
        %vm1261 = vcmask 195584
        %v1262 = vsel %vm1261, %v1260, %v1240
        %vm1263 = vcmask 261120
        %v1264 = vsel %vm1263, %v1262, %v1244
        %vm1265 = vcmask 326656
        %v1266 = vsel %vm1265, %v1264, %v1248
        %vm1267 = vcmask 392192
        %v1268 = vsel %vm1267, %v1266, %v1252
        %vm1269 = vcmask 457728
        %v1270 = vsel %vm1269, %v1268, %v1256
        %v1272 = vperm.slane %v723, 0
        %v1275 = vsel %vm777, %v1270, 0
        %1277 = vmatpush.msra.mxu0 0.0
        %1278 = vmatpush.msra.mxu0 0.0
        %1279 = vmatpush.msra.mxu0 0.0
        %1280 = vmatpush.msra.mxu0 0.0
        %1281 = vmatpush.msra.mxu0 0.0
        %1282 = vmatpush.msra.mxu0 0.0
        %1283 = vmatpush.msra.mxu0 0.0
        %1284 = vmatpush.msra.mxu0 0.0
        %1285 = vmatpush.msra.mxu0 %v722
        %1286 = vmatpush.msra.mxu0 %v721
        %1287 = vmatpush.msra.mxu0 %v720
        %1288 = vmatpush.msra.mxu0 %v719
        %1289 = vmatpush.msra.mxu0 %v718
        %1290 = vmatpush.msra.mxu0 %v717
        %1291 = vmatpush.msra.mxu0 %v716
        %1292 = vmatpush.msra.mxu0 %v715
        %1293 = vmatmul.f32.gmra.mxu0 %v1275
        %v1294 = vpop.f32.mrf.mxu0
        %v1295 = vadd.f32 %v1272, %v1294
        %1296 = vdwg.mxu0
        %s1297 = sld [smem:[#allocation14]]
        %s1298 = sld [smem:[#allocation14 + $0x1]]
        %s1299 = sld [smem:[#allocation14 + $0x2]]
        %s1300 = sld [smem:[#allocation14 + $0x3]]
        %v1301 = vadd.f32 %v1295, %v673
        %v1302 = vsel %vm777, %v1301, 0.0
        %1303 = vadd.xlane.f32.xlu0 %v1302
        %v1304 = vpop.xlane.xlu0 %1303
        %v1305 = vrcp.pop 64.0
        %v1306 = vmul.f32 64.0, %v1305
        %v1307 = vsub.f32 1.0, %v1306
        %v1308 = vmul.f32 %v1305, %v1307
        %v1309 = vadd.f32 %v1305, %v1308
        %vm1310 = vweird.f32 %v1305
        %v1311 = vsel %vm1310, %v1305, %v1309
        %v1312 = vmul.f32 %v1304, %v1311
        %v1313 = vsub.f32 %v1301, %v1312
        %v1314 = vmul.f32 %v1313, %v1313
        %v1315 = vsel %vm777, %v1314, 0.0
        %1316 = vadd.xlane.f32.xlu0 %v1315
        %v1317 = vpop.xlane.xlu0 %1316
        %v1318 = vmul.f32 %v1317, 0.015873017
        %v1319 = vadd.f32 %v1318, 1e-08
        %v1320 = vrsqrt.pop %v1319
        %v1321 = vmul.f32 %v1320, %v1319
        %v1322 = vmul.f32 %v1321, %v1320
        %v1323 = vmul.f32 0.5, %v1322
        %v1324 = vsub.f32 1.5, %v1323
        %v1325 = vmul.f32 %v1320, %v1324
        %vm1326 = vweird.f32 %v1319
        %vm1327 = vweird.f32 %v1320
        %vm1328 = vmor %vm1326, %vm1327
        %v1329 = vsel %vm1328, %v1320, %v1325
        %v1330 = vmul.f32 %v1313, %v1329
        %v1331 = vstv %s1297
        %v1332 = vmul.f32 %v1331, %v1330
        %v1333 = vstv %s1298
        %v1334 = vadd.f32 %v1332, %v1333
        %v1335 = vmul.f32 %v1334, %v686
        %v1337 = vperm.slane %v740, 0
        %v1338 = vperm.slane %v740, 1
        %v1342 = vsel %vm777, %v1335, 0
        %1344 = vmatpush.msra.mxu0 0.0
        %1345 = vmatpush.msra.mxu0 0.0
        %1346 = vmatpush.msra.mxu0 0.0
        %1347 = vmatpush.msra.mxu0 0.0
        %1348 = vmatpush.msra.mxu0 0.0
        %1349 = vmatpush.msra.mxu0 0.0
        %1350 = vmatpush.msra.mxu0 0.0
        %1351 = vmatpush.msra.mxu0 0.0
        %1352 = vmatpush.msra.mxu0 %v738
        %1353 = vmatpush.msra.mxu0 %v736
        %1354 = vmatpush.msra.mxu0 %v734
        %1355 = vmatpush.msra.mxu0 %v732
        %1356 = vmatpush.msra.mxu0 %v730
        %1357 = vmatpush.msra.mxu0 %v728
        %1358 = vmatpush.msra.mxu0 %v726
        %1359 = vmatpush.msra.mxu0 %v724
        %1360 = vmatmul.f32.gmra.mxu0 %v1342
        %v1361 = vpop.f32.mrf.mxu0
        %v1362 = vadd.f32 %v1337, %v1361
        %1363 = vdwg.mxu0
        %1364 = vmatpush.msra.mxu0 0.0
        %1365 = vmatpush.msra.mxu0 0.0
        %1366 = vmatpush.msra.mxu0 0.0
        %1367 = vmatpush.msra.mxu0 0.0
        %1368 = vmatpush.msra.mxu0 0.0
        %1369 = vmatpush.msra.mxu0 0.0
        %1370 = vmatpush.msra.mxu0 0.0
        %1371 = vmatpush.msra.mxu0 0.0
        %1372 = vmatpush.msra.mxu0 %v739
        %1373 = vmatpush.msra.mxu0 %v737
        %1374 = vmatpush.msra.mxu0 %v735
        %1375 = vmatpush.msra.mxu0 %v733
        %1376 = vmatpush.msra.mxu0 %v731
        %1377 = vmatpush.msra.mxu0 %v729
        %1378 = vmatpush.msra.mxu0 %v727
        %1379 = vmatpush.msra.mxu0 %v725
        %1380 = vmatmul.f32.gmra.mxu0 %v1342
        %v1381 = vpop.f32.mrf.mxu0
        %v1382 = vadd.f32 %v1338, %v1381
        %1383 = vdwg.mxu0
        %v1384 = vmul.f32 %v1362, %v1362
        %v1385 = vmul.f32 %v1382, %v1382
        %v1386 = vmul.f32 %v1384, %v1362
        %v1387 = vmul.f32 %v1385, %v1382
        %v1388 = vmul.f32 %v1386, 0.044715
        %v1389 = vmul.f32 %v1387, 0.044715
        %v1390 = vadd.f32 %v1362, %v1388
        %v1391 = vadd.f32 %v1382, %v1389
        %v1392 = vmul.f32 %v1390, 0.7978846
        %v1393 = vmul.f32 %v1391, 0.7978846
        %v1394 = vtanh.pop %v1392
        %v1395 = vtanh.pop %v1393
        %v1396 = vadd.f32 %v1394, 1.0
        %v1397 = vadd.f32 %v1395, 1.0
        %v1398 = vmul.f32 %v1396, 0.5
        %v1399 = vmul.f32 %v1397, 0.5
        %v1400 = vmul.f32 %v1362, %v1398
        %v1401 = vmul.f32 %v1382, %v1399
        %v1403 = vperm.slane %v773, 0
        %1405 = vmatpush.msra.mxu0 %v756
        %1406 = vmatpush.msra.mxu0 %v755
        %1407 = vmatpush.msra.mxu0 %v754
        %1408 = vmatpush.msra.mxu0 %v753
        %1409 = vmatpush.msra.mxu0 %v752
        %1410 = vmatpush.msra.mxu0 %v751
        %1411 = vmatpush.msra.mxu0 %v750
        %1412 = vmatpush.msra.mxu0 %v749
        %1413 = vmatpush.msra.mxu0 %v748
        %1414 = vmatpush.msra.mxu0 %v747
        %1415 = vmatpush.msra.mxu0 %v746
        %1416 = vmatpush.msra.mxu0 %v745
        %1417 = vmatpush.msra.mxu0 %v744
        %1418 = vmatpush.msra.mxu0 %v743
        %1419 = vmatpush.msra.mxu0 %v742
        %1420 = vmatpush.msra.mxu0 %v741
        %1421 = vmatmul.f32.gmra.mxu0 %v1400
        %v1422 = vpop.f32.mrf.mxu0
        %v1423 = vadd.f32 %v1403, %v1422
        %1424 = vdwg.mxu0
        %1425 = vmatpush.msra.mxu0 %v772
        %1426 = vmatpush.msra.mxu0 %v771
        %1427 = vmatpush.msra.mxu0 %v770
        %1428 = vmatpush.msra.mxu0 %v769
        %1429 = vmatpush.msra.mxu0 %v768
        %1430 = vmatpush.msra.mxu0 %v767
        %1431 = vmatpush.msra.mxu0 %v766
        %1432 = vmatpush.msra.mxu0 %v765
        %1433 = vmatpush.msra.mxu0 %v764
        %1434 = vmatpush.msra.mxu0 %v763
        %1435 = vmatpush.msra.mxu0 %v762
        %1436 = vmatpush.msra.mxu0 %v761
        %1437 = vmatpush.msra.mxu0 %v760
        %1438 = vmatpush.msra.mxu0 %v759
        %1439 = vmatpush.msra.mxu0 %v758
        %1440 = vmatpush.msra.mxu0 %v757
        %1441 = vmatmul.f32.gmra.mxu0 %v1401
        %v1442 = vpop.f32.mrf.mxu0
        %v1443 = vadd.f32 %v1423, %v1442
        %1444 = vdwg.mxu0
        %v1445 = vadd.f32 %v1443, %v1335
        %v1446 = vsel %vm777, %v1445, 0.0
        %1447 = vadd.xlane.f32.xlu0 %v1446
        %v1448 = vpop.xlane.xlu0 %1447
        %v1449 = vmul.f32 %v1448, %v1311
        %v1450 = vsub.f32 %v1445, %v1449
        %v1451 = vmul.f32 %v1450, %v1450
        %v1452 = vsel %vm777, %v1451, 0.0
        %1453 = vadd.xlane.f32.xlu0 %v1452
        %v1454 = vpop.xlane.xlu0 %1453
        %v1455 = vmul.f32 %v1454, 0.015873017
        %v1456 = vadd.f32 %v1455, 1e-08
        %v1457 = vrsqrt.pop %v1456
        %v1458 = vmul.f32 %v1457, %v1456
        %v1459 = vmul.f32 %v1458, %v1457
        %v1460 = vmul.f32 0.5, %v1459
        %v1461 = vsub.f32 1.5, %v1460
        %v1462 = vmul.f32 %v1457, %v1461
        %vm1463 = vweird.f32 %v1456
        %vm1464 = vweird.f32 %v1457
        %vm1465 = vmor %vm1463, %vm1464
        %v1466 = vsel %vm1465, %v1457, %v1462
        %v1467 = vmul.f32 %v1450, %v1466
        %v1468 = vstv %s1299
        %v1469 = vmul.f32 %v1468, %v1467
        %v1470 = vstv %s1300
        %v1471 = vadd.f32 %v1469, %v1470
        %v1472 = vmul.f32 %v1471, %v686
        %v1473 = vadd.f32 %v1472, %v673
        %s1474 = scalar_lea.vmem %s3, 64
        %v1475 = vld [vmem:[%s1474] sm:$0xff]
        %v1476 = vld [vmem:[%s1474 + $0x8] sm:$0xff]
        %v1477 = vld [vmem:[%s1474 + $0x10] sm:$0xff]
        %v1478 = vld [vmem:[%s1474 + $0x18] sm:$0xff]
        %v1479 = vld [vmem:[%s1474 + $0x20] sm:$0xff]
        %v1480 = vld [vmem:[%s1474 + $0x28] sm:$0xff]
        %v1481 = vld [vmem:[%s1474 + $0x30] sm:$0xff]
        %v1482 = vld [vmem:[%s1474 + $0x38] sm:$0xff]
        %s1483 = scalar_lea.vmem [#allocation6], 1
        %v1484 = vld [vmem:[%s1483] sm:$0x1]
        %s1485 = scalar_lea.vmem %s5, 64
        %v1486 = vld [vmem:[%s1485] sm:$0xff]
        %v1487 = vld [vmem:[%s1485 + $0x8] sm:$0xff]
        %v1488 = vld [vmem:[%s1485 + $0x10] sm:$0xff]
        %v1489 = vld [vmem:[%s1485 + $0x18] sm:$0xff]
        %v1490 = vld [vmem:[%s1485 + $0x20] sm:$0xff]
        %v1491 = vld [vmem:[%s1485 + $0x28] sm:$0xff]
        %v1492 = vld [vmem:[%s1485 + $0x30] sm:$0xff]
        %v1493 = vld [vmem:[%s1485 + $0x38] sm:$0xff]
        %s1494 = scalar_lea.vmem [#allocation8], 1
        %v1495 = vld [vmem:[%s1494] sm:$0x1]
        %s1496 = scalar_lea.vmem %s7, 64
        %v1497 = vld [vmem:[%s1496] sm:$0xff]
        %v1498 = vld [vmem:[%s1496 + $0x8] sm:$0xff]
        %v1499 = vld [vmem:[%s1496 + $0x10] sm:$0xff]
        %v1500 = vld [vmem:[%s1496 + $0x18] sm:$0xff]
        %v1501 = vld [vmem:[%s1496 + $0x20] sm:$0xff]
        %v1502 = vld [vmem:[%s1496 + $0x28] sm:$0xff]
        %v1503 = vld [vmem:[%s1496 + $0x30] sm:$0xff]
        %v1504 = vld [vmem:[%s1496 + $0x38] sm:$0xff]
        %s1505 = scalar_lea.vmem [#allocation9], 1
        %v1506 = vld [vmem:[%s1505] sm:$0x1]
        %s1507 = scalar_lea.vmem %s9, 64
        %v1508 = vld [vmem:[%s1507] sm:$0xff]
        %v1509 = vld [vmem:[%s1507 + $0x8] sm:$0xff]
        %v1510 = vld [vmem:[%s1507 + $0x10] sm:$0xff]
        %v1511 = vld [vmem:[%s1507 + $0x18] sm:$0xff]
        %v1512 = vld [vmem:[%s1507 + $0x20] sm:$0xff]
        %v1513 = vld [vmem:[%s1507 + $0x28] sm:$0xff]
        %v1514 = vld [vmem:[%s1507 + $0x30] sm:$0xff]
        %v1515 = vld [vmem:[%s1507 + $0x38] sm:$0xff]
        %s1516 = scalar_lea.vmem [#allocation11], 1
        %v1517 = vld [vmem:[%s1516] sm:$0x1]
        %s1518 = scalar_lea.vmem %s11, 128
        %v1519 = vld [vmem:[%s1518] sm:$0xff]
        %v1520 = vld [vmem:[%s1518 + $0x8] sm:$0xff]
        %v1521 = vld [vmem:[%s1518 + $0x10] sm:$0xff]
        %v1522 = vld [vmem:[%s1518 + $0x18] sm:$0xff]
        %v1523 = vld [vmem:[%s1518 + $0x20] sm:$0xff]
        %v1524 = vld [vmem:[%s1518 + $0x28] sm:$0xff]
        %v1525 = vld [vmem:[%s1518 + $0x30] sm:$0xff]
        %v1526 = vld [vmem:[%s1518 + $0x38] sm:$0xff]
        %v1527 = vld [vmem:[%s1518 + $0x40] sm:$0xff]
        %v1528 = vld [vmem:[%s1518 + $0x48] sm:$0xff]
        %v1529 = vld [vmem:[%s1518 + $0x50] sm:$0xff]
        %v1530 = vld [vmem:[%s1518 + $0x58] sm:$0xff]
        %v1531 = vld [vmem:[%s1518 + $0x60] sm:$0xff]
        %v1532 = vld [vmem:[%s1518 + $0x68] sm:$0xff]
        %v1533 = vld [vmem:[%s1518 + $0x70] sm:$0xff]
        %v1534 = vld [vmem:[%s1518 + $0x78] sm:$0xff]
        %s1535 = scalar_lea.vmem [#allocation12], 2
        %v1536 = vld [vmem:[%s1535] sm:$0x3]
        %s1537 = scalar_lea.vmem %s13, 256
        %v1538 = vld [vmem:[%s1537] sm:$0xff]
        %v1539 = vld [vmem:[%s1537 + $0x8] sm:$0xff]
        %v1540 = vld [vmem:[%s1537 + $0x10] sm:$0xff]
        %v1541 = vld [vmem:[%s1537 + $0x18] sm:$0xff]
        %v1542 = vld [vmem:[%s1537 + $0x20] sm:$0xff]
        %v1543 = vld [vmem:[%s1537 + $0x28] sm:$0xff]
        %v1544 = vld [vmem:[%s1537 + $0x30] sm:$0xff]
        %v1545 = vld [vmem:[%s1537 + $0x38] sm:$0xff]
        %v1546 = vld [vmem:[%s1537 + $0x40] sm:$0xff]
        %v1547 = vld [vmem:[%s1537 + $0x48] sm:$0xff]
        %v1548 = vld [vmem:[%s1537 + $0x50] sm:$0xff]
        %v1549 = vld [vmem:[%s1537 + $0x58] sm:$0xff]
        %v1550 = vld [vmem:[%s1537 + $0x60] sm:$0xff]
        %v1551 = vld [vmem:[%s1537 + $0x68] sm:$0xff]
        %v1552 = vld [vmem:[%s1537 + $0x70] sm:$0xff]
        %v1553 = vld [vmem:[%s1537 + $0x78] sm:$0xff]
        %v1554 = vld [vmem:[%s1537 + $0x80] sm:$0xff]
        %v1555 = vld [vmem:[%s1537 + $0x88] sm:$0xff]
        %v1556 = vld [vmem:[%s1537 + $0x90] sm:$0xff]
        %v1557 = vld [vmem:[%s1537 + $0x98] sm:$0xff]
        %v1558 = vld [vmem:[%s1537 + $0xa0] sm:$0xff]
        %v1559 = vld [vmem:[%s1537 + $0xa8] sm:$0xff]
        %v1560 = vld [vmem:[%s1537 + $0xb0] sm:$0xff]
        %v1561 = vld [vmem:[%s1537 + $0xb8] sm:$0xff]
        %v1562 = vld [vmem:[%s1537 + $0xc0] sm:$0xff]
        %v1563 = vld [vmem:[%s1537 + $0xc8] sm:$0xff]
        %v1564 = vld [vmem:[%s1537 + $0xd0] sm:$0xff]
        %v1565 = vld [vmem:[%s1537 + $0xd8] sm:$0xff]
        %v1566 = vld [vmem:[%s1537 + $0xe0] sm:$0xff]
        %v1567 = vld [vmem:[%s1537 + $0xe8] sm:$0xff]
        %v1568 = vld [vmem:[%s1537 + $0xf0] sm:$0xff]
        %v1569 = vld [vmem:[%s1537 + $0xf8] sm:$0xff]
        %s1570 = scalar_lea.vmem %s14, 1
        %v1571 = vld [vmem:[%s1570] sm:$0x1]
        %v1573 = vperm.slane %v1484, 0
        %v1576 = vsel %vm777, %v1473, 0
        %1578 = vmatpush.msra.mxu0 0.0
        %1579 = vmatpush.msra.mxu0 0.0
        %1580 = vmatpush.msra.mxu0 0.0
        %1581 = vmatpush.msra.mxu0 0.0
        %1582 = vmatpush.msra.mxu0 0.0
        %1583 = vmatpush.msra.mxu0 0.0
        %1584 = vmatpush.msra.mxu0 0.0
        %1585 = vmatpush.msra.mxu0 0.0
        %1586 = vmatpush.msra.mxu0 %v1482
        %1587 = vmatpush.msra.mxu0 %v1481
        %1588 = vmatpush.msra.mxu0 %v1480
        %1589 = vmatpush.msra.mxu0 %v1479
        %1590 = vmatpush.msra.mxu0 %v1478
        %1591 = vmatpush.msra.mxu0 %v1477
        %1592 = vmatpush.msra.mxu0 %v1476
        %1593 = vmatpush.msra.mxu0 %v1475
        %1594 = vmatmul.f32.gmra.mxu0 %v1576
        %v1595 = vpop.f32.mrf.mxu0
        %v1596 = vadd.f32 %v1573, %v1595
        %1597 = vdwg.mxu0
        %v1599 = vperm.slane %v1495, 0
        %1601 = vmatpush.msra.mxu0 0.0
        %1602 = vmatpush.msra.mxu0 0.0
        %1603 = vmatpush.msra.mxu0 0.0
        %1604 = vmatpush.msra.mxu0 0.0
        %1605 = vmatpush.msra.mxu0 0.0
        %1606 = vmatpush.msra.mxu0 0.0
        %1607 = vmatpush.msra.mxu0 0.0
        %1608 = vmatpush.msra.mxu0 0.0
        %1609 = vmatpush.msra.mxu0 %v1493
        %1610 = vmatpush.msra.mxu0 %v1492
        %1611 = vmatpush.msra.mxu0 %v1491
        %1612 = vmatpush.msra.mxu0 %v1490
        %1613 = vmatpush.msra.mxu0 %v1489
        %1614 = vmatpush.msra.mxu0 %v1488
        %1615 = vmatpush.msra.mxu0 %v1487
        %1616 = vmatpush.msra.mxu0 %v1486
        %1617 = vmatmul.f32.gmra.mxu0 %v1576
        %v1618 = vpop.f32.mrf.mxu0
        %v1619 = vadd.f32 %v1599, %v1618
        %1620 = vdwg.mxu0
        %v1622 = vperm.slane %v1506, 0
        %1624 = vmatpush.msra.mxu0 0.0
        %1625 = vmatpush.msra.mxu0 0.0
        %1626 = vmatpush.msra.mxu0 0.0
        %1627 = vmatpush.msra.mxu0 0.0
        %1628 = vmatpush.msra.mxu0 0.0
        %1629 = vmatpush.msra.mxu0 0.0
        %1630 = vmatpush.msra.mxu0 0.0
        %1631 = vmatpush.msra.mxu0 0.0
        %1632 = vmatpush.msra.mxu0 %v1504
        %1633 = vmatpush.msra.mxu0 %v1503
        %1634 = vmatpush.msra.mxu0 %v1502
        %1635 = vmatpush.msra.mxu0 %v1501
        %1636 = vmatpush.msra.mxu0 %v1500
        %1637 = vmatpush.msra.mxu0 %v1499
        %1638 = vmatpush.msra.mxu0 %v1498
        %1639 = vmatpush.msra.mxu0 %v1497
        %1640 = vmatmul.f32.gmra.mxu0 %v1576
        %v1641 = vpop.f32.mrf.mxu0
        %v1642 = vadd.f32 %v1622, %v1641
        %1643 = vdwg.mxu0
        %1645 = vrot.lane.b32.xlu0 %v1596, 120
        %v1646 = vpop.permute.xlu0 %1645
        %1647 = vrot.lane.b32.xlu0 %v1596, 112
        %v1648 = vpop.permute.xlu0 %1647
        %1649 = vrot.lane.b32.xlu0 %v1596, 104
        %v1650 = vpop.permute.xlu0 %1649
        %1651 = vrot.lane.b32.xlu0 %v1596, 96
        %v1652 = vpop.permute.xlu0 %1651
        %1653 = vrot.lane.b32.xlu0 %v1596, 88
        %v1654 = vpop.permute.xlu0 %1653
        %1655 = vrot.lane.b32.xlu0 %v1596, 80
        %v1656 = vpop.permute.xlu0 %1655
        %1657 = vrot.lane.b32.xlu0 %v1596, 72
        %v1658 = vpop.permute.xlu0 %1657
        %1660 = vrot.lane.b32.xlu0 %v1619, 120
        %v1661 = vpop.permute.xlu0 %1660
        %1662 = vrot.lane.b32.xlu0 %v1619, 112
        %v1663 = vpop.permute.xlu0 %1662
        %1664 = vrot.lane.b32.xlu0 %v1619, 104
        %v1665 = vpop.permute.xlu0 %1664
        %1666 = vrot.lane.b32.xlu0 %v1619, 96
        %v1667 = vpop.permute.xlu0 %1666
        %1668 = vrot.lane.b32.xlu0 %v1619, 88
        %v1669 = vpop.permute.xlu0 %1668
        %1670 = vrot.lane.b32.xlu0 %v1619, 80
        %v1671 = vpop.permute.xlu0 %1670
        %1672 = vrot.lane.b32.xlu0 %v1619, 72
        %v1673 = vpop.permute.xlu0 %1672
        %1675 = vrot.lane.b32.xlu0 %v1642, 120
        %v1676 = vpop.permute.xlu0 %1675
        %1678 = vrot.lane.b32.xlu0 %v1642, 112
        %v1679 = vpop.permute.xlu0 %1678
        %1681 = vrot.lane.b32.xlu0 %v1642, 104
        %v1682 = vpop.permute.xlu0 %1681
        %1684 = vrot.lane.b32.xlu0 %v1642, 96
        %v1685 = vpop.permute.xlu0 %1684
        %1687 = vrot.lane.b32.xlu0 %v1642, 88
        %v1688 = vpop.permute.xlu0 %1687
        %1690 = vrot.lane.b32.xlu0 %v1642, 80
        %v1691 = vpop.permute.xlu0 %1690
        %1693 = vrot.lane.b32.xlu0 %v1642, 72
        %v1694 = vpop.permute.xlu0 %1693
        %v1696 = vsel %vm899, %v1596, 0
        %v1698 = vsel %vm899, %v1646, 0
        %v1700 = vsel %vm899, %v1648, 0
        %v1702 = vsel %vm899, %v1650, 0
        %v1704 = vsel %vm899, %v1652, 0
        %v1706 = vsel %vm899, %v1654, 0
        %v1708 = vsel %vm899, %v1656, 0
        %v1710 = vsel %vm899, %v1658, 0
        %v1712 = vsel %vm899, %v1619, 0
        %v1714 = vsel %vm899, %v1661, 0
        %v1716 = vsel %vm899, %v1663, 0
        %v1718 = vsel %vm899, %v1665, 0
        %v1720 = vsel %vm899, %v1667, 0
        %v1722 = vsel %vm899, %v1669, 0
        %v1724 = vsel %vm899, %v1671, 0
        %v1726 = vsel %vm899, %v1673, 0
        %1728 = vmatpush.xpose.msra.mxu0 0.0
        %1729 = vmatpush.xpose.msra.mxu0 0.0
        %1730 = vmatpush.xpose.msra.mxu0 0.0
        %1731 = vmatpush.xpose.msra.mxu0 0.0
        %1732 = vmatpush.xpose.msra.mxu0 0.0
        %1733 = vmatpush.xpose.msra.mxu0 0.0
        %1734 = vmatpush.xpose.msra.mxu0 0.0
        %1735 = vmatpush.xpose.msra.mxu0 0.0
        %1736 = vmatpush.xpose.msra.mxu0 %v1726
        %1737 = vmatpush.xpose.msra.mxu0 %v1724
        %1738 = vmatpush.xpose.msra.mxu0 %v1722
        %1739 = vmatpush.xpose.msra.mxu0 %v1720
        %1740 = vmatpush.xpose.msra.mxu0 %v1718
        %1741 = vmatpush.xpose.msra.mxu0 %v1716
        %1742 = vmatpush.xpose.msra.mxu0 %v1714
        %1743 = vmatpush.xpose.msra.mxu0 %v1712
        %1744 = vmatmul.f32.gmra.mxu0 %v1696
        %v1745 = vpop.f32.mrf.mxu0
        %v1746 = vadd.f32 %v675, %v1745
        %1747 = vmatmul.f32.gmra.mxu0 %v1698
        %v1748 = vpop.f32.mrf.mxu0
        %v1749 = vadd.f32 %v676, %v1748
        %1750 = vmatmul.f32.gmra.mxu0 %v1700
        %v1751 = vpop.f32.mrf.mxu0
        %v1752 = vadd.f32 %v677, %v1751
        %1753 = vmatmul.f32.gmra.mxu0 %v1702
        %v1754 = vpop.f32.mrf.mxu0
        %v1755 = vadd.f32 %v678, %v1754
        %1756 = vmatmul.f32.gmra.mxu0 %v1704
        %v1757 = vpop.f32.mrf.mxu0
        %v1758 = vadd.f32 %v679, %v1757
        %1759 = vmatmul.f32.gmra.mxu0 %v1706
        %v1760 = vpop.f32.mrf.mxu0
        %v1761 = vadd.f32 %v680, %v1760
        %1762 = vmatmul.f32.gmra.mxu0 %v1708
        %v1763 = vpop.f32.mrf.mxu0
        %v1764 = vadd.f32 %v681, %v1763
        %1765 = vmatmul.f32.gmra.mxu0 %v1710
        %v1766 = vpop.f32.mrf.mxu0
        %v1767 = vadd.f32 %v682, %v1766
        %1768 = vdwg.mxu0
        %v1769 = vsel %vm777, %v1746, -inf
        %1770 = vmax.xlane.f32.xlu0 %v1769
        %v1771 = vpop.xlane.xlu0 %1770
        %v1772 = vsel %vm777, %v1749, -inf
        %1773 = vmax.xlane.f32.xlu0 %v1772
        %v1774 = vpop.xlane.xlu0 %1773
        %v1775 = vsel %vm777, %v1752, -inf
        %1776 = vmax.xlane.f32.xlu0 %v1775
        %v1777 = vpop.xlane.xlu0 %1776
        %v1778 = vsel %vm777, %v1755, -inf
        %1779 = vmax.xlane.f32.xlu0 %v1778
        %v1780 = vpop.xlane.xlu0 %1779
        %v1781 = vsel %vm777, %v1758, -inf
        %1782 = vmax.xlane.f32.xlu0 %v1781
        %v1783 = vpop.xlane.xlu0 %1782
        %v1784 = vsel %vm777, %v1761, -inf
        %1785 = vmax.xlane.f32.xlu0 %v1784
        %v1786 = vpop.xlane.xlu0 %1785
        %v1787 = vsel %vm777, %v1764, -inf
        %1788 = vmax.xlane.f32.xlu0 %v1787
        %v1789 = vpop.xlane.xlu0 %1788
        %v1790 = vsel %vm777, %v1767, -inf
        %1791 = vmax.xlane.f32.xlu0 %v1790
        %v1792 = vpop.xlane.xlu0 %1791
        %v1793 = vsub.f32 %v1746, %v1771
        %v1794 = vsub.f32 %v1749, %v1774
        %v1795 = vsub.f32 %v1752, %v1777
        %v1796 = vsub.f32 %v1755, %v1780
        %v1797 = vsub.f32 %v1758, %v1783
        %v1798 = vsub.f32 %v1761, %v1786
        %v1799 = vsub.f32 %v1764, %v1789
        %v1800 = vsub.f32 %v1767, %v1792
        %v1801 = vmul.f32 %v1793, 1.442695
        %v1802 = vpow.pop %v1801
        %v1803 = vmul.f32 %v1794, 1.442695
        %v1804 = vpow.pop %v1803
        %v1805 = vmul.f32 %v1795, 1.442695
        %v1806 = vpow.pop %v1805
        %v1807 = vmul.f32 %v1796, 1.442695
        %v1808 = vpow.pop %v1807
        %v1809 = vmul.f32 %v1797, 1.442695
        %v1810 = vpow.pop %v1809
        %v1811 = vmul.f32 %v1798, 1.442695
        %v1812 = vpow.pop %v1811
        %v1813 = vmul.f32 %v1799, 1.442695
        %v1814 = vpow.pop %v1813
        %v1815 = vmul.f32 %v1800, 1.442695
        %v1816 = vpow.pop %v1815
        %v1818 = vsel %vm777, %v1802, 0
        %v1821 = vsel %vm777, %v1804, 0
        %v1824 = vsel %vm777, %v1806, 0
        %v1827 = vsel %vm777, %v1808, 0
        %v1830 = vsel %vm777, %v1810, 0
        %v1833 = vsel %vm777, %v1812, 0
        %v1836 = vsel %vm777, %v1814, 0
        %v1839 = vsel %vm777, %v1816, 0
        %1841 = vmatpush.msra.mxu0 0.0
        %1842 = vmatpush.msra.mxu0 0.0
        %1843 = vmatpush.msra.mxu0 0.0
        %1844 = vmatpush.msra.mxu0 0.0
        %1845 = vmatpush.msra.mxu0 0.0
        %1846 = vmatpush.msra.mxu0 0.0
        %1847 = vmatpush.msra.mxu0 0.0
        %1848 = vmatpush.msra.mxu0 0.0
        %1849 = vmatpush.msra.mxu0 %v1694
        %1850 = vmatpush.msra.mxu0 %v1691
        %1851 = vmatpush.msra.mxu0 %v1688
        %1852 = vmatpush.msra.mxu0 %v1685
        %1853 = vmatpush.msra.mxu0 %v1682
        %1854 = vmatpush.msra.mxu0 %v1679
        %1855 = vmatpush.msra.mxu0 %v1676
        %1856 = vmatpush.msra.mxu0 %v1642
        %1857 = vmatmul.f32.gmra.mxu0 %v1818
        %v1858 = vpop.f32.mrf.mxu0
        %v1859 = vadd.f32 0.0, %v1858
        %1860 = vmatmul.f32.gmra.mxu0 %v1821
        %v1861 = vpop.f32.mrf.mxu0
        %v1862 = vadd.f32 0.0, %v1861
        %1863 = vmatmul.f32.gmra.mxu0 %v1824
        %v1864 = vpop.f32.mrf.mxu0
        %v1865 = vadd.f32 0.0, %v1864
        %1866 = vmatmul.f32.gmra.mxu0 %v1827
        %v1867 = vpop.f32.mrf.mxu0
        %v1868 = vadd.f32 0.0, %v1867
        %1869 = vmatmul.f32.gmra.mxu0 %v1830
        %v1870 = vpop.f32.mrf.mxu0
        %v1871 = vadd.f32 0.0, %v1870
        %1872 = vmatmul.f32.gmra.mxu0 %v1833
        %v1873 = vpop.f32.mrf.mxu0
        %v1874 = vadd.f32 0.0, %v1873
        %1875 = vmatmul.f32.gmra.mxu0 %v1836
        %v1876 = vpop.f32.mrf.mxu0
        %v1877 = vadd.f32 0.0, %v1876
        %1878 = vmatmul.f32.gmra.mxu0 %v1839
        %v1879 = vpop.f32.mrf.mxu0
        %v1880 = vadd.f32 0.0, %v1879
        %1881 = vdwg.mxu0
        %v1882 = vsel %vm777, %v1802, 0.0
        %1883 = vadd.xlane.f32.xlu0 %v1882
        %v1884 = vpop.xlane.xlu0 %1883
        %v1885 = vsel %vm777, %v1804, 0.0
        %1886 = vadd.xlane.f32.xlu0 %v1885
        %v1887 = vpop.xlane.xlu0 %1886
        %v1888 = vsel %vm777, %v1806, 0.0
        %1889 = vadd.xlane.f32.xlu0 %v1888
        %v1890 = vpop.xlane.xlu0 %1889
        %v1891 = vsel %vm777, %v1808, 0.0
        %1892 = vadd.xlane.f32.xlu0 %v1891
        %v1893 = vpop.xlane.xlu0 %1892
        %v1894 = vsel %vm777, %v1810, 0.0
        %1895 = vadd.xlane.f32.xlu0 %v1894
        %v1896 = vpop.xlane.xlu0 %1895
        %v1897 = vsel %vm777, %v1812, 0.0
        %1898 = vadd.xlane.f32.xlu0 %v1897
        %v1899 = vpop.xlane.xlu0 %1898
        %v1900 = vsel %vm777, %v1814, 0.0
        %1901 = vadd.xlane.f32.xlu0 %v1900
        %v1902 = vpop.xlane.xlu0 %1901
        %v1903 = vsel %vm777, %v1816, 0.0
        %1904 = vadd.xlane.f32.xlu0 %v1903
        %v1905 = vpop.xlane.xlu0 %1904
        %v1906 = vrcp.pop %v1884
        %v1907 = vmul.f32 %v1884, %v1906
        %v1908 = vsub.f32 1.0, %v1907
        %v1909 = vmul.f32 %v1906, %v1908
        %v1910 = vadd.f32 %v1906, %v1909
        %vm1911 = vweird.f32 %v1884
        %vm1912 = vweird.f32 %v1906
        %vm1913 = vmor %vm1911, %vm1912
        %v1914 = vsel %vm1913, %v1906, %v1910
        %v1915 = vand.u32 2147483647, %v1884
        %vm1916 = vcmp.eq.f32.partialorder %v1915, 8.507059e+37
        %v1917 = vand.u32 %v1884, 2147483648
        %v1918 = vor.u32 1.1754944e-38, %v1917
        %v1919 = vsel %vm1916, %v1918, %v1914
        %v1920 = vrcp.pop %v1887
        %v1921 = vmul.f32 %v1887, %v1920
        %v1922 = vsub.f32 1.0, %v1921
        %v1923 = vmul.f32 %v1920, %v1922
        %v1924 = vadd.f32 %v1920, %v1923
        %vm1925 = vweird.f32 %v1887
        %vm1926 = vweird.f32 %v1920
        %vm1927 = vmor %vm1925, %vm1926
        %v1928 = vsel %vm1927, %v1920, %v1924
        %v1929 = vand.u32 2147483647, %v1887
        %vm1930 = vcmp.eq.f32.partialorder %v1929, 8.507059e+37
        %v1931 = vand.u32 %v1887, 2147483648
        %v1932 = vor.u32 1.1754944e-38, %v1931
        %v1933 = vsel %vm1930, %v1932, %v1928
        %v1934 = vrcp.pop %v1890
        %v1935 = vmul.f32 %v1890, %v1934
        %v1936 = vsub.f32 1.0, %v1935
        %v1937 = vmul.f32 %v1934, %v1936
        %v1938 = vadd.f32 %v1934, %v1937
        %vm1939 = vweird.f32 %v1890
        %vm1940 = vweird.f32 %v1934
        %vm1941 = vmor %vm1939, %vm1940
        %v1942 = vsel %vm1941, %v1934, %v1938
        %v1943 = vand.u32 2147483647, %v1890
        %vm1944 = vcmp.eq.f32.partialorder %v1943, 8.507059e+37
        %v1945 = vand.u32 %v1890, 2147483648
        %v1946 = vor.u32 1.1754944e-38, %v1945
        %v1947 = vsel %vm1944, %v1946, %v1942
        %v1948 = vrcp.pop %v1893
        %v1949 = vmul.f32 %v1893, %v1948
        %v1950 = vsub.f32 1.0, %v1949
        %v1951 = vmul.f32 %v1948, %v1950
        %v1952 = vadd.f32 %v1948, %v1951
        %vm1953 = vweird.f32 %v1893
        %vm1954 = vweird.f32 %v1948
        %vm1955 = vmor %vm1953, %vm1954
        %v1956 = vsel %vm1955, %v1948, %v1952
        %v1957 = vand.u32 2147483647, %v1893
        %vm1958 = vcmp.eq.f32.partialorder %v1957, 8.507059e+37
        %v1959 = vand.u32 %v1893, 2147483648
        %v1960 = vor.u32 1.1754944e-38, %v1959
        %v1961 = vsel %vm1958, %v1960, %v1956
        %v1962 = vrcp.pop %v1896
        %v1963 = vmul.f32 %v1896, %v1962
        %v1964 = vsub.f32 1.0, %v1963
        %v1965 = vmul.f32 %v1962, %v1964
        %v1966 = vadd.f32 %v1962, %v1965
        %vm1967 = vweird.f32 %v1896
        %vm1968 = vweird.f32 %v1962
        %vm1969 = vmor %vm1967, %vm1968
        %v1970 = vsel %vm1969, %v1962, %v1966
        %v1971 = vand.u32 2147483647, %v1896
        %vm1972 = vcmp.eq.f32.partialorder %v1971, 8.507059e+37
        %v1973 = vand.u32 %v1896, 2147483648
        %v1974 = vor.u32 1.1754944e-38, %v1973
        %v1975 = vsel %vm1972, %v1974, %v1970
        %v1976 = vrcp.pop %v1899
        %v1977 = vmul.f32 %v1899, %v1976
        %v1978 = vsub.f32 1.0, %v1977
        %v1979 = vmul.f32 %v1976, %v1978
        %v1980 = vadd.f32 %v1976, %v1979
        %vm1981 = vweird.f32 %v1899
        %vm1982 = vweird.f32 %v1976
        %vm1983 = vmor %vm1981, %vm1982
        %v1984 = vsel %vm1983, %v1976, %v1980
        %v1985 = vand.u32 2147483647, %v1899
        %vm1986 = vcmp.eq.f32.partialorder %v1985, 8.507059e+37
        %v1987 = vand.u32 %v1899, 2147483648
        %v1988 = vor.u32 1.1754944e-38, %v1987
        %v1989 = vsel %vm1986, %v1988, %v1984
        %v1990 = vrcp.pop %v1902
        %v1991 = vmul.f32 %v1902, %v1990
        %v1992 = vsub.f32 1.0, %v1991
        %v1993 = vmul.f32 %v1990, %v1992
        %v1994 = vadd.f32 %v1990, %v1993
        %vm1995 = vweird.f32 %v1902
        %vm1996 = vweird.f32 %v1990
        %vm1997 = vmor %vm1995, %vm1996
        %v1998 = vsel %vm1997, %v1990, %v1994
        %v1999 = vand.u32 2147483647, %v1902
        %vm2000 = vcmp.eq.f32.partialorder %v1999, 8.507059e+37
        %v2001 = vand.u32 %v1902, 2147483648
        %v2002 = vor.u32 1.1754944e-38, %v2001
        %v2003 = vsel %vm2000, %v2002, %v1998
        %v2004 = vrcp.pop %v1905
        %v2005 = vmul.f32 %v1905, %v2004
        %v2006 = vsub.f32 1.0, %v2005
        %v2007 = vmul.f32 %v2004, %v2006
        %v2008 = vadd.f32 %v2004, %v2007
        %vm2009 = vweird.f32 %v1905
        %vm2010 = vweird.f32 %v2004
        %vm2011 = vmor %vm2009, %vm2010
        %v2012 = vsel %vm2011, %v2004, %v2008
        %v2013 = vand.u32 2147483647, %v1905
        %vm2014 = vcmp.eq.f32.partialorder %v2013, 8.507059e+37
        %v2015 = vand.u32 %v1905, 2147483648
        %v2016 = vor.u32 1.1754944e-38, %v2015
        %v2017 = vsel %vm2014, %v2016, %v2012
        %v2018 = vmul.f32 %v1859, %v1919
        %v2019 = vmul.f32 %v1862, %v1933
        %v2020 = vmul.f32 %v1865, %v1947
        %v2021 = vmul.f32 %v1868, %v1961
        %v2022 = vmul.f32 %v1871, %v1975
        %v2023 = vmul.f32 %v1874, %v1989
        %v2024 = vmul.f32 %v1877, %v2003
        %v2025 = vmul.f32 %v1880, %v2017
        %2027 = vrot.lane.b32.xlu0 %v2019, 8
        %v2028 = vpop.permute.xlu0 %2027
        %2031 = vrot.lane.b32.xlu0 %v2020, 16
        %v2032 = vpop.permute.xlu0 %2031
        %2035 = vrot.lane.b32.xlu0 %v2021, 24
        %v2036 = vpop.permute.xlu0 %2035
        %2039 = vrot.lane.b32.xlu0 %v2022, 32
        %v2040 = vpop.permute.xlu0 %2039
        %2043 = vrot.lane.b32.xlu0 %v2023, 40
        %v2044 = vpop.permute.xlu0 %2043
        %2047 = vrot.lane.b32.xlu0 %v2024, 48
        %v2048 = vpop.permute.xlu0 %2047
        %2051 = vrot.lane.b32.xlu0 %v2025, 56
        %v2052 = vpop.permute.xlu0 %2051
        %v2054 = vsel %vm899, %v2018, %v2028
        %v2055 = vsel %vm1259, %v2054, %v2032
        %v2056 = vsel %vm1261, %v2055, %v2036
        %v2057 = vsel %vm1263, %v2056, %v2040
        %v2058 = vsel %vm1265, %v2057, %v2044
        %v2059 = vsel %vm1267, %v2058, %v2048
        %v2060 = vsel %vm1269, %v2059, %v2052
        %v2062 = vperm.slane %v1517, 0
        %v2065 = vsel %vm777, %v2060, 0
        %2067 = vmatpush.msra.mxu0 0.0
        %2068 = vmatpush.msra.mxu0 0.0
        %2069 = vmatpush.msra.mxu0 0.0
        %2070 = vmatpush.msra.mxu0 0.0
        %2071 = vmatpush.msra.mxu0 0.0
        %2072 = vmatpush.msra.mxu0 0.0
        %2073 = vmatpush.msra.mxu0 0.0
        %2074 = vmatpush.msra.mxu0 0.0
        %2075 = vmatpush.msra.mxu0 %v1515
        %2076 = vmatpush.msra.mxu0 %v1514
        %2077 = vmatpush.msra.mxu0 %v1513
        %2078 = vmatpush.msra.mxu0 %v1512
        %2079 = vmatpush.msra.mxu0 %v1511
        %2080 = vmatpush.msra.mxu0 %v1510
        %2081 = vmatpush.msra.mxu0 %v1509
        %2082 = vmatpush.msra.mxu0 %v1508
        %2083 = vmatmul.f32.gmra.mxu0 %v2065
        %v2084 = vpop.f32.mrf.mxu0
        %v2085 = vadd.f32 %v2062, %v2084
        %2086 = vdwg.mxu0
        %s2087 = sld [smem:[#allocation14 + $0x4]]
        %s2088 = sld [smem:[#allocation14 + $0x5]]
        %s2089 = sld [smem:[#allocation14 + $0x6]]
        %s2090 = sld [smem:[#allocation14 + $0x7]]
        %v2091 = vadd.f32 %v2085, %v1473
        %v2092 = vsel %vm777, %v2091, 0.0
        %2093 = vadd.xlane.f32.xlu0 %v2092
        %v2094 = vpop.xlane.xlu0 %2093
        %v2095 = vmul.f32 %v2094, %v1311
        %v2096 = vsub.f32 %v2091, %v2095
        %v2097 = vmul.f32 %v2096, %v2096
        %v2098 = vsel %vm777, %v2097, 0.0
        %2099 = vadd.xlane.f32.xlu0 %v2098
        %v2100 = vpop.xlane.xlu0 %2099
        %v2101 = vmul.f32 %v2100, 0.015873017
        %v2102 = vadd.f32 %v2101, 1e-08
        %v2103 = vrsqrt.pop %v2102
        %v2104 = vmul.f32 %v2103, %v2102
        %v2105 = vmul.f32 %v2104, %v2103
        %v2106 = vmul.f32 0.5, %v2105
        %v2107 = vsub.f32 1.5, %v2106
        %v2108 = vmul.f32 %v2103, %v2107
        %vm2109 = vweird.f32 %v2102
        %vm2110 = vweird.f32 %v2103
        %vm2111 = vmor %vm2109, %vm2110
        %v2112 = vsel %vm2111, %v2103, %v2108
        %v2113 = vmul.f32 %v2096, %v2112
        %v2114 = vstv %s2087
        %v2115 = vmul.f32 %v2114, %v2113
        %v2116 = vstv %s2088
        %v2117 = vadd.f32 %v2115, %v2116
        %v2118 = vmul.f32 %v2117, %v686
        %v2120 = vperm.slane %v1536, 0
        %v2121 = vperm.slane %v1536, 1
        %v2125 = vsel %vm777, %v2118, 0
        %2127 = vmatpush.msra.mxu0 0.0
        %2128 = vmatpush.msra.mxu0 0.0
        %2129 = vmatpush.msra.mxu0 0.0
        %2130 = vmatpush.msra.mxu0 0.0
        %2131 = vmatpush.msra.mxu0 0.0
        %2132 = vmatpush.msra.mxu0 0.0
        %2133 = vmatpush.msra.mxu0 0.0
        %2134 = vmatpush.msra.mxu0 0.0
        %2135 = vmatpush.msra.mxu0 %v1533
        %2136 = vmatpush.msra.mxu0 %v1531
        %2137 = vmatpush.msra.mxu0 %v1529
        %2138 = vmatpush.msra.mxu0 %v1527
        %2139 = vmatpush.msra.mxu0 %v1525
        %2140 = vmatpush.msra.mxu0 %v1523
        %2141 = vmatpush.msra.mxu0 %v1521
        %2142 = vmatpush.msra.mxu0 %v1519
        %2143 = vmatmul.f32.gmra.mxu0 %v2125
        %v2144 = vpop.f32.mrf.mxu0
        %v2145 = vadd.f32 %v2120, %v2144
        %2146 = vdwg.mxu0
        %2147 = vmatpush.msra.mxu0 0.0
        %2148 = vmatpush.msra.mxu0 0.0
        %2149 = vmatpush.msra.mxu0 0.0
        %2150 = vmatpush.msra.mxu0 0.0
        %2151 = vmatpush.msra.mxu0 0.0
        %2152 = vmatpush.msra.mxu0 0.0
        %2153 = vmatpush.msra.mxu0 0.0
        %2154 = vmatpush.msra.mxu0 0.0
        %2155 = vmatpush.msra.mxu0 %v1534
        %2156 = vmatpush.msra.mxu0 %v1532
        %2157 = vmatpush.msra.mxu0 %v1530
        %2158 = vmatpush.msra.mxu0 %v1528
        %2159 = vmatpush.msra.mxu0 %v1526
        %2160 = vmatpush.msra.mxu0 %v1524
        %2161 = vmatpush.msra.mxu0 %v1522
        %2162 = vmatpush.msra.mxu0 %v1520
        %2163 = vmatmul.f32.gmra.mxu0 %v2125
        %v2164 = vpop.f32.mrf.mxu0
        %v2165 = vadd.f32 %v2121, %v2164
        %2166 = vdwg.mxu0
        %v2167 = vmul.f32 %v2145, %v2145
        %v2168 = vmul.f32 %v2165, %v2165
        %v2169 = vmul.f32 %v2167, %v2145
        %v2170 = vmul.f32 %v2168, %v2165
        %v2171 = vmul.f32 %v2169, 0.044715
        %v2172 = vmul.f32 %v2170, 0.044715
        %v2173 = vadd.f32 %v2145, %v2171
        %v2174 = vadd.f32 %v2165, %v2172
        %v2175 = vmul.f32 %v2173, 0.7978846
        %v2176 = vmul.f32 %v2174, 0.7978846
        %v2177 = vtanh.pop %v2175
        %v2178 = vtanh.pop %v2176
        %v2179 = vadd.f32 %v2177, 1.0
        %v2180 = vadd.f32 %v2178, 1.0
        %v2181 = vmul.f32 %v2179, 0.5
        %v2182 = vmul.f32 %v2180, 0.5
        %v2183 = vmul.f32 %v2145, %v2181
        %v2184 = vmul.f32 %v2165, %v2182
        %v2186 = vperm.slane %v1571, 0
        %2188 = vmatpush.msra.mxu0 %v1553
        %2189 = vmatpush.msra.mxu0 %v1552
        %2190 = vmatpush.msra.mxu0 %v1551
        %2191 = vmatpush.msra.mxu0 %v1550
        %2192 = vmatpush.msra.mxu0 %v1549
        %2193 = vmatpush.msra.mxu0 %v1548
        %2194 = vmatpush.msra.mxu0 %v1547
        %2195 = vmatpush.msra.mxu0 %v1546
        %2196 = vmatpush.msra.mxu0 %v1545
        %2197 = vmatpush.msra.mxu0 %v1544
        %2198 = vmatpush.msra.mxu0 %v1543
        %2199 = vmatpush.msra.mxu0 %v1542
        %2200 = vmatpush.msra.mxu0 %v1541
        %2201 = vmatpush.msra.mxu0 %v1540
        %2202 = vmatpush.msra.mxu0 %v1539
        %2203 = vmatpush.msra.mxu0 %v1538
        %2204 = vmatmul.f32.gmra.mxu0 %v2183
        %v2205 = vpop.f32.mrf.mxu0
        %v2206 = vadd.f32 %v2186, %v2205
        %2207 = vdwg.mxu0
        %2208 = vmatpush.msra.mxu0 %v1569
        %2209 = vmatpush.msra.mxu0 %v1568
        %2210 = vmatpush.msra.mxu0 %v1567
        %2211 = vmatpush.msra.mxu0 %v1566
        %2212 = vmatpush.msra.mxu0 %v1565
        %2213 = vmatpush.msra.mxu0 %v1564
        %2214 = vmatpush.msra.mxu0 %v1563
        %2215 = vmatpush.msra.mxu0 %v1562
        %2216 = vmatpush.msra.mxu0 %v1561
        %2217 = vmatpush.msra.mxu0 %v1560
        %2218 = vmatpush.msra.mxu0 %v1559
        %2219 = vmatpush.msra.mxu0 %v1558
        %2220 = vmatpush.msra.mxu0 %v1557
        %2221 = vmatpush.msra.mxu0 %v1556
        %2222 = vmatpush.msra.mxu0 %v1555
        %2223 = vmatpush.msra.mxu0 %v1554
        %2224 = vmatmul.f32.gmra.mxu0 %v2184
        %v2225 = vpop.f32.mrf.mxu0
        %v2226 = vadd.f32 %v2206, %v2225
        %2227 = vdwg.mxu0
        %v2228 = vadd.f32 %v2226, %v2118
        %v2229 = vsel %vm777, %v2228, 0.0
        %2230 = vadd.xlane.f32.xlu0 %v2229
        %v2231 = vpop.xlane.xlu0 %2230
        %v2232 = vmul.f32 %v2231, %v1311
        %v2233 = vsub.f32 %v2228, %v2232
        %v2234 = vmul.f32 %v2233, %v2233
        %v2235 = vsel %vm777, %v2234, 0.0
        %2236 = vadd.xlane.f32.xlu0 %v2235
        %v2237 = vpop.xlane.xlu0 %2236
        %v2238 = vmul.f32 %v2237, 0.015873017
        %v2239 = vadd.f32 %v2238, 1e-08
        %v2240 = vrsqrt.pop %v2239
        %v2241 = vmul.f32 %v2240, %v2239
        %v2242 = vmul.f32 %v2241, %v2240
        %v2243 = vmul.f32 0.5, %v2242
        %v2244 = vsub.f32 1.5, %v2243
        %v2245 = vmul.f32 %v2240, %v2244
        %vm2246 = vweird.f32 %v2239
        %vm2247 = vweird.f32 %v2240
        %vm2248 = vmor %vm2246, %vm2247
        %v2249 = vsel %vm2248, %v2240, %v2245
        %v2250 = vmul.f32 %v2233, %v2249
        %v2251 = vstv %s2089
        %v2252 = vmul.f32 %v2251, %v2250
        %v2253 = vstv %s2090
        %v2254 = vadd.f32 %v2252, %v2253
        %v2255 = vmul.f32 %v2254, %v686
        %v2256 = vadd.f32 %v2255, %v1472
        %v2257 = vadd.f32 %v2256, %v673
        %s2258 = scalar_lea.vmem %s3, 128
        %v2259 = vld [vmem:[%s2258] sm:$0xff]
        %v2260 = vld [vmem:[%s2258 + $0x8] sm:$0xff]
        %v2261 = vld [vmem:[%s2258 + $0x10] sm:$0xff]
        %v2262 = vld [vmem:[%s2258 + $0x18] sm:$0xff]
        %v2263 = vld [vmem:[%s2258 + $0x20] sm:$0xff]
        %v2264 = vld [vmem:[%s2258 + $0x28] sm:$0xff]
        %v2265 = vld [vmem:[%s2258 + $0x30] sm:$0xff]
        %v2266 = vld [vmem:[%s2258 + $0x38] sm:$0xff]
        %s2267 = scalar_lea.vmem [#allocation6], 2
        %v2268 = vld [vmem:[%s2267] sm:$0x1]
        %s2269 = scalar_lea.vmem %s5, 128
        %v2270 = vld [vmem:[%s2269] sm:$0xff]
        %v2271 = vld [vmem:[%s2269 + $0x8] sm:$0xff]
        %v2272 = vld [vmem:[%s2269 + $0x10] sm:$0xff]
        %v2273 = vld [vmem:[%s2269 + $0x18] sm:$0xff]
        %v2274 = vld [vmem:[%s2269 + $0x20] sm:$0xff]
        %v2275 = vld [vmem:[%s2269 + $0x28] sm:$0xff]
        %v2276 = vld [vmem:[%s2269 + $0x30] sm:$0xff]
        %v2277 = vld [vmem:[%s2269 + $0x38] sm:$0xff]
        %s2278 = scalar_lea.vmem [#allocation8], 2
        %v2279 = vld [vmem:[%s2278] sm:$0x1]
        %s2280 = scalar_lea.vmem %s7, 128
        %v2281 = vld [vmem:[%s2280] sm:$0xff]
        %v2282 = vld [vmem:[%s2280 + $0x8] sm:$0xff]
        %v2283 = vld [vmem:[%s2280 + $0x10] sm:$0xff]
        %v2284 = vld [vmem:[%s2280 + $0x18] sm:$0xff]
        %v2285 = vld [vmem:[%s2280 + $0x20] sm:$0xff]
        %v2286 = vld [vmem:[%s2280 + $0x28] sm:$0xff]
        %v2287 = vld [vmem:[%s2280 + $0x30] sm:$0xff]
        %v2288 = vld [vmem:[%s2280 + $0x38] sm:$0xff]
        %s2289 = scalar_lea.vmem [#allocation9], 2
        %v2290 = vld [vmem:[%s2289] sm:$0x1]
        %s2291 = scalar_lea.vmem %s9, 128
        %v2292 = vld [vmem:[%s2291] sm:$0xff]
        %v2293 = vld [vmem:[%s2291 + $0x8] sm:$0xff]
        %v2294 = vld [vmem:[%s2291 + $0x10] sm:$0xff]
        %v2295 = vld [vmem:[%s2291 + $0x18] sm:$0xff]
        %v2296 = vld [vmem:[%s2291 + $0x20] sm:$0xff]
        %v2297 = vld [vmem:[%s2291 + $0x28] sm:$0xff]
        %v2298 = vld [vmem:[%s2291 + $0x30] sm:$0xff]
        %v2299 = vld [vmem:[%s2291 + $0x38] sm:$0xff]
        %s2300 = scalar_lea.vmem [#allocation11], 2
        %v2301 = vld [vmem:[%s2300] sm:$0x1]
        %s2302 = scalar_lea.vmem %s11, 256
        %v2303 = vld [vmem:[%s2302] sm:$0xff]
        %v2304 = vld [vmem:[%s2302 + $0x8] sm:$0xff]
        %v2305 = vld [vmem:[%s2302 + $0x10] sm:$0xff]
        %v2306 = vld [vmem:[%s2302 + $0x18] sm:$0xff]
        %v2307 = vld [vmem:[%s2302 + $0x20] sm:$0xff]
        %v2308 = vld [vmem:[%s2302 + $0x28] sm:$0xff]
        %v2309 = vld [vmem:[%s2302 + $0x30] sm:$0xff]
        %v2310 = vld [vmem:[%s2302 + $0x38] sm:$0xff]
        %v2311 = vld [vmem:[%s2302 + $0x40] sm:$0xff]
        %v2312 = vld [vmem:[%s2302 + $0x48] sm:$0xff]
        %v2313 = vld [vmem:[%s2302 + $0x50] sm:$0xff]
        %v2314 = vld [vmem:[%s2302 + $0x58] sm:$0xff]
        %v2315 = vld [vmem:[%s2302 + $0x60] sm:$0xff]
        %v2316 = vld [vmem:[%s2302 + $0x68] sm:$0xff]
        %v2317 = vld [vmem:[%s2302 + $0x70] sm:$0xff]
        %v2318 = vld [vmem:[%s2302 + $0x78] sm:$0xff]
        %s2319 = scalar_lea.vmem [#allocation12], 4
        %v2320 = vld [vmem:[%s2319] sm:$0x3]
        %s2321 = scalar_lea.vmem %s13, 512
        %v2322 = vld [vmem:[%s2321] sm:$0xff]
        %v2323 = vld [vmem:[%s2321 + $0x8] sm:$0xff]
        %v2324 = vld [vmem:[%s2321 + $0x10] sm:$0xff]
        %v2325 = vld [vmem:[%s2321 + $0x18] sm:$0xff]
        %v2326 = vld [vmem:[%s2321 + $0x20] sm:$0xff]
        %v2327 = vld [vmem:[%s2321 + $0x28] sm:$0xff]
        %v2328 = vld [vmem:[%s2321 + $0x30] sm:$0xff]
        %v2329 = vld [vmem:[%s2321 + $0x38] sm:$0xff]
        %v2330 = vld [vmem:[%s2321 + $0x40] sm:$0xff]
        %v2331 = vld [vmem:[%s2321 + $0x48] sm:$0xff]
        %v2332 = vld [vmem:[%s2321 + $0x50] sm:$0xff]
        %v2333 = vld [vmem:[%s2321 + $0x58] sm:$0xff]
        %v2334 = vld [vmem:[%s2321 + $0x60] sm:$0xff]
        %v2335 = vld [vmem:[%s2321 + $0x68] sm:$0xff]
        %v2336 = vld [vmem:[%s2321 + $0x70] sm:$0xff]
        %v2337 = vld [vmem:[%s2321 + $0x78] sm:$0xff]
        %v2338 = vld [vmem:[%s2321 + $0x80] sm:$0xff]
        %v2339 = vld [vmem:[%s2321 + $0x88] sm:$0xff]
        %v2340 = vld [vmem:[%s2321 + $0x90] sm:$0xff]
        %v2341 = vld [vmem:[%s2321 + $0x98] sm:$0xff]
        %v2342 = vld [vmem:[%s2321 + $0xa0] sm:$0xff]
        %v2343 = vld [vmem:[%s2321 + $0xa8] sm:$0xff]
        %v2344 = vld [vmem:[%s2321 + $0xb0] sm:$0xff]
        %v2345 = vld [vmem:[%s2321 + $0xb8] sm:$0xff]
        %v2346 = vld [vmem:[%s2321 + $0xc0] sm:$0xff]
        %v2347 = vld [vmem:[%s2321 + $0xc8] sm:$0xff]
        %v2348 = vld [vmem:[%s2321 + $0xd0] sm:$0xff]
        %v2349 = vld [vmem:[%s2321 + $0xd8] sm:$0xff]
        %v2350 = vld [vmem:[%s2321 + $0xe0] sm:$0xff]
        %v2351 = vld [vmem:[%s2321 + $0xe8] sm:$0xff]
        %v2352 = vld [vmem:[%s2321 + $0xf0] sm:$0xff]
        %v2353 = vld [vmem:[%s2321 + $0xf8] sm:$0xff]
        %s2354 = scalar_lea.vmem %s14, 2
        %v2355 = vld [vmem:[%s2354] sm:$0x1]
        %v2357 = vperm.slane %v2268, 0
        %v2360 = vsel %vm777, %v2257, 0
        %2362 = vmatpush.msra.mxu0 0.0
        %2363 = vmatpush.msra.mxu0 0.0
        %2364 = vmatpush.msra.mxu0 0.0
        %2365 = vmatpush.msra.mxu0 0.0
        %2366 = vmatpush.msra.mxu0 0.0
        %2367 = vmatpush.msra.mxu0 0.0
        %2368 = vmatpush.msra.mxu0 0.0
        %2369 = vmatpush.msra.mxu0 0.0
        %2370 = vmatpush.msra.mxu0 %v2266
        %2371 = vmatpush.msra.mxu0 %v2265
        %2372 = vmatpush.msra.mxu0 %v2264
        %2373 = vmatpush.msra.mxu0 %v2263
        %2374 = vmatpush.msra.mxu0 %v2262
        %2375 = vmatpush.msra.mxu0 %v2261
        %2376 = vmatpush.msra.mxu0 %v2260
        %2377 = vmatpush.msra.mxu0 %v2259
        %2378 = vmatmul.f32.gmra.mxu0 %v2360
        %v2379 = vpop.f32.mrf.mxu0
        %v2380 = vadd.f32 %v2357, %v2379
        %2381 = vdwg.mxu0
        %v2383 = vperm.slane %v2279, 0
        %2385 = vmatpush.msra.mxu0 0.0
        %2386 = vmatpush.msra.mxu0 0.0
        %2387 = vmatpush.msra.mxu0 0.0
        %2388 = vmatpush.msra.mxu0 0.0
        %2389 = vmatpush.msra.mxu0 0.0
        %2390 = vmatpush.msra.mxu0 0.0
        %2391 = vmatpush.msra.mxu0 0.0
        %2392 = vmatpush.msra.mxu0 0.0
        %2393 = vmatpush.msra.mxu0 %v2277
        %2394 = vmatpush.msra.mxu0 %v2276
        %2395 = vmatpush.msra.mxu0 %v2275
        %2396 = vmatpush.msra.mxu0 %v2274
        %2397 = vmatpush.msra.mxu0 %v2273
        %2398 = vmatpush.msra.mxu0 %v2272
        %2399 = vmatpush.msra.mxu0 %v2271
        %2400 = vmatpush.msra.mxu0 %v2270
        %2401 = vmatmul.f32.gmra.mxu0 %v2360
        %v2402 = vpop.f32.mrf.mxu0
        %v2403 = vadd.f32 %v2383, %v2402
        %2404 = vdwg.mxu0
        %v2406 = vperm.slane %v2290, 0
        %2408 = vmatpush.msra.mxu0 0.0
        %2409 = vmatpush.msra.mxu0 0.0
        %2410 = vmatpush.msra.mxu0 0.0
        %2411 = vmatpush.msra.mxu0 0.0
        %2412 = vmatpush.msra.mxu0 0.0
        %2413 = vmatpush.msra.mxu0 0.0
        %2414 = vmatpush.msra.mxu0 0.0
        %2415 = vmatpush.msra.mxu0 0.0
        %2416 = vmatpush.msra.mxu0 %v2288
        %2417 = vmatpush.msra.mxu0 %v2287
        %2418 = vmatpush.msra.mxu0 %v2286
        %2419 = vmatpush.msra.mxu0 %v2285
        %2420 = vmatpush.msra.mxu0 %v2284
        %2421 = vmatpush.msra.mxu0 %v2283
        %2422 = vmatpush.msra.mxu0 %v2282
        %2423 = vmatpush.msra.mxu0 %v2281
        %2424 = vmatmul.f32.gmra.mxu0 %v2360
        %v2425 = vpop.f32.mrf.mxu0
        %v2426 = vadd.f32 %v2406, %v2425
        %2427 = vdwg.mxu0
        %2429 = vrot.lane.b32.xlu0 %v2380, 120
        %v2430 = vpop.permute.xlu0 %2429
        %2431 = vrot.lane.b32.xlu0 %v2380, 112
        %v2432 = vpop.permute.xlu0 %2431
        %2433 = vrot.lane.b32.xlu0 %v2380, 104
        %v2434 = vpop.permute.xlu0 %2433
        %2435 = vrot.lane.b32.xlu0 %v2380, 96
        %v2436 = vpop.permute.xlu0 %2435
        %2437 = vrot.lane.b32.xlu0 %v2380, 88
        %v2438 = vpop.permute.xlu0 %2437
        %2439 = vrot.lane.b32.xlu0 %v2380, 80
        %v2440 = vpop.permute.xlu0 %2439
        %2441 = vrot.lane.b32.xlu0 %v2380, 72
        %v2442 = vpop.permute.xlu0 %2441
        %2444 = vrot.lane.b32.xlu0 %v2403, 120
        %v2445 = vpop.permute.xlu0 %2444
        %2446 = vrot.lane.b32.xlu0 %v2403, 112
        %v2447 = vpop.permute.xlu0 %2446
        %2448 = vrot.lane.b32.xlu0 %v2403, 104
        %v2449 = vpop.permute.xlu0 %2448
        %2450 = vrot.lane.b32.xlu0 %v2403, 96
        %v2451 = vpop.permute.xlu0 %2450
        %2452 = vrot.lane.b32.xlu0 %v2403, 88
        %v2453 = vpop.permute.xlu0 %2452
        %2454 = vrot.lane.b32.xlu0 %v2403, 80
        %v2455 = vpop.permute.xlu0 %2454
        %2456 = vrot.lane.b32.xlu0 %v2403, 72
        %v2457 = vpop.permute.xlu0 %2456
        %2459 = vrot.lane.b32.xlu0 %v2426, 120
        %v2460 = vpop.permute.xlu0 %2459
        %2462 = vrot.lane.b32.xlu0 %v2426, 112
        %v2463 = vpop.permute.xlu0 %2462
        %2465 = vrot.lane.b32.xlu0 %v2426, 104
        %v2466 = vpop.permute.xlu0 %2465
        %2468 = vrot.lane.b32.xlu0 %v2426, 96
        %v2469 = vpop.permute.xlu0 %2468
        %2471 = vrot.lane.b32.xlu0 %v2426, 88
        %v2472 = vpop.permute.xlu0 %2471
        %2474 = vrot.lane.b32.xlu0 %v2426, 80
        %v2475 = vpop.permute.xlu0 %2474
        %2477 = vrot.lane.b32.xlu0 %v2426, 72
        %v2478 = vpop.permute.xlu0 %2477
        %v2480 = vsel %vm899, %v2380, 0
        %v2482 = vsel %vm899, %v2430, 0
        %v2484 = vsel %vm899, %v2432, 0
        %v2486 = vsel %vm899, %v2434, 0
        %v2488 = vsel %vm899, %v2436, 0
        %v2490 = vsel %vm899, %v2438, 0
        %v2492 = vsel %vm899, %v2440, 0
        %v2494 = vsel %vm899, %v2442, 0
        %v2496 = vsel %vm899, %v2403, 0
        %v2498 = vsel %vm899, %v2445, 0
        %v2500 = vsel %vm899, %v2447, 0
        %v2502 = vsel %vm899, %v2449, 0
        %v2504 = vsel %vm899, %v2451, 0
        %v2506 = vsel %vm899, %v2453, 0
        %v2508 = vsel %vm899, %v2455, 0
        %v2510 = vsel %vm899, %v2457, 0
        %2512 = vmatpush.xpose.msra.mxu0 0.0
        %2513 = vmatpush.xpose.msra.mxu0 0.0
        %2514 = vmatpush.xpose.msra.mxu0 0.0
        %2515 = vmatpush.xpose.msra.mxu0 0.0
        %2516 = vmatpush.xpose.msra.mxu0 0.0
        %2517 = vmatpush.xpose.msra.mxu0 0.0
        %2518 = vmatpush.xpose.msra.mxu0 0.0
        %2519 = vmatpush.xpose.msra.mxu0 0.0
        %2520 = vmatpush.xpose.msra.mxu0 %v2510
        %2521 = vmatpush.xpose.msra.mxu0 %v2508
        %2522 = vmatpush.xpose.msra.mxu0 %v2506
        %2523 = vmatpush.xpose.msra.mxu0 %v2504
        %2524 = vmatpush.xpose.msra.mxu0 %v2502
        %2525 = vmatpush.xpose.msra.mxu0 %v2500
        %2526 = vmatpush.xpose.msra.mxu0 %v2498
        %2527 = vmatpush.xpose.msra.mxu0 %v2496
        %2528 = vmatmul.f32.gmra.mxu0 %v2480
        %v2529 = vpop.f32.mrf.mxu0
        %v2530 = vadd.f32 %v675, %v2529
        %2531 = vmatmul.f32.gmra.mxu0 %v2482
        %v2532 = vpop.f32.mrf.mxu0
        %v2533 = vadd.f32 %v676, %v2532
        %2534 = vmatmul.f32.gmra.mxu0 %v2484
        %v2535 = vpop.f32.mrf.mxu0
        %v2536 = vadd.f32 %v677, %v2535
        %2537 = vmatmul.f32.gmra.mxu0 %v2486
        %v2538 = vpop.f32.mrf.mxu0
        %v2539 = vadd.f32 %v678, %v2538
        %2540 = vmatmul.f32.gmra.mxu0 %v2488
        %v2541 = vpop.f32.mrf.mxu0
        %v2542 = vadd.f32 %v679, %v2541
        %2543 = vmatmul.f32.gmra.mxu0 %v2490
        %v2544 = vpop.f32.mrf.mxu0
        %v2545 = vadd.f32 %v680, %v2544
        %2546 = vmatmul.f32.gmra.mxu0 %v2492
        %v2547 = vpop.f32.mrf.mxu0
        %v2548 = vadd.f32 %v681, %v2547
        %2549 = vmatmul.f32.gmra.mxu0 %v2494
        %v2550 = vpop.f32.mrf.mxu0
        %v2551 = vadd.f32 %v682, %v2550
        %2552 = vdwg.mxu0
        %v2553 = vsel %vm777, %v2530, -inf
        %2554 = vmax.xlane.f32.xlu0 %v2553
        %v2555 = vpop.xlane.xlu0 %2554
        %v2556 = vsel %vm777, %v2533, -inf
        %2557 = vmax.xlane.f32.xlu0 %v2556
        %v2558 = vpop.xlane.xlu0 %2557
        %v2559 = vsel %vm777, %v2536, -inf
        %2560 = vmax.xlane.f32.xlu0 %v2559
        %v2561 = vpop.xlane.xlu0 %2560
        %v2562 = vsel %vm777, %v2539, -inf
        %2563 = vmax.xlane.f32.xlu0 %v2562
        %v2564 = vpop.xlane.xlu0 %2563
        %v2565 = vsel %vm777, %v2542, -inf
        %2566 = vmax.xlane.f32.xlu0 %v2565
        %v2567 = vpop.xlane.xlu0 %2566
        %v2568 = vsel %vm777, %v2545, -inf
        %2569 = vmax.xlane.f32.xlu0 %v2568
        %v2570 = vpop.xlane.xlu0 %2569
        %v2571 = vsel %vm777, %v2548, -inf
        %2572 = vmax.xlane.f32.xlu0 %v2571
        %v2573 = vpop.xlane.xlu0 %2572
        %v2574 = vsel %vm777, %v2551, -inf
        %2575 = vmax.xlane.f32.xlu0 %v2574
        %v2576 = vpop.xlane.xlu0 %2575
        %v2577 = vsub.f32 %v2530, %v2555
        %v2578 = vsub.f32 %v2533, %v2558
        %v2579 = vsub.f32 %v2536, %v2561
        %v2580 = vsub.f32 %v2539, %v2564
        %v2581 = vsub.f32 %v2542, %v2567
        %v2582 = vsub.f32 %v2545, %v2570
        %v2583 = vsub.f32 %v2548, %v2573
        %v2584 = vsub.f32 %v2551, %v2576
        %v2585 = vmul.f32 %v2577, 1.442695
        %v2586 = vpow.pop %v2585
        %v2587 = vmul.f32 %v2578, 1.442695
        %v2588 = vpow.pop %v2587
        %v2589 = vmul.f32 %v2579, 1.442695
        %v2590 = vpow.pop %v2589
        %v2591 = vmul.f32 %v2580, 1.442695
        %v2592 = vpow.pop %v2591
        %v2593 = vmul.f32 %v2581, 1.442695
        %v2594 = vpow.pop %v2593
        %v2595 = vmul.f32 %v2582, 1.442695
        %v2596 = vpow.pop %v2595
        %v2597 = vmul.f32 %v2583, 1.442695
        %v2598 = vpow.pop %v2597
        %v2599 = vmul.f32 %v2584, 1.442695
        %v2600 = vpow.pop %v2599
        %v2602 = vsel %vm777, %v2586, 0
        %v2605 = vsel %vm777, %v2588, 0
        %v2608 = vsel %vm777, %v2590, 0
        %v2611 = vsel %vm777, %v2592, 0
        %v2614 = vsel %vm777, %v2594, 0
        %v2617 = vsel %vm777, %v2596, 0
        %v2620 = vsel %vm777, %v2598, 0
        %v2623 = vsel %vm777, %v2600, 0
        %2625 = vmatpush.msra.mxu0 0.0
        %2626 = vmatpush.msra.mxu0 0.0
        %2627 = vmatpush.msra.mxu0 0.0
        %2628 = vmatpush.msra.mxu0 0.0
        %2629 = vmatpush.msra.mxu0 0.0
        %2630 = vmatpush.msra.mxu0 0.0
        %2631 = vmatpush.msra.mxu0 0.0
        %2632 = vmatpush.msra.mxu0 0.0
        %2633 = vmatpush.msra.mxu0 %v2478
        %2634 = vmatpush.msra.mxu0 %v2475
        %2635 = vmatpush.msra.mxu0 %v2472
        %2636 = vmatpush.msra.mxu0 %v2469
        %2637 = vmatpush.msra.mxu0 %v2466
        %2638 = vmatpush.msra.mxu0 %v2463
        %2639 = vmatpush.msra.mxu0 %v2460
        %2640 = vmatpush.msra.mxu0 %v2426
        %2641 = vmatmul.f32.gmra.mxu0 %v2602
        %v2642 = vpop.f32.mrf.mxu0
        %v2643 = vadd.f32 0.0, %v2642
        %2644 = vmatmul.f32.gmra.mxu0 %v2605
        %v2645 = vpop.f32.mrf.mxu0
        %v2646 = vadd.f32 0.0, %v2645
        %2647 = vmatmul.f32.gmra.mxu0 %v2608
        %v2648 = vpop.f32.mrf.mxu0
        %v2649 = vadd.f32 0.0, %v2648
        %2650 = vmatmul.f32.gmra.mxu0 %v2611
        %v2651 = vpop.f32.mrf.mxu0
        %v2652 = vadd.f32 0.0, %v2651
        %2653 = vmatmul.f32.gmra.mxu0 %v2614
        %v2654 = vpop.f32.mrf.mxu0
        %v2655 = vadd.f32 0.0, %v2654
        %2656 = vmatmul.f32.gmra.mxu0 %v2617
        %v2657 = vpop.f32.mrf.mxu0
        %v2658 = vadd.f32 0.0, %v2657
        %2659 = vmatmul.f32.gmra.mxu0 %v2620
        %v2660 = vpop.f32.mrf.mxu0
        %v2661 = vadd.f32 0.0, %v2660
        %2662 = vmatmul.f32.gmra.mxu0 %v2623
        %v2663 = vpop.f32.mrf.mxu0
        %v2664 = vadd.f32 0.0, %v2663
        %2665 = vdwg.mxu0
        %v2666 = vsel %vm777, %v2586, 0.0
        %2667 = vadd.xlane.f32.xlu0 %v2666
        %v2668 = vpop.xlane.xlu0 %2667
        %v2669 = vsel %vm777, %v2588, 0.0
        %2670 = vadd.xlane.f32.xlu0 %v2669
        %v2671 = vpop.xlane.xlu0 %2670
        %v2672 = vsel %vm777, %v2590, 0.0
        %2673 = vadd.xlane.f32.xlu0 %v2672
        %v2674 = vpop.xlane.xlu0 %2673
        %v2675 = vsel %vm777, %v2592, 0.0
        %2676 = vadd.xlane.f32.xlu0 %v2675
        %v2677 = vpop.xlane.xlu0 %2676
        %v2678 = vsel %vm777, %v2594, 0.0
        %2679 = vadd.xlane.f32.xlu0 %v2678
        %v2680 = vpop.xlane.xlu0 %2679
        %v2681 = vsel %vm777, %v2596, 0.0
        %2682 = vadd.xlane.f32.xlu0 %v2681
        %v2683 = vpop.xlane.xlu0 %2682
        %v2684 = vsel %vm777, %v2598, 0.0
        %2685 = vadd.xlane.f32.xlu0 %v2684
        %v2686 = vpop.xlane.xlu0 %2685
        %v2687 = vsel %vm777, %v2600, 0.0
        %2688 = vadd.xlane.f32.xlu0 %v2687
        %v2689 = vpop.xlane.xlu0 %2688
        %v2690 = vrcp.pop %v2668
        %v2691 = vmul.f32 %v2668, %v2690
        %v2692 = vsub.f32 1.0, %v2691
        %v2693 = vmul.f32 %v2690, %v2692
        %v2694 = vadd.f32 %v2690, %v2693
        %vm2695 = vweird.f32 %v2668
        %vm2696 = vweird.f32 %v2690
        %vm2697 = vmor %vm2695, %vm2696
        %v2698 = vsel %vm2697, %v2690, %v2694
        %v2699 = vand.u32 2147483647, %v2668
        %vm2700 = vcmp.eq.f32.partialorder %v2699, 8.507059e+37
        %v2701 = vand.u32 %v2668, 2147483648
        %v2702 = vor.u32 1.1754944e-38, %v2701
        %v2703 = vsel %vm2700, %v2702, %v2698
        %v2704 = vrcp.pop %v2671
        %v2705 = vmul.f32 %v2671, %v2704
        %v2706 = vsub.f32 1.0, %v2705
        %v2707 = vmul.f32 %v2704, %v2706
        %v2708 = vadd.f32 %v2704, %v2707
        %vm2709 = vweird.f32 %v2671
        %vm2710 = vweird.f32 %v2704
        %vm2711 = vmor %vm2709, %vm2710
        %v2712 = vsel %vm2711, %v2704, %v2708
        %v2713 = vand.u32 2147483647, %v2671
        %vm2714 = vcmp.eq.f32.partialorder %v2713, 8.507059e+37
        %v2715 = vand.u32 %v2671, 2147483648
        %v2716 = vor.u32 1.1754944e-38, %v2715
        %v2717 = vsel %vm2714, %v2716, %v2712
        %v2718 = vrcp.pop %v2674
        %v2719 = vmul.f32 %v2674, %v2718
        %v2720 = vsub.f32 1.0, %v2719
        %v2721 = vmul.f32 %v2718, %v2720
        %v2722 = vadd.f32 %v2718, %v2721
        %vm2723 = vweird.f32 %v2674
        %vm2724 = vweird.f32 %v2718
        %vm2725 = vmor %vm2723, %vm2724
        %v2726 = vsel %vm2725, %v2718, %v2722
        %v2727 = vand.u32 2147483647, %v2674
        %vm2728 = vcmp.eq.f32.partialorder %v2727, 8.507059e+37
        %v2729 = vand.u32 %v2674, 2147483648
        %v2730 = vor.u32 1.1754944e-38, %v2729
        %v2731 = vsel %vm2728, %v2730, %v2726
        %v2732 = vrcp.pop %v2677
        %v2733 = vmul.f32 %v2677, %v2732
        %v2734 = vsub.f32 1.0, %v2733
        %v2735 = vmul.f32 %v2732, %v2734
        %v2736 = vadd.f32 %v2732, %v2735
        %vm2737 = vweird.f32 %v2677
        %vm2738 = vweird.f32 %v2732
        %vm2739 = vmor %vm2737, %vm2738
        %v2740 = vsel %vm2739, %v2732, %v2736
        %v2741 = vand.u32 2147483647, %v2677
        %vm2742 = vcmp.eq.f32.partialorder %v2741, 8.507059e+37
        %v2743 = vand.u32 %v2677, 2147483648
        %v2744 = vor.u32 1.1754944e-38, %v2743
        %v2745 = vsel %vm2742, %v2744, %v2740
        %v2746 = vrcp.pop %v2680
        %v2747 = vmul.f32 %v2680, %v2746
        %v2748 = vsub.f32 1.0, %v2747
        %v2749 = vmul.f32 %v2746, %v2748
        %v2750 = vadd.f32 %v2746, %v2749
        %vm2751 = vweird.f32 %v2680
        %vm2752 = vweird.f32 %v2746
        %vm2753 = vmor %vm2751, %vm2752
        %v2754 = vsel %vm2753, %v2746, %v2750
        %v2755 = vand.u32 2147483647, %v2680
        %vm2756 = vcmp.eq.f32.partialorder %v2755, 8.507059e+37
        %v2757 = vand.u32 %v2680, 2147483648
        %v2758 = vor.u32 1.1754944e-38, %v2757
        %v2759 = vsel %vm2756, %v2758, %v2754
        %v2760 = vrcp.pop %v2683
        %v2761 = vmul.f32 %v2683, %v2760
        %v2762 = vsub.f32 1.0, %v2761
        %v2763 = vmul.f32 %v2760, %v2762
        %v2764 = vadd.f32 %v2760, %v2763
        %vm2765 = vweird.f32 %v2683
        %vm2766 = vweird.f32 %v2760
        %vm2767 = vmor %vm2765, %vm2766
        %v2768 = vsel %vm2767, %v2760, %v2764
        %v2769 = vand.u32 2147483647, %v2683
        %vm2770 = vcmp.eq.f32.partialorder %v2769, 8.507059e+37
        %v2771 = vand.u32 %v2683, 2147483648
        %v2772 = vor.u32 1.1754944e-38, %v2771
        %v2773 = vsel %vm2770, %v2772, %v2768
        %v2774 = vrcp.pop %v2686
        %v2775 = vmul.f32 %v2686, %v2774
        %v2776 = vsub.f32 1.0, %v2775
        %v2777 = vmul.f32 %v2774, %v2776
        %v2778 = vadd.f32 %v2774, %v2777
        %vm2779 = vweird.f32 %v2686
        %vm2780 = vweird.f32 %v2774
        %vm2781 = vmor %vm2779, %vm2780
        %v2782 = vsel %vm2781, %v2774, %v2778
        %v2783 = vand.u32 2147483647, %v2686
        %vm2784 = vcmp.eq.f32.partialorder %v2783, 8.507059e+37
        %v2785 = vand.u32 %v2686, 2147483648
        %v2786 = vor.u32 1.1754944e-38, %v2785
        %v2787 = vsel %vm2784, %v2786, %v2782
        %v2788 = vrcp.pop %v2689
        %v2789 = vmul.f32 %v2689, %v2788
        %v2790 = vsub.f32 1.0, %v2789
        %v2791 = vmul.f32 %v2788, %v2790
        %v2792 = vadd.f32 %v2788, %v2791
        %vm2793 = vweird.f32 %v2689
        %vm2794 = vweird.f32 %v2788
        %vm2795 = vmor %vm2793, %vm2794
        %v2796 = vsel %vm2795, %v2788, %v2792
        %v2797 = vand.u32 2147483647, %v2689
        %vm2798 = vcmp.eq.f32.partialorder %v2797, 8.507059e+37
        %v2799 = vand.u32 %v2689, 2147483648
        %v2800 = vor.u32 1.1754944e-38, %v2799
        %v2801 = vsel %vm2798, %v2800, %v2796
        %v2802 = vmul.f32 %v2643, %v2703
        %v2803 = vmul.f32 %v2646, %v2717
        %v2804 = vmul.f32 %v2649, %v2731
        %v2805 = vmul.f32 %v2652, %v2745
        %v2806 = vmul.f32 %v2655, %v2759
        %v2807 = vmul.f32 %v2658, %v2773
        %v2808 = vmul.f32 %v2661, %v2787
        %v2809 = vmul.f32 %v2664, %v2801
        %2811 = vrot.lane.b32.xlu0 %v2803, 8
        %v2812 = vpop.permute.xlu0 %2811
        %2815 = vrot.lane.b32.xlu0 %v2804, 16
        %v2816 = vpop.permute.xlu0 %2815
        %2819 = vrot.lane.b32.xlu0 %v2805, 24
        %v2820 = vpop.permute.xlu0 %2819
        %2823 = vrot.lane.b32.xlu0 %v2806, 32
        %v2824 = vpop.permute.xlu0 %2823
        %2827 = vrot.lane.b32.xlu0 %v2807, 40
        %v2828 = vpop.permute.xlu0 %2827
        %2831 = vrot.lane.b32.xlu0 %v2808, 48
        %v2832 = vpop.permute.xlu0 %2831
        %2835 = vrot.lane.b32.xlu0 %v2809, 56
        %v2836 = vpop.permute.xlu0 %2835
        %v2838 = vsel %vm899, %v2802, %v2812
        %v2839 = vsel %vm1259, %v2838, %v2816
        %v2840 = vsel %vm1261, %v2839, %v2820
        %v2841 = vsel %vm1263, %v2840, %v2824
        %v2842 = vsel %vm1265, %v2841, %v2828
        %v2843 = vsel %vm1267, %v2842, %v2832
        %v2844 = vsel %vm1269, %v2843, %v2836
        %v2846 = vperm.slane %v2301, 0
        %v2849 = vsel %vm777, %v2844, 0
        %2851 = vmatpush.msra.mxu0 0.0
        %2852 = vmatpush.msra.mxu0 0.0
        %2853 = vmatpush.msra.mxu0 0.0
        %2854 = vmatpush.msra.mxu0 0.0
        %2855 = vmatpush.msra.mxu0 0.0
        %2856 = vmatpush.msra.mxu0 0.0
        %2857 = vmatpush.msra.mxu0 0.0
        %2858 = vmatpush.msra.mxu0 0.0
        %2859 = vmatpush.msra.mxu0 %v2299
        %2860 = vmatpush.msra.mxu0 %v2298
        %2861 = vmatpush.msra.mxu0 %v2297
        %2862 = vmatpush.msra.mxu0 %v2296
        %2863 = vmatpush.msra.mxu0 %v2295
        %2864 = vmatpush.msra.mxu0 %v2294
        %2865 = vmatpush.msra.mxu0 %v2293
        %2866 = vmatpush.msra.mxu0 %v2292
        %2867 = vmatmul.f32.gmra.mxu0 %v2849
        %v2868 = vpop.f32.mrf.mxu0
        %v2869 = vadd.f32 %v2846, %v2868
        %2870 = vdwg.mxu0
        %s2871 = sld [smem:[#allocation14 + $0x8]]
        %s2872 = sld [smem:[#allocation14 + $0x9]]
        %s2873 = sld [smem:[#allocation14 + $0xa]]
        %s2874 = sld [smem:[#allocation14 + $0xb]]
        %v2875 = vadd.f32 %v2869, %v2257
        %v2876 = vsel %vm777, %v2875, 0.0
        %2877 = vadd.xlane.f32.xlu0 %v2876
        %v2878 = vpop.xlane.xlu0 %2877
        %v2879 = vmul.f32 %v2878, %v1311
        %v2880 = vsub.f32 %v2875, %v2879
        %v2881 = vmul.f32 %v2880, %v2880
        %v2882 = vsel %vm777, %v2881, 0.0
        %2883 = vadd.xlane.f32.xlu0 %v2882
        %v2884 = vpop.xlane.xlu0 %2883
        %v2885 = vmul.f32 %v2884, 0.015873017
        %v2886 = vadd.f32 %v2885, 1e-08
        %v2887 = vrsqrt.pop %v2886
        %v2888 = vmul.f32 %v2887, %v2886
        %v2889 = vmul.f32 %v2888, %v2887
        %v2890 = vmul.f32 0.5, %v2889
        %v2891 = vsub.f32 1.5, %v2890
        %v2892 = vmul.f32 %v2887, %v2891
        %vm2893 = vweird.f32 %v2886
        %vm2894 = vweird.f32 %v2887
        %vm2895 = vmor %vm2893, %vm2894
        %v2896 = vsel %vm2895, %v2887, %v2892
        %v2897 = vmul.f32 %v2880, %v2896
        %v2898 = vstv %s2871
        %v2899 = vmul.f32 %v2898, %v2897
        %v2900 = vstv %s2872
        %v2901 = vadd.f32 %v2899, %v2900
        %v2902 = vmul.f32 %v2901, %v686
        %v2904 = vperm.slane %v2320, 0
        %v2905 = vperm.slane %v2320, 1
        %v2909 = vsel %vm777, %v2902, 0
        %2911 = vmatpush.msra.mxu0 0.0
        %2912 = vmatpush.msra.mxu0 0.0
        %2913 = vmatpush.msra.mxu0 0.0
        %2914 = vmatpush.msra.mxu0 0.0
        %2915 = vmatpush.msra.mxu0 0.0
        %2916 = vmatpush.msra.mxu0 0.0
        %2917 = vmatpush.msra.mxu0 0.0
        %2918 = vmatpush.msra.mxu0 0.0
        %2919 = vmatpush.msra.mxu0 %v2317
        %2920 = vmatpush.msra.mxu0 %v2315
        %2921 = vmatpush.msra.mxu0 %v2313
        %2922 = vmatpush.msra.mxu0 %v2311
        %2923 = vmatpush.msra.mxu0 %v2309
        %2924 = vmatpush.msra.mxu0 %v2307
        %2925 = vmatpush.msra.mxu0 %v2305
        %2926 = vmatpush.msra.mxu0 %v2303
        %2927 = vmatmul.f32.gmra.mxu0 %v2909
        %v2928 = vpop.f32.mrf.mxu0
        %v2929 = vadd.f32 %v2904, %v2928
        %2930 = vdwg.mxu0
        %2931 = vmatpush.msra.mxu0 0.0
        %2932 = vmatpush.msra.mxu0 0.0
        %2933 = vmatpush.msra.mxu0 0.0
        %2934 = vmatpush.msra.mxu0 0.0
        %2935 = vmatpush.msra.mxu0 0.0
        %2936 = vmatpush.msra.mxu0 0.0
        %2937 = vmatpush.msra.mxu0 0.0
        %2938 = vmatpush.msra.mxu0 0.0
        %2939 = vmatpush.msra.mxu0 %v2318
        %2940 = vmatpush.msra.mxu0 %v2316
        %2941 = vmatpush.msra.mxu0 %v2314
        %2942 = vmatpush.msra.mxu0 %v2312
        %2943 = vmatpush.msra.mxu0 %v2310
        %2944 = vmatpush.msra.mxu0 %v2308
        %2945 = vmatpush.msra.mxu0 %v2306
        %2946 = vmatpush.msra.mxu0 %v2304
        %2947 = vmatmul.f32.gmra.mxu0 %v2909
        %v2948 = vpop.f32.mrf.mxu0
        %v2949 = vadd.f32 %v2905, %v2948
        %2950 = vdwg.mxu0
        %v2951 = vmul.f32 %v2929, %v2929
        %v2952 = vmul.f32 %v2949, %v2949
        %v2953 = vmul.f32 %v2951, %v2929
        %v2954 = vmul.f32 %v2952, %v2949
        %v2955 = vmul.f32 %v2953, 0.044715
        %v2956 = vmul.f32 %v2954, 0.044715
        %v2957 = vadd.f32 %v2929, %v2955
        %v2958 = vadd.f32 %v2949, %v2956
        %v2959 = vmul.f32 %v2957, 0.7978846
        %v2960 = vmul.f32 %v2958, 0.7978846
        %v2961 = vtanh.pop %v2959
        %v2962 = vtanh.pop %v2960
        %v2963 = vadd.f32 %v2961, 1.0
        %v2964 = vadd.f32 %v2962, 1.0
        %v2965 = vmul.f32 %v2963, 0.5
        %v2966 = vmul.f32 %v2964, 0.5
        %v2967 = vmul.f32 %v2929, %v2965
        %v2968 = vmul.f32 %v2949, %v2966
        %v2970 = vperm.slane %v2355, 0
        %2972 = vmatpush.msra.mxu0 %v2337
        %2973 = vmatpush.msra.mxu0 %v2336
        %2974 = vmatpush.msra.mxu0 %v2335
        %2975 = vmatpush.msra.mxu0 %v2334
        %2976 = vmatpush.msra.mxu0 %v2333
        %2977 = vmatpush.msra.mxu0 %v2332
        %2978 = vmatpush.msra.mxu0 %v2331
        %2979 = vmatpush.msra.mxu0 %v2330
        %2980 = vmatpush.msra.mxu0 %v2329
        %2981 = vmatpush.msra.mxu0 %v2328
        %2982 = vmatpush.msra.mxu0 %v2327
        %2983 = vmatpush.msra.mxu0 %v2326
        %2984 = vmatpush.msra.mxu0 %v2325
        %2985 = vmatpush.msra.mxu0 %v2324
        %2986 = vmatpush.msra.mxu0 %v2323
        %2987 = vmatpush.msra.mxu0 %v2322
        %2988 = vmatmul.f32.gmra.mxu0 %v2967
        %v2989 = vpop.f32.mrf.mxu0
        %v2990 = vadd.f32 %v2970, %v2989
        %2991 = vdwg.mxu0
        %2992 = vmatpush.msra.mxu0 %v2353
        %2993 = vmatpush.msra.mxu0 %v2352
        %2994 = vmatpush.msra.mxu0 %v2351
        %2995 = vmatpush.msra.mxu0 %v2350
        %2996 = vmatpush.msra.mxu0 %v2349
        %2997 = vmatpush.msra.mxu0 %v2348
        %2998 = vmatpush.msra.mxu0 %v2347
        %2999 = vmatpush.msra.mxu0 %v2346
        %3000 = vmatpush.msra.mxu0 %v2345
        %3001 = vmatpush.msra.mxu0 %v2344
        %3002 = vmatpush.msra.mxu0 %v2343
        %3003 = vmatpush.msra.mxu0 %v2342
        %3004 = vmatpush.msra.mxu0 %v2341
        %3005 = vmatpush.msra.mxu0 %v2340
        %3006 = vmatpush.msra.mxu0 %v2339
        %3007 = vmatpush.msra.mxu0 %v2338
        %3008 = vmatmul.f32.gmra.mxu0 %v2968
        %v3009 = vpop.f32.mrf.mxu0
        %v3010 = vadd.f32 %v2990, %v3009
        %3011 = vdwg.mxu0
        %v3012 = vadd.f32 %v3010, %v2902
        %v3013 = vsel %vm777, %v3012, 0.0
        %3014 = vadd.xlane.f32.xlu0 %v3013
        %v3015 = vpop.xlane.xlu0 %3014
        %v3016 = vmul.f32 %v3015, %v1311
        %v3017 = vsub.f32 %v3012, %v3016
        %v3018 = vmul.f32 %v3017, %v3017
        %v3019 = vsel %vm777, %v3018, 0.0
        %3020 = vadd.xlane.f32.xlu0 %v3019
        %v3021 = vpop.xlane.xlu0 %3020
        %v3022 = vmul.f32 %v3021, 0.015873017
        %v3023 = vadd.f32 %v3022, 1e-08
        %v3024 = vrsqrt.pop %v3023
        %v3025 = vmul.f32 %v3024, %v3023
        %v3026 = vmul.f32 %v3025, %v3024
        %v3027 = vmul.f32 0.5, %v3026
        %v3028 = vsub.f32 1.5, %v3027
        %v3029 = vmul.f32 %v3024, %v3028
        %vm3030 = vweird.f32 %v3023
        %vm3031 = vweird.f32 %v3024
        %vm3032 = vmor %vm3030, %vm3031
        %v3033 = vsel %vm3032, %v3024, %v3029
        %v3034 = vmul.f32 %v3017, %v3033
        %v3035 = vstv %s2873
        %v3036 = vmul.f32 %v3035, %v3034
        %v3037 = vstv %s2874
        %v3038 = vadd.f32 %v3036, %v3037
        %v3039 = vmul.f32 %v3038, %v686
        %3040 = vst.msk [vmem:[%s664] sm:$0xff] %vm777, %v3039
        %s3041 = sand.u32 %s396, 1
        %s3042 = scalar_lea.sflag [#allocation4], %s3041
        %s3043 = sand.u32 %s396, 1
        %s3044 = smul.addr %s3043, 8
        %s3045 = scalar_lea.vmem [#allocation15], %s3044
        // Predicated region
        $region113: #{tpu_custom_call.1} parent=83 // pred_check
          %p3046 = pneg %p406
        $region114: #{tpu_custom_call.1} parent=83 // pred_check_branch
          %3048 = sbr.rel (%p3046) target = $region116
        $region115: #{tpu_custom_call.1} parent=83 // pred_region
          %3050 = vsyncadd %s3042, 0
          %s3051 = smul.addr %s37, 8
          %s3052 = scalar_lea.hbm %s16, %s3051
          %s3054 = sshll.u32 %s3045, 4
          %s3055 = int_to_ptr.vmem [resolvable:$true] %s3054
          %s3056 = sshll.u32 %s3052, 4
          %s3057 = int_to_ptr.hbm [resolvable:$true] %s3056
          %3059 = dma.vmem_to_hbm [thread:$0]  %s3055, 128, %s3057, %s3042
        $region116: #{tpu_custom_call.1} parent=83 // pred_fallthru
          _
      $region84: #{tpu_custom_call.1} parent=5 // pred_fallthru
        _
      %p3060 = scmp.le.s32.totalorder 2, %s32
      // Predicated region
      $region117: #{tpu_custom_call.1} parent=5 // pred_check
        %p3061 = pneg %p3060
      $region118: #{tpu_custom_call.1} parent=5 // pred_check_branch
        %3063 = sbr.rel (%p3061) target = $region120
      $region119: #{tpu_custom_call.1} parent=5 // pred_region
        %s3064 = ssub.s32 %s32, 2
        // Predicated region
        $region121: #{tpu_custom_call.1} parent=119 // pred_check
          %p3065 = pneg %p412
        $region122: #{tpu_custom_call.1} parent=119 // pred_check_branch
          %3067 = sbr.rel (%p3065) target = $region124
        $region123: #{tpu_custom_call.1} parent=119 // pred_region
          %s3068 = sand.u32 %s397, 1
          %s3069 = scalar_lea.sflag [#allocation4], %s3068
          %s3070 = sand.u32 %s397, 1
          %s3071 = smul.addr %s3070, 8
          %s3072 = scalar_lea.vmem [#allocation15], %s3071
          %3074 = dma.done %s3069, 128
        $region124: #{tpu_custom_call.1} parent=119 // pred_fallthru
          _
      $region120: #{tpu_custom_call.1} parent=5 // pred_fallthru
        _
    $region6: #{tpu_custom_call.1} parent=1 // loop_footer
      %s36 = sadd.s32 1, %s32
    $region7: #{tpu_custom_call.1} parent=1 // loop_footer_branch
      %31 = sbr.rel target = $region3
    $region8: #{tpu_custom_call.1} parent=1 // loop_exit
      _
    %3075 = vsyncpa [#allocation3], 1
    %s3076 = scalar_lea.sflag [#allocation3], 1
    %3077 = vsyncpa %s3076, 1
    %3078 = vsyncpa [#allocation7], 1
    %3079 = vsyncpa [#allocation10], 1
    %3080 = vsyncpa [#allocation13], 1
    %3081 = vsyncpa [#allocation4], 1
    %s3082 = scalar_lea.sflag [#allocation4], 1
    %3083 = vsyncpa %s3082, 1
    %3084 = vsyncpa [#allocation5], 1
    %s3085 = scalar_lea.sflag [#allocation5], 1
    %3086 = vsyncpa %s3085, 1

</llo_original>
